<compile_context>
chip_gen: v7x
topology: tpu7x:2x2x1
jax: 0.10.0
libtpu: 0.0.40
codegen_flags: <defaults>
</compile_context>

<pallas_src>
import jax
import jax.numpy as jnp
from jax import lax
from jax.experimental import pallas as pl
from jax.experimental.pallas import tpu as pltpu

KERNEL_SIZE = 11
STRIDE = 2
PADDING = 1            # Conv1d time padding per side (from the PyTorch spec)
IN_CHANNELS = 129      # fixed by the module spec

LANE = 128             # TPU lane width -> channel padding target
PAD_ROWS = 8           # zero halo rows on each side of intermediate scratch (>= PADDING,
                       # chosen as 8 so every scratch store is sublane-aligned)
CHUNK_T = 128          # output rows computed per in-kernel chunk

N_EVEN_TAPS = (KERNEL_SIZE + 1) // 2   # taps k = 0,2,...,10 hit the even time phase
N_ODD_TAPS = KERNEL_SIZE // 2          # taps k = 1,3,...,9  hit the odd  time phase


def _conv_out_len(t_in):
    return (t_in + 2 * PADDING - KERNEL_SIZE) // STRIDE + 1


def _round_up(x, m):
    return (x + m - 1) // m * m


def _speech_embed_kernel(xe_ref, xo_ref, w1_ref, w2_ref, w3_ref, b_ref,
                         o_ref, h1_ref, h2_ref):
    """Fused 3-layer conv stack for one batch element.

    xe_ref/xo_ref : (Te, 129) f32   even / odd time-phase of the zero-padded input
    w1_ref        : (11, 129, C) bf16, w2_ref/w3_ref: (11, C, C) bf16  (C = lane-padded)
    b_ref         : (3, C) f32      lane-padded biases
    o_ref         : (T3, C) f32     layer-3 output (lane-dense)
    h1_ref/h2_ref : VMEM f32 scratch, shape (T{1,2} + 2*PAD_ROWS, C)
    """
    t1 = h1_ref.shape[0] - 2 * PAD_ROWS
    t2 = h2_ref.shape[0] - 2 * PAD_ROWS
    t3 = o_ref.shape[0]
    c = o_ref.shape[1]

    # Zero scratch so the PAD_ROWS halo rows act as the conv's zero time-padding.
    h1_ref[...] = jnp.zeros_like(h1_ref)
    h2_ref[...] = jnp.zeros_like(h2_ref)

    bias1 = b_ref[0:1, :]
    bias2 = b_ref[1:2, :]
    bias3 = b_ref[2:3, :]

    # ---- layer 1: de-interleaved input -> unit-stride tap reads, bf16 MXU matmuls ----
    for t0 in range(0, t1, CHUNK_T):
        n = min(CHUNK_T, t1 - t0)
        acc = jnp.zeros((n, c), jnp.float32)
        for m in range(N_EVEN_TAPS):       # tap k = 2*m   -> even phase, offset m
            xk = xe_ref[pl.ds(t0 + m, n), :].astype(jnp.bfloat16)
            acc = acc + jnp.dot(xk, w1_ref[2 * m],
                                preferred_element_type=jnp.float32)
        for m in range(N_ODD_TAPS):        # tap k = 2*m+1 -> odd phase, offset m
            xk = xo_ref[pl.ds(t0 + m, n), :].astype(jnp.bfloat16)
            acc = acc + jnp.dot(xk, w1_ref[2 * m + 1],
                                preferred_element_type=jnp.float32)
        h1_ref[pl.ds(PAD_ROWS + t0, n), :] = jnp.maximum(acc + bias1, 0.0)

    # ---- layers 2 / 3: taps read the padded VMEM scratch (stride-2, data is already
    #      on-chip so only one strided pass per tap, no HBM traffic) ----
    def conv_layer(src_ref, w_ref, bias, dst_ref, t_out, dst_off):
        base = PAD_ROWS - PADDING          # conv-padded index p lives at scratch row base+p
        for t0 in range(0, t_out, CHUNK_T):
            n = min(CHUNK_T, t_out - t0)
            acc = jnp.zeros((n, c), jnp.float32)
            for k in range(KERNEL_SIZE):
                xk = src_ref[pl.ds(base + k + STRIDE * t0, n, stride=STRIDE), :]
                acc = acc + jnp.dot(xk.astype(jnp.bfloat16), w_ref[k],
                                    preferred_element_type=jnp.float32)
            dst_ref[pl.ds(dst_off + t0, n), :] = (
                jnp.maximum(acc + bias, 0.0).astype(dst_ref.dtype))

    conv_layer(h1_ref, w2_ref, bias2, h2_ref, t2, PAD_ROWS)
    conv_layer(h2_ref, w3_ref, bias3, o_ref, t3, 0)


def speech_feature_embedding(x_ncw, params):
    """Forward pass.  x_ncw: (B, 129, T)  ->  (B, num_hid, T3)."""
    B, C_in, T = x_ncw.shape
    assert C_in == IN_CHANNELS
    (w1, b1), (w2, b2), (w3, b3) = params
    num_hid = w1.shape[0]
    c_pad = _round_up(num_hid, LANE)

    t1 = _conv_out_len(T)
    t2 = _conv_out_len(t1)
    t3 = _conv_out_len(t2)
    assert t3 > 0, "sequence too short for this conv stack"

    # NCW -> (B, T, C), pad time by 1, split even/odd time phases.
    # XLA fuses transpose + pad + the two strided slices into one pass over the input.
    x_tc = jnp.transpose(x_ncw, (0, 2, 1)).astype(jnp.float32)
    x_p = jnp.pad(x_tc, ((0, 0), (PADDING, PADDING), (0, 0)))
    x_even = x_p[:, 0::2, :]
    x_odd = x_p[:, 1::2, :]
    te = x_even.shape[1]
    to = x_odd.shape[1]

    def pack_w(w, c_in_pad):
        # PyTorch (C_out, C_in, K) -> (K, c_in_pad, c_pad), zero padded, bf16.
        wk = jnp.transpose(w, (2, 1, 0))
        wk = jnp.pad(wk, ((0, 0),
                          (0, c_in_pad - wk.shape[1]),
                          (0, c_pad - wk.shape[2])))
        return wk.astype(jnp.bfloat16)

    w1_k = pack_w(w1, C_in)        # (11, 129, c_pad)
    w2_k = pack_w(w2, c_pad)       # (11, c_pad, c_pad)
    w3_k = pack_w(w3, c_pad)
    bias = jnp.stack([jnp.pad(v, (0, c_pad - num_hid)) for v in (b1, b2, b3)]
                     ).astype(jnp.float32)          # (3, c_pad)

    out = pl.pallas_call(
        _speech_embed_kernel,
        out_shape=jax.ShapeDtypeStruct((B, t3, c_pad), jnp.float32),
        grid_spec=pltpu.PrefetchScalarGridSpec(
            num_scalar_prefetch=0,
            grid=(B,),
            in_specs=[
                pl.BlockSpec((None, te, C_in), lambda bi: (bi, 0, 0)),
                pl.BlockSpec((None, to, C_in), lambda bi: (bi, 0, 0)),
                pl.BlockSpec((KERNEL_SIZE, C_in, c_pad), lambda bi: (0, 0, 0)),
                pl.BlockSpec((KERNEL_SIZE, c_pad, c_pad), lambda bi: (0, 0, 0)),
                pl.BlockSpec((KERNEL_SIZE, c_pad, c_pad), lambda bi: (0, 0, 0)),
                pl.BlockSpec((3, c_pad), lambda bi: (0, 0)),
            ],
            out_specs=pl.BlockSpec((None, t3, c_pad), lambda bi: (bi, 0, 0)),
            scratch_shapes=[
                pltpu.VMEM((t1 + 2 * PAD_ROWS, c_pad), jnp.float32),
                pltpu.VMEM((t2 + 2 * PAD_ROWS, c_pad), jnp.float32),
            ],
        ),
        compiler_params=pltpu.CompilerParams(
            dimension_semantics=("parallel",),
            vmem_limit_bytes=32 * 1024 * 1024,
        ),
    )(x_even, x_odd, w1_k, w2_k, w3_k, bias)

    # Drop channel padding, back to NCW.
    return jnp.transpose(out[:, :, :num_hid], (0, 2, 1))


# ----------------------------- parameter init -----------------------------
def init_params(key, num_hid):
    chans = [(IN_CHANNELS, num_hid), (num_hid, num_hid), (num_hid, num_hid)]
    params = []
    for i, (cin, cout) in enumerate(chans):
        kw, kb = jax.random.split(jax.random.fold_in(key, i))
        bound = 1.0 / (cin * KERNEL_SIZE) ** 0.5      # PyTorch default uniform bound
        w = jax.random.uniform(kw, (cout, cin, KERNEL_SIZE), jnp.float32, -bound, bound)
        b = jax.random.uniform(kb, (cout,), jnp.float32, -bound, bound)
        params.append((w, b))
    return params


# ------------------------------- reference --------------------------------
def reference(x_ncw, params):
    # Mirrors the kernel's numerics: bf16 matmul inputs, f32 accumulation,
    # f32 bias + ReLU between layers.
    x = x_ncw.astype(jnp.float32)
    for (w, b) in params:
        y = lax.conv_general_dilated(
            x.astype(jnp.bfloat16), w.astype(jnp.bfloat16),
            window_strides=(STRIDE,), padding=[(PADDING, PADDING)],
            dimension_numbers=("NCH", "OIH", "NCH"),
            preferred_element_type=jnp.float32)
        x = jnp.maximum(y + b[None, :, None], 0.0)
    return x


if __name__ == "__main__":
    key = jax.random.PRNGKey(0)
    num_hid = 32
    B, C_in, T = 2, IN_CHANNELS, 128          # T=128 -> conv stack yields T'=9

    x = jax.random.normal(jax.random.fold_in(key, 100), (B, C_in, T), jnp.float32)
    params = init_params(key, num_hid)

    out = jax.block_until_ready(speech_feature_embedding(x, params))
    ref = jax.block_until_ready(reference(x, params))

    assert out.shape == ref.shape, (out.shape, ref.shape)
    assert jnp.allclose(out, ref, atol=1e-2, rtol=1e-2), float(jnp.abs(out - ref).max())
    print("KERNEL_OK")
</pallas_src>

<mosaic_0001>
module attributes {stable_mosaic.version = 11 : i64} {
  func.func @_speech_embed_kernel(%arg0: i32, %arg1: memref<1x65x129xf32, #tpu.memory_space<vmem>>, %arg2: memref<1x65x129xf32, #tpu.memory_space<vmem>>, %arg3: memref<11x129x128xbf16, #tpu.memory_space<vmem>>, %arg4: memref<11x128x128xbf16, #tpu.memory_space<vmem>>, %arg5: memref<11x128x128xbf16, #tpu.memory_space<vmem>>, %arg6: memref<3x128xf32, #tpu.memory_space<vmem>>, %arg7: memref<1x9x128xf32, #tpu.memory_space<vmem>>, %arg8: memref<76x128xf32, #tpu.memory_space<vmem>>, %arg9: memref<42x128xf32, #tpu.memory_space<vmem>>) attributes {dimension_semantics = [#tpu.dimension_semantics<parallel>], iteration_bounds = array<i64: 2>, scalar_prefetch = 0 : i64, scratch_operands = 2 : i64, tpu.core_type = #tpu.core_type<tc>, window_params = [{transform_indices = @transform_0, window_bounds = array<i64: 1, 65, 129>}, {transform_indices = @transform_1, window_bounds = array<i64: 1, 65, 129>}, {pipeline_mode = #tpu.pipeline_mode<synchronous>, transform_indices = @transform_2, window_bounds = array<i64: 11, 129, 128>}, {pipeline_mode = #tpu.pipeline_mode<synchronous>, transform_indices = @transform_3, window_bounds = array<i64: 11, 128, 128>}, {pipeline_mode = #tpu.pipeline_mode<synchronous>, transform_indices = @transform_4, window_bounds = array<i64: 11, 128, 128>}, {pipeline_mode = #tpu.pipeline_mode<synchronous>, transform_indices = @transform_5, window_bounds = array<i64: 3, 128>}, {transform_indices = @transform_6, window_bounds = array<i64: 1, 9, 128>}]} {
    %cst = arith.constant 0.000000e+00 : f32
    %0 = vector.broadcast %cst : f32 to vector<76x128xf32>
    %c0 = arith.constant 0 : index
    %c0_0 = arith.constant 0 : index
    %1 = vector.load %arg8[%c0, %c0_0] : memref<76x128xf32, #tpu.memory_space<vmem>>, vector<76x128xf32>
    tpu.vector_store %arg8[%c0, %c0_0], %0 {strides = array<i32>} : memref<76x128xf32, #tpu.memory_space<vmem>>, vector<76x128xf32>,
    %cst_1 = arith.constant 0.000000e+00 : f32
    %2 = vector.broadcast %cst_1 : f32 to vector<42x128xf32>
    %c0_2 = arith.constant 0 : index
    %c0_3 = arith.constant 0 : index
    %3 = vector.load %arg9[%c0_2, %c0_3] : memref<42x128xf32, #tpu.memory_space<vmem>>, vector<42x128xf32>
    tpu.vector_store %arg9[%c0_2, %c0_3], %2 {strides = array<i32>} : memref<42x128xf32, #tpu.memory_space<vmem>>, vector<42x128xf32>,
    %c0_4 = arith.constant 0 : index
    %c0_5 = arith.constant 0 : index
    %4 = vector.load %arg6[%c0_4, %c0_5] : memref<3x128xf32, #tpu.memory_space<vmem>>, vector<1x128xf32>
    %c1 = arith.constant 1 : index
    %c0_6 = arith.constant 0 : index
    %5 = vector.load %arg6[%c1, %c0_6] : memref<3x128xf32, #tpu.memory_space<vmem>>, vector<1x128xf32>
    %c2 = arith.constant 2 : index
    %c0_7 = arith.constant 0 : index
    %6 = vector.load %arg6[%c2, %c0_7] : memref<3x128xf32, #tpu.memory_space<vmem>>, vector<1x128xf32>
    %cst_8 = arith.constant 0.000000e+00 : f32
    %7 = vector.broadcast %cst_8 : f32 to vector<60x128xf32>
    %c0_9 = arith.constant 0 : index
    %c0_10 = arith.constant 0 : index
    %c0_11 = arith.constant 0 : index
    %8 = vector.load %arg1[%c0_9, %c0_10, %c0_11] : memref<1x65x129xf32, #tpu.memory_space<vmem>>, vector<1x60x129xf32>
    %9 = vector.shape_cast %8 : vector<1x60x129xf32> to vector<60x129xf32>
    %10 = arith.truncf %9 : vector<60x129xf32> to vector<60x129xbf16>
    %c0_12 = arith.constant 0 : index
    %c0_13 = arith.constant 0 : index
    %c0_14 = arith.constant 0 : index
    %11 = vector.load %arg3[%c0_12, %c0_13, %c0_14] : memref<11x129x128xbf16, #tpu.memory_space<vmem>>, vector<1x129x128xbf16>
    %12 = vector.shape_cast %11 : vector<1x129x128xbf16> to vector<129x128xbf16>
    %cst_15 = arith.constant dense<0.000000e+00> : vector<60x128xf32>
    %13 = tpu.matmul %10, %12, %cst_15 {dimension_numbers = #tpu.dot_dimension_numbers<[1], [0], [0], [1], [0, 0, 1, 1], [], []>} : vector<60x129xbf16>, vector<129x128xbf16>, vector<60x128xf32> -> vector<60x128xf32>
    %14 = arith.addf %7, %13 : vector<60x128xf32>
    %c0_16 = arith.constant 0 : index
    %c1_17 = arith.constant 1 : index
    %c0_18 = arith.constant 0 : index
    %15 = vector.load %arg1[%c0_16, %c1_17, %c0_18] : memref<1x65x129xf32, #tpu.memory_space<vmem>>, vector<1x60x129xf32>
    %16 = vector.shape_cast %15 : vector<1x60x129xf32> to vector<60x129xf32>
    %17 = arith.truncf %16 : vector<60x129xf32> to vector<60x129xbf16>
    %c2_19 = arith.constant 2 : index
    %c0_20 = arith.constant 0 : index
    %c0_21 = arith.constant 0 : index
    %18 = vector.load %arg3[%c2_19, %c0_20, %c0_21] : memref<11x129x128xbf16, #tpu.memory_space<vmem>>, vector<1x129x128xbf16>
    %19 = vector.shape_cast %18 : vector<1x129x128xbf16> to vector<129x128xbf16>
    %cst_22 = arith.constant dense<0.000000e+00> : vector<60x128xf32>
    %20 = tpu.matmul %17, %19, %cst_22 {dimension_numbers = #tpu.dot_dimension_numbers<[1], [0], [0], [1], [0, 0, 1, 1], [], []>} : vector<60x129xbf16>, vector<129x128xbf16>, vector<60x128xf32> -> vector<60x128xf32>
    %21 = arith.addf %14, %20 : vector<60x128xf32>
    %c0_23 = arith.constant 0 : index
    %c2_24 = arith.constant 2 : index
    %c0_25 = arith.constant 0 : index
    %22 = vector.load %arg1[%c0_23, %c2_24, %c0_25] : memref<1x65x129xf32, #tpu.memory_space<vmem>>, vector<1x60x129xf32>
    %23 = vector.shape_cast %22 : vector<1x60x129xf32> to vector<60x129xf32>
    %24 = arith.truncf %23 : vector<60x129xf32> to vector<60x129xbf16>
    %c4 = arith.constant 4 : index
    %c0_26 = arith.constant 0 : index
    %c0_27 = arith.constant 0 : index
    %25 = vector.load %arg3[%c4, %c0_26, %c0_27] : memref<11x129x128xbf16, #tpu.memory_space<vmem>>, vector<1x129x128xbf16>
    %26 = vector.shape_cast %25 : vector<1x129x128xbf16> to vector<129x128xbf16>
    %cst_28 = arith.constant dense<0.000000e+00> : vector<60x128xf32>
    %27 = tpu.matmul %24, %26, %cst_28 {dimension_numbers = #tpu.dot_dimension_numbers<[1], [0], [0], [1], [0, 0, 1, 1], [], []>} : vector<60x129xbf16>, vector<129x128xbf16>, vector<60x128xf32> -> vector<60x128xf32>
    %28 = arith.addf %21, %27 : vector<60x128xf32>
    %c0_29 = arith.constant 0 : index
    %c3 = arith.constant 3 : index
    %c0_30 = arith.constant 0 : index
    %29 = vector.load %arg1[%c0_29, %c3, %c0_30] : memref<1x65x129xf32, #tpu.memory_space<vmem>>, vector<1x60x129xf32>
    %30 = vector.shape_cast %29 : vector<1x60x129xf32> to vector<60x129xf32>
    %31 = arith.truncf %30 : vector<60x129xf32> to vector<60x129xbf16>
    %c6 = arith.constant 6 : index
    %c0_31 = arith.constant 0 : index
    %c0_32 = arith.constant 0 : index
    %32 = vector.load %arg3[%c6, %c0_31, %c0_32] : memref<11x129x128xbf16, #tpu.memory_space<vmem>>, vector<1x129x128xbf16>
    %33 = vector.shape_cast %32 : vector<1x129x128xbf16> to vector<129x128xbf16>
    %cst_33 = arith.constant dense<0.000000e+00> : vector<60x128xf32>
    %34 = tpu.matmul %31, %33, %cst_33 {dimension_numbers = #tpu.dot_dimension_numbers<[1], [0], [0], [1], [0, 0, 1, 1], [], []>} : vector<60x129xbf16>, vector<129x128xbf16>, vector<60x128xf32> -> vector<60x128xf32>
    %35 = arith.addf %28, %34 : vector<60x128xf32>
    %c0_34 = arith.constant 0 : index
    %c4_35 = arith.constant 4 : index
    %c0_36 = arith.constant 0 : index
    %36 = vector.load %arg1[%c0_34, %c4_35, %c0_36] : memref<1x65x129xf32, #tpu.memory_space<vmem>>, vector<1x60x129xf32>
    %37 = vector.shape_cast %36 : vector<1x60x129xf32> to vector<60x129xf32>
    %38 = arith.truncf %37 : vector<60x129xf32> to vector<60x129xbf16>
    %c8 = arith.constant 8 : index
    %c0_37 = arith.constant 0 : index
    %c0_38 = arith.constant 0 : index
    %39 = vector.load %arg3[%c8, %c0_37, %c0_38] : memref<11x129x128xbf16, #tpu.memory_space<vmem>>, vector<1x129x128xbf16>
    %40 = vector.shape_cast %39 : vector<1x129x128xbf16> to vector<129x128xbf16>
    %cst_39 = arith.constant dense<0.000000e+00> : vector<60x128xf32>
    %41 = tpu.matmul %38, %40, %cst_39 {dimension_numbers = #tpu.dot_dimension_numbers<[1], [0], [0], [1], [0, 0, 1, 1], [], []>} : vector<60x129xbf16>, vector<129x128xbf16>, vector<60x128xf32> -> vector<60x128xf32>
    %42 = arith.addf %35, %41 : vector<60x128xf32>
    %c0_40 = arith.constant 0 : index
    %c5 = arith.constant 5 : index
    %c0_41 = arith.constant 0 : index
    %43 = vector.load %arg1[%c0_40, %c5, %c0_41] : memref<1x65x129xf32, #tpu.memory_space<vmem>>, vector<1x60x129xf32>
    %44 = vector.shape_cast %43 : vector<1x60x129xf32> to vector<60x129xf32>
    %45 = arith.truncf %44 : vector<60x129xf32> to vector<60x129xbf16>
    %c10 = arith.constant 10 : index
    %c0_42 = arith.constant 0 : index
    %c0_43 = arith.constant 0 : index
    %46 = vector.load %arg3[%c10, %c0_42, %c0_43] : memref<11x129x128xbf16, #tpu.memory_space<vmem>>, vector<1x129x128xbf16>
    %47 = vector.shape_cast %46 : vector<1x129x128xbf16> to vector<129x128xbf16>
    %cst_44 = arith.constant dense<0.000000e+00> : vector<60x128xf32>
    %48 = tpu.matmul %45, %47, %cst_44 {dimension_numbers = #tpu.dot_dimension_numbers<[1], [0], [0], [1], [0, 0, 1, 1], [], []>} : vector<60x129xbf16>, vector<129x128xbf16>, vector<60x128xf32> -> vector<60x128xf32>
    %49 = arith.addf %42, %48 : vector<60x128xf32>
    %c0_45 = arith.constant 0 : index
    %c0_46 = arith.constant 0 : index
    %c0_47 = arith.constant 0 : index
    %50 = vector.load %arg2[%c0_45, %c0_46, %c0_47] : memref<1x65x129xf32, #tpu.memory_space<vmem>>, vector<1x60x129xf32>
    %51 = vector.shape_cast %50 : vector<1x60x129xf32> to vector<60x129xf32>
    %52 = arith.truncf %51 : vector<60x129xf32> to vector<60x129xbf16>
    %c1_48 = arith.constant 1 : index
    %c0_49 = arith.constant 0 : index
    %c0_50 = arith.constant 0 : index
    %53 = vector.load %arg3[%c1_48, %c0_49, %c0_50] : memref<11x129x128xbf16, #tpu.memory_space<vmem>>, vector<1x129x128xbf16>
    %54 = vector.shape_cast %53 : vector<1x129x128xbf16> to vector<129x128xbf16>
    %cst_51 = arith.constant dense<0.000000e+00> : vector<60x128xf32>
    %55 = tpu.matmul %52, %54, %cst_51 {dimension_numbers = #tpu.dot_dimension_numbers<[1], [0], [0], [1], [0, 0, 1, 1], [], []>} : vector<60x129xbf16>, vector<129x128xbf16>, vector<60x128xf32> -> vector<60x128xf32>
    %56 = arith.addf %49, %55 : vector<60x128xf32>
    %c0_52 = arith.constant 0 : index
    %c1_53 = arith.constant 1 : index
    %c0_54 = arith.constant 0 : index
    %57 = vector.load %arg2[%c0_52, %c1_53, %c0_54] : memref<1x65x129xf32, #tpu.memory_space<vmem>>, vector<1x60x129xf32>
    %58 = vector.shape_cast %57 : vector<1x60x129xf32> to vector<60x129xf32>
    %59 = arith.truncf %58 : vector<60x129xf32> to vector<60x129xbf16>
    %c3_55 = arith.constant 3 : index
    %c0_56 = arith.constant 0 : index
    %c0_57 = arith.constant 0 : index
    %60 = vector.load %arg3[%c3_55, %c0_56, %c0_57] : memref<11x129x128xbf16, #tpu.memory_space<vmem>>, vector<1x129x128xbf16>
    %61 = vector.shape_cast %60 : vector<1x129x128xbf16> to vector<129x128xbf16>
    %cst_58 = arith.constant dense<0.000000e+00> : vector<60x128xf32>
    %62 = tpu.matmul %59, %61, %cst_58 {dimension_numbers = #tpu.dot_dimension_numbers<[1], [0], [0], [1], [0, 0, 1, 1], [], []>} : vector<60x129xbf16>, vector<129x128xbf16>, vector<60x128xf32> -> vector<60x128xf32>
    %63 = arith.addf %56, %62 : vector<60x128xf32>
    %c0_59 = arith.constant 0 : index
    %c2_60 = arith.constant 2 : index
    %c0_61 = arith.constant 0 : index
    %64 = vector.load %arg2[%c0_59, %c2_60, %c0_61] : memref<1x65x129xf32, #tpu.memory_space<vmem>>, vector<1x60x129xf32>
    %65 = vector.shape_cast %64 : vector<1x60x129xf32> to vector<60x129xf32>
    %66 = arith.truncf %65 : vector<60x129xf32> to vector<60x129xbf16>
    %c5_62 = arith.constant 5 : index
    %c0_63 = arith.constant 0 : index
    %c0_64 = arith.constant 0 : index
    %67 = vector.load %arg3[%c5_62, %c0_63, %c0_64] : memref<11x129x128xbf16, #tpu.memory_space<vmem>>, vector<1x129x128xbf16>
    %68 = vector.shape_cast %67 : vector<1x129x128xbf16> to vector<129x128xbf16>
    %cst_65 = arith.constant dense<0.000000e+00> : vector<60x128xf32>
    %69 = tpu.matmul %66, %68, %cst_65 {dimension_numbers = #tpu.dot_dimension_numbers<[1], [0], [0], [1], [0, 0, 1, 1], [], []>} : vector<60x129xbf16>, vector<129x128xbf16>, vector<60x128xf32> -> vector<60x128xf32>
    %70 = arith.addf %63, %69 : vector<60x128xf32>
    %c0_66 = arith.constant 0 : index
    %c3_67 = arith.constant 3 : index
    %c0_68 = arith.constant 0 : index
    %71 = vector.load %arg2[%c0_66, %c3_67, %c0_68] : memref<1x65x129xf32, #tpu.memory_space<vmem>>, vector<1x60x129xf32>
    %72 = vector.shape_cast %71 : vector<1x60x129xf32> to vector<60x129xf32>
    %73 = arith.truncf %72 : vector<60x129xf32> to vector<60x129xbf16>
    %c7 = arith.constant 7 : index
    %c0_69 = arith.constant 0 : index
    %c0_70 = arith.constant 0 : index
    %74 = vector.load %arg3[%c7, %c0_69, %c0_70] : memref<11x129x128xbf16, #tpu.memory_space<vmem>>, vector<1x129x128xbf16>
    %75 = vector.shape_cast %74 : vector<1x129x128xbf16> to vector<129x128xbf16>
    %cst_71 = arith.constant dense<0.000000e+00> : vector<60x128xf32>
    %76 = tpu.matmul %73, %75, %cst_71 {dimension_numbers = #tpu.dot_dimension_numbers<[1], [0], [0], [1], [0, 0, 1, 1], [], []>} : vector<60x129xbf16>, vector<129x128xbf16>, vector<60x128xf32> -> vector<60x128xf32>
    %77 = arith.addf %70, %76 : vector<60x128xf32>
    %c0_72 = arith.constant 0 : index
    %c4_73 = arith.constant 4 : index
    %c0_74 = arith.constant 0 : index
    %78 = vector.load %arg2[%c0_72, %c4_73, %c0_74] : memref<1x65x129xf32, #tpu.memory_space<vmem>>, vector<1x60x129xf32>
    %79 = vector.shape_cast %78 : vector<1x60x129xf32> to vector<60x129xf32>
    %80 = arith.truncf %79 : vector<60x129xf32> to vector<60x129xbf16>
    %c9 = arith.constant 9 : index
    %c0_75 = arith.constant 0 : index
    %c0_76 = arith.constant 0 : index
    %81 = vector.load %arg3[%c9, %c0_75, %c0_76] : memref<11x129x128xbf16, #tpu.memory_space<vmem>>, vector<1x129x128xbf16>
    %82 = vector.shape_cast %81 : vector<1x129x128xbf16> to vector<129x128xbf16>
    %cst_77 = arith.constant dense<0.000000e+00> : vector<60x128xf32>
    %83 = tpu.matmul %80, %82, %cst_77 {dimension_numbers = #tpu.dot_dimension_numbers<[1], [0], [0], [1], [0, 0, 1, 1], [], []>} : vector<60x129xbf16>, vector<129x128xbf16>, vector<60x128xf32> -> vector<60x128xf32>
    %84 = arith.addf %77, %83 : vector<60x128xf32>
    %85 = vector.broadcast %4 : vector<1x128xf32> to vector<60x128xf32>
    %86 = arith.addf %84, %85 : vector<60x128xf32>
    %cst_78 = arith.constant 0.000000e+00 : f32
    %87 = vector.broadcast %cst_78 : f32 to vector<60x128xf32>
    %88 = arith.maximumf %86, %87 : vector<60x128xf32>
    %c8_79 = arith.constant 8 : index
    %c0_80 = arith.constant 0 : index
    %89 = vector.load %arg8[%c8_79, %c0_80] : memref<76x128xf32, #tpu.memory_space<vmem>>, vector<60x128xf32>
    tpu.vector_store %arg8[%c8_79, %c0_80], %88 {strides = array<i32>} : memref<76x128xf32, #tpu.memory_space<vmem>>, vector<60x128xf32>,
    %cst_81 = arith.constant 0.000000e+00 : f32
    %90 = vector.broadcast %cst_81 : f32 to vector<26x128xf32>
    %c7_82 = arith.constant 7 : index
    %c0_83 = arith.constant 0 : index
    %91 = tpu.strided_load %arg8[%c7_82, %c0_83] {strides = array<i32: 2, 1>} : memref<76x128xf32, #tpu.memory_space<vmem>>, vector<26x128xf32>
    %92 = arith.truncf %91 : vector<26x128xf32> to vector<26x128xbf16>
    %c0_84 = arith.constant 0 : index
    %c0_85 = arith.constant 0 : index
    %c0_86 = arith.constant 0 : index
    %93 = vector.load %arg4[%c0_84, %c0_85, %c0_86] : memref<11x128x128xbf16, #tpu.memory_space<vmem>>, vector<1x128x128xbf16>
    %94 = vector.shape_cast %93 : vector<1x128x128xbf16> to vector<128x128xbf16>
    %cst_87 = arith.constant dense<0.000000e+00> : vector<26x128xf32>
    %95 = tpu.matmul %92, %94, %cst_87 {dimension_numbers = #tpu.dot_dimension_numbers<[1], [0], [0], [1], [0, 0, 1, 1], [], []>} : vector<26x128xbf16>, vector<128x128xbf16>, vector<26x128xf32> -> vector<26x128xf32>
    %96 = arith.addf %90, %95 : vector<26x128xf32>
    %c8_88 = arith.constant 8 : index
    %c0_89 = arith.constant 0 : index
    %97 = tpu.strided_load %arg8[%c8_88, %c0_89] {strides = array<i32: 2, 1>} : memref<76x128xf32, #tpu.memory_space<vmem>>, vector<26x128xf32>
    %98 = arith.truncf %97 : vector<26x128xf32> to vector<26x128xbf16>
    %c1_90 = arith.constant 1 : index
    %c0_91 = arith.constant 0 : index
    %c0_92 = arith.constant 0 : index
    %99 = vector.load %arg4[%c1_90, %c0_91, %c0_92] : memref<11x128x128xbf16, #tpu.memory_space<vmem>>, vector<1x128x128xbf16>
    %100 = vector.shape_cast %99 : vector<1x128x128xbf16> to vector<128x128xbf16>
    %cst_93 = arith.constant dense<0.000000e+00> : vector<26x128xf32>
    %101 = tpu.matmul %98, %100, %cst_93 {dimension_numbers = #tpu.dot_dimension_numbers<[1], [0], [0], [1], [0, 0, 1, 1], [], []>} : vector<26x128xbf16>, vector<128x128xbf16>, vector<26x128xf32> -> vector<26x128xf32>
    %102 = arith.addf %96, %101 : vector<26x128xf32>
    %c9_94 = arith.constant 9 : index
    %c0_95 = arith.constant 0 : index
    %103 = tpu.strided_load %arg8[%c9_94, %c0_95] {strides = array<i32: 2, 1>} : memref<76x128xf32, #tpu.memory_space<vmem>>, vector<26x128xf32>
    %104 = arith.truncf %103 : vector<26x128xf32> to vector<26x128xbf16>
    %c2_96 = arith.constant 2 : index
    %c0_97 = arith.constant 0 : index
    %c0_98 = arith.constant 0 : index
    %105 = vector.load %arg4[%c2_96, %c0_97, %c0_98] : memref<11x128x128xbf16, #tpu.memory_space<vmem>>, vector<1x128x128xbf16>
    %106 = vector.shape_cast %105 : vector<1x128x128xbf16> to vector<128x128xbf16>
    %cst_99 = arith.constant dense<0.000000e+00> : vector<26x128xf32>
    %107 = tpu.matmul %104, %106, %cst_99 {dimension_numbers = #tpu.dot_dimension_numbers<[1], [0], [0], [1], [0, 0, 1, 1], [], []>} : vector<26x128xbf16>, vector<128x128xbf16>, vector<26x128xf32> -> vector<26x128xf32>
    %108 = arith.addf %102, %107 : vector<26x128xf32>
    %c10_100 = arith.constant 10 : index
    %c0_101 = arith.constant 0 : index
    %109 = tpu.strided_load %arg8[%c10_100, %c0_101] {strides = array<i32: 2, 1>} : memref<76x128xf32, #tpu.memory_space<vmem>>, vector<26x128xf32>
    %110 = arith.truncf %109 : vector<26x128xf32> to vector<26x128xbf16>
    %c3_102 = arith.constant 3 : index
    %c0_103 = arith.constant 0 : index
    %c0_104 = arith.constant 0 : index
    %111 = vector.load %arg4[%c3_102, %c0_103, %c0_104] : memref<11x128x128xbf16, #tpu.memory_space<vmem>>, vector<1x128x128xbf16>
    %112 = vector.shape_cast %111 : vector<1x128x128xbf16> to vector<128x128xbf16>
    %cst_105 = arith.constant dense<0.000000e+00> : vector<26x128xf32>
    %113 = tpu.matmul %110, %112, %cst_105 {dimension_numbers = #tpu.dot_dimension_numbers<[1], [0], [0], [1], [0, 0, 1, 1], [], []>} : vector<26x128xbf16>, vector<128x128xbf16>, vector<26x128xf32> -> vector<26x128xf32>
    %114 = arith.addf %108, %113 : vector<26x128xf32>
    %c11 = arith.constant 11 : index
    %c0_106 = arith.constant 0 : index
    %115 = tpu.strided_load %arg8[%c11, %c0_106] {strides = array<i32: 2, 1>} : memref<76x128xf32, #tpu.memory_space<vmem>>, vector<26x128xf32>
    %116 = arith.truncf %115 : vector<26x128xf32> to vector<26x128xbf16>
    %c4_107 = arith.constant 4 : index
    %c0_108 = arith.constant 0 : index
    %c0_109 = arith.constant 0 : index
    %117 = vector.load %arg4[%c4_107, %c0_108, %c0_109] : memref<11x128x128xbf16, #tpu.memory_space<vmem>>, vector<1x128x128xbf16>
    %118 = vector.shape_cast %117 : vector<1x128x128xbf16> to vector<128x128xbf16>
    %cst_110 = arith.constant dense<0.000000e+00> : vector<26x128xf32>
    %119 = tpu.matmul %116, %118, %cst_110 {dimension_numbers = #tpu.dot_dimension_numbers<[1], [0], [0], [1], [0, 0, 1, 1], [], []>} : vector<26x128xbf16>, vector<128x128xbf16>, vector<26x128xf32> -> vector<26x128xf32>
    %120 = arith.addf %114, %119 : vector<26x128xf32>
    %c12 = arith.constant 12 : index
    %c0_111 = arith.constant 0 : index
    %121 = tpu.strided_load %arg8[%c12, %c0_111] {strides = array<i32: 2, 1>} : memref<76x128xf32, #tpu.memory_space<vmem>>, vector<26x128xf32>
    %122 = arith.truncf %121 : vector<26x128xf32> to vector<26x128xbf16>
    %c5_112 = arith.constant 5 : index
    %c0_113 = arith.constant 0 : index
    %c0_114 = arith.constant 0 : index
    %123 = vector.load %arg4[%c5_112, %c0_113, %c0_114] : memref<11x128x128xbf16, #tpu.memory_space<vmem>>, vector<1x128x128xbf16>
    %124 = vector.shape_cast %123 : vector<1x128x128xbf16> to vector<128x128xbf16>
    %cst_115 = arith.constant dense<0.000000e+00> : vector<26x128xf32>
    %125 = tpu.matmul %122, %124, %cst_115 {dimension_numbers = #tpu.dot_dimension_numbers<[1], [0], [0], [1], [0, 0, 1, 1], [], []>} : vector<26x128xbf16>, vector<128x128xbf16>, vector<26x128xf32> -> vector<26x128xf32>
    %126 = arith.addf %120, %125 : vector<26x128xf32>
    %c13 = arith.constant 13 : index
    %c0_116 = arith.constant 0 : index
    %127 = tpu.strided_load %arg8[%c13, %c0_116] {strides = array<i32: 2, 1>} : memref<76x128xf32, #tpu.memory_space<vmem>>, vector<26x128xf32>
    %128 = arith.truncf %127 : vector<26x128xf32> to vector<26x128xbf16>
    %c6_117 = arith.constant 6 : index
    %c0_118 = arith.constant 0 : index
    %c0_119 = arith.constant 0 : index
    %129 = vector.load %arg4[%c6_117, %c0_118, %c0_119] : memref<11x128x128xbf16, #tpu.memory_space<vmem>>, vector<1x128x128xbf16>
    %130 = vector.shape_cast %129 : vector<1x128x128xbf16> to vector<128x128xbf16>
    %cst_120 = arith.constant dense<0.000000e+00> : vector<26x128xf32>
    %131 = tpu.matmul %128, %130, %cst_120 {dimension_numbers = #tpu.dot_dimension_numbers<[1], [0], [0], [1], [0, 0, 1, 1], [], []>} : vector<26x128xbf16>, vector<128x128xbf16>, vector<26x128xf32> -> vector<26x128xf32>
    %132 = arith.addf %126, %131 : vector<26x128xf32>
    %c14 = arith.constant 14 : index
    %c0_121 = arith.constant 0 : index
    %133 = tpu.strided_load %arg8[%c14, %c0_121] {strides = array<i32: 2, 1>} : memref<76x128xf32, #tpu.memory_space<vmem>>, vector<26x128xf32>
    %134 = arith.truncf %133 : vector<26x128xf32> to vector<26x128xbf16>
    %c7_122 = arith.constant 7 : index
    %c0_123 = arith.constant 0 : index
    %c0_124 = arith.constant 0 : index
    %135 = vector.load %arg4[%c7_122, %c0_123, %c0_124] : memref<11x128x128xbf16, #tpu.memory_space<vmem>>, vector<1x128x128xbf16>
    %136 = vector.shape_cast %135 : vector<1x128x128xbf16> to vector<128x128xbf16>
    %cst_125 = arith.constant dense<0.000000e+00> : vector<26x128xf32>
    %137 = tpu.matmul %134, %136, %cst_125 {dimension_numbers = #tpu.dot_dimension_numbers<[1], [0], [0], [1], [0, 0, 1, 1], [], []>} : vector<26x128xbf16>, vector<128x128xbf16>, vector<26x128xf32> -> vector<26x128xf32>
    %138 = arith.addf %132, %137 : vector<26x128xf32>
    %c15 = arith.constant 15 : index
    %c0_126 = arith.constant 0 : index
    %139 = tpu.strided_load %arg8[%c15, %c0_126] {strides = array<i32: 2, 1>} : memref<76x128xf32, #tpu.memory_space<vmem>>, vector<26x128xf32>
    %140 = arith.truncf %139 : vector<26x128xf32> to vector<26x128xbf16>
    %c8_127 = arith.constant 8 : index
    %c0_128 = arith.constant 0 : index
    %c0_129 = arith.constant 0 : index
    %141 = vector.load %arg4[%c8_127, %c0_128, %c0_129] : memref<11x128x128xbf16, #tpu.memory_space<vmem>>, vector<1x128x128xbf16>
    %142 = vector.shape_cast %141 : vector<1x128x128xbf16> to vector<128x128xbf16>
    %cst_130 = arith.constant dense<0.000000e+00> : vector<26x128xf32>
    %143 = tpu.matmul %140, %142, %cst_130 {dimension_numbers = #tpu.dot_dimension_numbers<[1], [0], [0], [1], [0, 0, 1, 1], [], []>} : vector<26x128xbf16>, vector<128x128xbf16>, vector<26x128xf32> -> vector<26x128xf32>
    %144 = arith.addf %138, %143 : vector<26x128xf32>
    %c16 = arith.constant 16 : index
    %c0_131 = arith.constant 0 : index
    %145 = tpu.strided_load %arg8[%c16, %c0_131] {strides = array<i32: 2, 1>} : memref<76x128xf32, #tpu.memory_space<vmem>>, vector<26x128xf32>
    %146 = arith.truncf %145 : vector<26x128xf32> to vector<26x128xbf16>
    %c9_132 = arith.constant 9 : index
    %c0_133 = arith.constant 0 : index
    %c0_134 = arith.constant 0 : index
    %147 = vector.load %arg4[%c9_132, %c0_133, %c0_134] : memref<11x128x128xbf16, #tpu.memory_space<vmem>>, vector<1x128x128xbf16>
    %148 = vector.shape_cast %147 : vector<1x128x128xbf16> to vector<128x128xbf16>
    %cst_135 = arith.constant dense<0.000000e+00> : vector<26x128xf32>
    %149 = tpu.matmul %146, %148, %cst_135 {dimension_numbers = #tpu.dot_dimension_numbers<[1], [0], [0], [1], [0, 0, 1, 1], [], []>} : vector<26x128xbf16>, vector<128x128xbf16>, vector<26x128xf32> -> vector<26x128xf32>
    %150 = arith.addf %144, %149 : vector<26x128xf32>
    %c17 = arith.constant 17 : index
    %c0_136 = arith.constant 0 : index
    %151 = tpu.strided_load %arg8[%c17, %c0_136] {strides = array<i32: 2, 1>} : memref<76x128xf32, #tpu.memory_space<vmem>>, vector<26x128xf32>
    %152 = arith.truncf %151 : vector<26x128xf32> to vector<26x128xbf16>
    %c10_137 = arith.constant 10 : index
    %c0_138 = arith.constant 0 : index
    %c0_139 = arith.constant 0 : index
    %153 = vector.load %arg4[%c10_137, %c0_138, %c0_139] : memref<11x128x128xbf16, #tpu.memory_space<vmem>>, vector<1x128x128xbf16>
    %154 = vector.shape_cast %153 : vector<1x128x128xbf16> to vector<128x128xbf16>
    %cst_140 = arith.constant dense<0.000000e+00> : vector<26x128xf32>
    %155 = tpu.matmul %152, %154, %cst_140 {dimension_numbers = #tpu.dot_dimension_numbers<[1], [0], [0], [1], [0, 0, 1, 1], [], []>} : vector<26x128xbf16>, vector<128x128xbf16>, vector<26x128xf32> -> vector<26x128xf32>
    %156 = arith.addf %150, %155 : vector<26x128xf32>
    %157 = vector.broadcast %5 : vector<1x128xf32> to vector<26x128xf32>
    %158 = arith.addf %156, %157 : vector<26x128xf32>
    %cst_141 = arith.constant 0.000000e+00 : f32
    %159 = vector.broadcast %cst_141 : f32 to vector<26x128xf32>
    %160 = arith.maximumf %158, %159 : vector<26x128xf32>
    %c8_142 = arith.constant 8 : index
    %c0_143 = arith.constant 0 : index
    %161 = vector.load %arg9[%c8_142, %c0_143] : memref<42x128xf32, #tpu.memory_space<vmem>>, vector<26x128xf32>
    tpu.vector_store %arg9[%c8_142, %c0_143], %160 {strides = array<i32>} : memref<42x128xf32, #tpu.memory_space<vmem>>, vector<26x128xf32>,
    %cst_144 = arith.constant 0.000000e+00 : f32
    %162 = vector.broadcast %cst_144 : f32 to vector<9x128xf32>
    %c7_145 = arith.constant 7 : index
    %c0_146 = arith.constant 0 : index
    %163 = tpu.strided_load %arg9[%c7_145, %c0_146] {strides = array<i32: 2, 1>} : memref<42x128xf32, #tpu.memory_space<vmem>>, vector<9x128xf32>
    %164 = arith.truncf %163 : vector<9x128xf32> to vector<9x128xbf16>
    %c0_147 = arith.constant 0 : index
    %c0_148 = arith.constant 0 : index
    %c0_149 = arith.constant 0 : index
    %165 = vector.load %arg5[%c0_147, %c0_148, %c0_149] : memref<11x128x128xbf16, #tpu.memory_space<vmem>>, vector<1x128x128xbf16>
    %166 = vector.shape_cast %165 : vector<1x128x128xbf16> to vector<128x128xbf16>
    %cst_150 = arith.constant dense<0.000000e+00> : vector<9x128xf32>
    %167 = tpu.matmul %164, %166, %cst_150 {dimension_numbers = #tpu.dot_dimension_numbers<[1], [0], [0], [1], [0, 0, 1, 1], [], []>} : vector<9x128xbf16>, vector<128x128xbf16>, vector<9x128xf32> -> vector<9x128xf32>
    %168 = arith.addf %162, %167 : vector<9x128xf32>
    %c8_151 = arith.constant 8 : index
    %c0_152 = arith.constant 0 : index
    %169 = tpu.strided_load %arg9[%c8_151, %c0_152] {strides = array<i32: 2, 1>} : memref<42x128xf32, #tpu.memory_space<vmem>>, vector<9x128xf32>
    %170 = arith.truncf %169 : vector<9x128xf32> to vector<9x128xbf16>
    %c1_153 = arith.constant 1 : index
    %c0_154 = arith.constant 0 : index
    %c0_155 = arith.constant 0 : index
    %171 = vector.load %arg5[%c1_153, %c0_154, %c0_155] : memref<11x128x128xbf16, #tpu.memory_space<vmem>>, vector<1x128x128xbf16>
    %172 = vector.shape_cast %171 : vector<1x128x128xbf16> to vector<128x128xbf16>
    %cst_156 = arith.constant dense<0.000000e+00> : vector<9x128xf32>
    %173 = tpu.matmul %170, %172, %cst_156 {dimension_numbers = #tpu.dot_dimension_numbers<[1], [0], [0], [1], [0, 0, 1, 1], [], []>} : vector<9x128xbf16>, vector<128x128xbf16>, vector<9x128xf32> -> vector<9x128xf32>
    %174 = arith.addf %168, %173 : vector<9x128xf32>
    %c9_157 = arith.constant 9 : index
    %c0_158 = arith.constant 0 : index
    %175 = tpu.strided_load %arg9[%c9_157, %c0_158] {strides = array<i32: 2, 1>} : memref<42x128xf32, #tpu.memory_space<vmem>>, vector<9x128xf32>
    %176 = arith.truncf %175 : vector<9x128xf32> to vector<9x128xbf16>
    %c2_159 = arith.constant 2 : index
    %c0_160 = arith.constant 0 : index
    %c0_161 = arith.constant 0 : index
    %177 = vector.load %arg5[%c2_159, %c0_160, %c0_161] : memref<11x128x128xbf16, #tpu.memory_space<vmem>>, vector<1x128x128xbf16>
    %178 = vector.shape_cast %177 : vector<1x128x128xbf16> to vector<128x128xbf16>
    %cst_162 = arith.constant dense<0.000000e+00> : vector<9x128xf32>
    %179 = tpu.matmul %176, %178, %cst_162 {dimension_numbers = #tpu.dot_dimension_numbers<[1], [0], [0], [1], [0, 0, 1, 1], [], []>} : vector<9x128xbf16>, vector<128x128xbf16>, vector<9x128xf32> -> vector<9x128xf32>
    %180 = arith.addf %174, %179 : vector<9x128xf32>
    %c10_163 = arith.constant 10 : index
    %c0_164 = arith.constant 0 : index
    %181 = tpu.strided_load %arg9[%c10_163, %c0_164] {strides = array<i32: 2, 1>} : memref<42x128xf32, #tpu.memory_space<vmem>>, vector<9x128xf32>
    %182 = arith.truncf %181 : vector<9x128xf32> to vector<9x128xbf16>
    %c3_165 = arith.constant 3 : index
    %c0_166 = arith.constant 0 : index
    %c0_167 = arith.constant 0 : index
    %183 = vector.load %arg5[%c3_165, %c0_166, %c0_167] : memref<11x128x128xbf16, #tpu.memory_space<vmem>>, vector<1x128x128xbf16>
    %184 = vector.shape_cast %183 : vector<1x128x128xbf16> to vector<128x128xbf16>
    %cst_168 = arith.constant dense<0.000000e+00> : vector<9x128xf32>
    %185 = tpu.matmul %182, %184, %cst_168 {dimension_numbers = #tpu.dot_dimension_numbers<[1], [0], [0], [1], [0, 0, 1, 1], [], []>} : vector<9x128xbf16>, vector<128x128xbf16>, vector<9x128xf32> -> vector<9x128xf32>
    %186 = arith.addf %180, %185 : vector<9x128xf32>
    %c11_169 = arith.constant 11 : index
    %c0_170 = arith.constant 0 : index
    %187 = tpu.strided_load %arg9[%c11_169, %c0_170] {strides = array<i32: 2, 1>} : memref<42x128xf32, #tpu.memory_space<vmem>>, vector<9x128xf32>
    %188 = arith.truncf %187 : vector<9x128xf32> to vector<9x128xbf16>
    %c4_171 = arith.constant 4 : index
    %c0_172 = arith.constant 0 : index
    %c0_173 = arith.constant 0 : index
    %189 = vector.load %arg5[%c4_171, %c0_172, %c0_173] : memref<11x128x128xbf16, #tpu.memory_space<vmem>>, vector<1x128x128xbf16>
    %190 = vector.shape_cast %189 : vector<1x128x128xbf16> to vector<128x128xbf16>
    %cst_174 = arith.constant dense<0.000000e+00> : vector<9x128xf32>
    %191 = tpu.matmul %188, %190, %cst_174 {dimension_numbers = #tpu.dot_dimension_numbers<[1], [0], [0], [1], [0, 0, 1, 1], [], []>} : vector<9x128xbf16>, vector<128x128xbf16>, vector<9x128xf32> -> vector<9x128xf32>
    %192 = arith.addf %186, %191 : vector<9x128xf32>
    %c12_175 = arith.constant 12 : index
    %c0_176 = arith.constant 0 : index
    %193 = tpu.strided_load %arg9[%c12_175, %c0_176] {strides = array<i32: 2, 1>} : memref<42x128xf32, #tpu.memory_space<vmem>>, vector<9x128xf32>
    %194 = arith.truncf %193 : vector<9x128xf32> to vector<9x128xbf16>
    %c5_177 = arith.constant 5 : index
    %c0_178 = arith.constant 0 : index
    %c0_179 = arith.constant 0 : index
    %195 = vector.load %arg5[%c5_177, %c0_178, %c0_179] : memref<11x128x128xbf16, #tpu.memory_space<vmem>>, vector<1x128x128xbf16>
    %196 = vector.shape_cast %195 : vector<1x128x128xbf16> to vector<128x128xbf16>
    %cst_180 = arith.constant dense<0.000000e+00> : vector<9x128xf32>
    %197 = tpu.matmul %194, %196, %cst_180 {dimension_numbers = #tpu.dot_dimension_numbers<[1], [0], [0], [1], [0, 0, 1, 1], [], []>} : vector<9x128xbf16>, vector<128x128xbf16>, vector<9x128xf32> -> vector<9x128xf32>
    %198 = arith.addf %192, %197 : vector<9x128xf32>
    %c13_181 = arith.constant 13 : index
    %c0_182 = arith.constant 0 : index
    %199 = tpu.strided_load %arg9[%c13_181, %c0_182] {strides = array<i32: 2, 1>} : memref<42x128xf32, #tpu.memory_space<vmem>>, vector<9x128xf32>
    %200 = arith.truncf %199 : vector<9x128xf32> to vector<9x128xbf16>
    %c6_183 = arith.constant 6 : index
    %c0_184 = arith.constant 0 : index
    %c0_185 = arith.constant 0 : index
    %201 = vector.load %arg5[%c6_183, %c0_184, %c0_185] : memref<11x128x128xbf16, #tpu.memory_space<vmem>>, vector<1x128x128xbf16>
    %202 = vector.shape_cast %201 : vector<1x128x128xbf16> to vector<128x128xbf16>
    %cst_186 = arith.constant dense<0.000000e+00> : vector<9x128xf32>
    %203 = tpu.matmul %200, %202, %cst_186 {dimension_numbers = #tpu.dot_dimension_numbers<[1], [0], [0], [1], [0, 0, 1, 1], [], []>} : vector<9x128xbf16>, vector<128x128xbf16>, vector<9x128xf32> -> vector<9x128xf32>
    %204 = arith.addf %198, %203 : vector<9x128xf32>
    %c14_187 = arith.constant 14 : index
    %c0_188 = arith.constant 0 : index
    %205 = tpu.strided_load %arg9[%c14_187, %c0_188] {strides = array<i32: 2, 1>} : memref<42x128xf32, #tpu.memory_space<vmem>>, vector<9x128xf32>
    %206 = arith.truncf %205 : vector<9x128xf32> to vector<9x128xbf16>
    %c7_189 = arith.constant 7 : index
    %c0_190 = arith.constant 0 : index
    %c0_191 = arith.constant 0 : index
    %207 = vector.load %arg5[%c7_189, %c0_190, %c0_191] : memref<11x128x128xbf16, #tpu.memory_space<vmem>>, vector<1x128x128xbf16>
    %208 = vector.shape_cast %207 : vector<1x128x128xbf16> to vector<128x128xbf16>
    %cst_192 = arith.constant dense<0.000000e+00> : vector<9x128xf32>
    %209 = tpu.matmul %206, %208, %cst_192 {dimension_numbers = #tpu.dot_dimension_numbers<[1], [0], [0], [1], [0, 0, 1, 1], [], []>} : vector<9x128xbf16>, vector<128x128xbf16>, vector<9x128xf32> -> vector<9x128xf32>
    %210 = arith.addf %204, %209 : vector<9x128xf32>
    %c15_193 = arith.constant 15 : index
    %c0_194 = arith.constant 0 : index
    %211 = tpu.strided_load %arg9[%c15_193, %c0_194] {strides = array<i32: 2, 1>} : memref<42x128xf32, #tpu.memory_space<vmem>>, vector<9x128xf32>
    %212 = arith.truncf %211 : vector<9x128xf32> to vector<9x128xbf16>
    %c8_195 = arith.constant 8 : index
    %c0_196 = arith.constant 0 : index
    %c0_197 = arith.constant 0 : index
    %213 = vector.load %arg5[%c8_195, %c0_196, %c0_197] : memref<11x128x128xbf16, #tpu.memory_space<vmem>>, vector<1x128x128xbf16>
    %214 = vector.shape_cast %213 : vector<1x128x128xbf16> to vector<128x128xbf16>
    %cst_198 = arith.constant dense<0.000000e+00> : vector<9x128xf32>
    %215 = tpu.matmul %212, %214, %cst_198 {dimension_numbers = #tpu.dot_dimension_numbers<[1], [0], [0], [1], [0, 0, 1, 1], [], []>} : vector<9x128xbf16>, vector<128x128xbf16>, vector<9x128xf32> -> vector<9x128xf32>
    %216 = arith.addf %210, %215 : vector<9x128xf32>
    %c16_199 = arith.constant 16 : index
    %c0_200 = arith.constant 0 : index
    %217 = tpu.strided_load %arg9[%c16_199, %c0_200] {strides = array<i32: 2, 1>} : memref<42x128xf32, #tpu.memory_space<vmem>>, vector<9x128xf32>
    %218 = arith.truncf %217 : vector<9x128xf32> to vector<9x128xbf16>
    %c9_201 = arith.constant 9 : index
    %c0_202 = arith.constant 0 : index
    %c0_203 = arith.constant 0 : index
    %219 = vector.load %arg5[%c9_201, %c0_202, %c0_203] : memref<11x128x128xbf16, #tpu.memory_space<vmem>>, vector<1x128x128xbf16>
    %220 = vector.shape_cast %219 : vector<1x128x128xbf16> to vector<128x128xbf16>
    %cst_204 = arith.constant dense<0.000000e+00> : vector<9x128xf32>
    %221 = tpu.matmul %218, %220, %cst_204 {dimension_numbers = #tpu.dot_dimension_numbers<[1], [0], [0], [1], [0, 0, 1, 1], [], []>} : vector<9x128xbf16>, vector<128x128xbf16>, vector<9x128xf32> -> vector<9x128xf32>
    %222 = arith.addf %216, %221 : vector<9x128xf32>
    %c17_205 = arith.constant 17 : index
    %c0_206 = arith.constant 0 : index
    %223 = tpu.strided_load %arg9[%c17_205, %c0_206] {strides = array<i32: 2, 1>} : memref<42x128xf32, #tpu.memory_space<vmem>>, vector<9x128xf32>
    %224 = arith.truncf %223 : vector<9x128xf32> to vector<9x128xbf16>
    %c10_207 = arith.constant 10 : index
    %c0_208 = arith.constant 0 : index
    %c0_209 = arith.constant 0 : index
    %225 = vector.load %arg5[%c10_207, %c0_208, %c0_209] : memref<11x128x128xbf16, #tpu.memory_space<vmem>>, vector<1x128x128xbf16>
    %226 = vector.shape_cast %225 : vector<1x128x128xbf16> to vector<128x128xbf16>
    %cst_210 = arith.constant dense<0.000000e+00> : vector<9x128xf32>
    %227 = tpu.matmul %224, %226, %cst_210 {dimension_numbers = #tpu.dot_dimension_numbers<[1], [0], [0], [1], [0, 0, 1, 1], [], []>} : vector<9x128xbf16>, vector<128x128xbf16>, vector<9x128xf32> -> vector<9x128xf32>
    %228 = arith.addf %222, %227 : vector<9x128xf32>
    %229 = vector.broadcast %6 : vector<1x128xf32> to vector<9x128xf32>
    %230 = arith.addf %228, %229 : vector<9x128xf32>
    %cst_211 = arith.constant 0.000000e+00 : f32
    %231 = vector.broadcast %cst_211 : f32 to vector<9x128xf32>
    %232 = arith.maximumf %230, %231 : vector<9x128xf32>
    %c0_212 = arith.constant 0 : index
    %c0_213 = arith.constant 0 : index
    %c0_214 = arith.constant 0 : index
    %233 = vector.load %arg7[%c0_212, %c0_213, %c0_214] : memref<1x9x128xf32, #tpu.memory_space<vmem>>, vector<1x9x128xf32>
    %234 = vector.shape_cast %233 : vector<1x9x128xf32> to vector<9x128xf32>
    %235 = vector.shape_cast %232 : vector<9x128xf32> to vector<1x9x128xf32>
    tpu.vector_store %arg7[%c0_212, %c0_213, %c0_214], %235 {strides = array<i32>} : memref<1x9x128xf32, #tpu.memory_space<vmem>>, vector<1x9x128xf32>,
    return
  }
  func.func @transform_0(%arg0: i32) -> (i32, i32, i32) {
    %c0_i32 = arith.constant 0 : i32
    %c0_i32_0 = arith.constant 0 : i32
    %c0_i32_1 = arith.constant 0 : i32
    return %arg0, %c0_i32, %c0_i32_0 : i32, i32, i32
  }
  func.func @transform_1(%arg0: i32) -> (i32, i32, i32) {
    %c0_i32 = arith.constant 0 : i32
    %c0_i32_0 = arith.constant 0 : i32
    %c0_i32_1 = arith.constant 0 : i32
    return %arg0, %c0_i32, %c0_i32_0 : i32, i32, i32
  }
  func.func @transform_2(%arg0: i32) -> (i32, i32, i32) {
    %c0_i32 = arith.constant 0 : i32
    %c0_i32_0 = arith.constant 0 : i32
    %c0_i32_1 = arith.constant 0 : i32
    %c0_i32_2 = arith.constant 0 : i32
    return %c0_i32, %c0_i32_0, %c0_i32_1 : i32, i32, i32
  }
  func.func @transform_3(%arg0: i32) -> (i32, i32, i32) {
    %c0_i32 = arith.constant 0 : i32
    %c0_i32_0 = arith.constant 0 : i32
    %c0_i32_1 = arith.constant 0 : i32
    %c0_i32_2 = arith.constant 0 : i32
    return %c0_i32, %c0_i32_0, %c0_i32_1 : i32, i32, i32
  }
  func.func @transform_4(%arg0: i32) -> (i32, i32, i32) {
    %c0_i32 = arith.constant 0 : i32
    %c0_i32_0 = arith.constant 0 : i32
    %c0_i32_1 = arith.constant 0 : i32
    %c0_i32_2 = arith.constant 0 : i32
    return %c0_i32, %c0_i32_0, %c0_i32_1 : i32, i32, i32
  }
  func.func @transform_5(%arg0: i32) -> (i32, i32) {
    %c0_i32 = arith.constant 0 : i32
    %c0_i32_0 = arith.constant 0 : i32
    %c0_i32_1 = arith.constant 0 : i32
    return %c0_i32, %c0_i32_0 : i32, i32
  }
  func.func @transform_6(%arg0: i32) -> (i32, i32, i32) {
    %c0_i32 = arith.constant 0 : i32
    %c0_i32_0 = arith.constant 0 : i32
    %c0_i32_1 = arith.constant 0 : i32
    return %arg0, %c0_i32, %c0_i32_0 : i32, i32, i32
  }
}

</mosaic_0001>

<llo_original>
// kernel: tpu_custom_call.1
$region0: #{tpu_custom_call.1}
  #allocation0 [shape = 'u32[]', space=smem, size = 0x4, offset = 0x4, fixed_abs, tag = 'smem constant byte address 0x4 - core index']
  #allocation1 [shape = 'u32[144,128]{1,0:T(1,128)}', space=vmem, size = 0x12000, scoped, tag = 'internal scratch']
  #allocation2 [shape = 'f32[76,128]{1,0:T(8,128)}', space=vmem, size = 0xa000, scoped, tag = 'scratch operand']
  #allocation3 [shape = 'f32[42,128]{1,0:T(8,128)}', space=vmem, size = 0x6000, scoped, tag = 'scratch operand']
  %s0 = inlined_call_operand.vmem [shape: f32[2,65,129], index: 0, kind: input, shape index: {}]
  %s1 = inlined_call_operand.vmem [shape: f32[2,65,129], index: 1, kind: input, shape index: {}]
  %s2 = inlined_call_operand.vmem [shape: bf16[11,129,128], index: 2, kind: input, shape index: {}]
  %s3 = inlined_call_operand.hbm [shape: bf16[11,128,128], index: 3, kind: input, shape index: {}]
  %s4 = inlined_call_operand.hbm [shape: bf16[11,128,128], index: 4, kind: input, shape index: {}]
  %s5 = inlined_call_operand.vmem [shape: f32[3,128], index: 5, kind: input, shape index: {}]
  %s6 = inlined_call_operand.vmem [shape: f32[2,9,128], index: 6, kind: output, shape index: {}]
  %s7 = sld [smem:[#allocation0]]
  $region65: #{tpu_custom_call.1} parent=0
    _
  %s9 = ssub.s32 1, %s7
  %s10 = scalar_select 0, %s9, %s7
  $region1: #{tpu_custom_call.1} parent=0
    #allocation4 [shape = 'u8[360448]{0}', space=vmem, size = 0x58000, scoped, tag = 'input window, operand 3, single buffered']
    #allocation5 [shape = 's32[2]{0}', space=sflag, size = 0x8, scoped, tag = 'scoped memory for tpu_custom_call.1']
    #allocation6 [shape = 'u8[360448]{0}', space=vmem, size = 0x58000, scoped, tag = 'input window, operand 4, single buffered']
    #allocation7 [shape = 's32[1]{0}', space=sflag, size = 0x4, scoped, tag = 'scoped memory for tpu_custom_call.1']
    %11 = vsyncpa [#allocation5], 0
    %12 = vsyncpa [#allocation7], 0
    loop: start=0, step=1, limit=4
    $region2: #{tpu_custom_call.1} parent=1 // loop_pre_header
      _
    $region3: #{tpu_custom_call.1} parent=1 // loop_header
      %s14 = sphi 0, %s18
      %p15 = scmp.ge.s32.totalorder %s14, 4
      %s24 = sphi 0, %s26
      %s27 = sphi 0, %s24
      %s28 = sphi 0, %s27
      %s44 = sphi 0, %s28
      %s50 = sphi 0, %s52
      %s53 = sphi 0, %s50
      %s54 = sphi 0, %s53
      %s70 = sphi 0, %s54
      %s74 = sphi 0, %s74
      %s76 = sphi 0, %s74
      %s77 = sphi 0, %s76
      %s91 = sphi 0, %s77
      %s95 = sphi 0, %s95
      %s97 = sphi 0, %s95
      %s98 = sphi 0, %s97
      %s112 = sphi 0, %s98
      %s116 = sphi 0, %s116
      %s118 = sphi 0, %s116
      %s119 = sphi 0, %s118
      %s133 = sphi 0, %s119
      %s137 = sphi 0, %s137
      %s139 = sphi 0, %s137
      %s140 = sphi 0, %s139
      %s154 = sphi 0, %s140
      %s160 = sphi 0, %s162
      %s163 = sphi 0, %s160
      %s164 = sphi 0, %s163
      %s180 = sphi 0, %s164
    $region4: #{tpu_custom_call.1} parent=1 // loop_header_branch
      %17 = sbr.rel (%p15) target = $region8
    $region5: #{tpu_custom_call.1} parent=1 // loop_body
      %s19 = ssub.s32 %s14, 1
      %s20 = ssub.s32 %s14, 2
      %s21 = sadd.s32 %s14, 1
      %s22 = ssub.s32 %s14, %s21
      %p23 = scmp.eq.s32.totalorder %s22, 0
      %s25 = sadd.s32 %s24, 1
      %s26 = scalar_select %p23, %s24, %s25
      %p29 = pneg %p23
      %p30 = scmp.eq.s32.totalorder %s14, 1
      %p31 = por %p29, %p30
      %p32 = scmp.ne.s32.totalorder %s24, %s27
      %p33 = scmp.eq.s32.totalorder %s14, 0
      %p34 = por %p32, %p33
      %p35 = scmp.ne.s32.totalorder %s24, %s27
      %p36 = scmp.eq.s32.totalorder %s19, 1
      %p37 = por %p35, %p36
      %p38 = scmp.ne.s32.totalorder %s27, %s28
      %p39 = scmp.eq.s32.totalorder %s19, 0
      %p40 = por %p38, %p39
      %p41 = scmp.ne.s32.totalorder %s27, %s28
      %p42 = scmp.eq.s32.totalorder %s20, 1
      %p43 = por %p41, %p42
      %p45 = scmp.ne.s32.totalorder %s28, %s44
      %p46 = scmp.eq.s32.totalorder %s20, 0
      %p47 = por %p45, %p46
      %s48 = ssub.s32 %s14, %s21
      %p49 = scmp.eq.s32.totalorder %s48, 0
      %s51 = sadd.s32 %s50, 1
      %s52 = scalar_select %p49, %s50, %s51
      %p55 = pneg %p49
      %p56 = scmp.eq.s32.totalorder %s14, 1
      %p57 = por %p55, %p56
      %p58 = scmp.ne.s32.totalorder %s50, %s53
      %p59 = scmp.eq.s32.totalorder %s14, 0
      %p60 = por %p58, %p59
      %p61 = scmp.ne.s32.totalorder %s50, %s53
      %p62 = scmp.eq.s32.totalorder %s19, 1
      %p63 = por %p61, %p62
      %p64 = scmp.ne.s32.totalorder %s53, %s54
      %p65 = scmp.eq.s32.totalorder %s19, 0
      %p66 = por %p64, %p65
      %p67 = scmp.ne.s32.totalorder %s53, %s54
      %p68 = scmp.eq.s32.totalorder %s20, 1
      %p69 = por %p67, %p68
      %p71 = scmp.ne.s32.totalorder %s54, %s70
      %p72 = scmp.eq.s32.totalorder %s20, 0
      %p73 = por %p71, %p72
      %s75 = sadd.s32 %s74, 1
      %p78 = scmp.eq.s32.totalorder %s14, 1
      %p79 = scmp.ne.s32.totalorder %s74, %s76
      %p80 = scmp.eq.s32.totalorder %s14, 0
      %p81 = por %p79, %p80
      %p82 = scmp.ne.s32.totalorder %s74, %s76
      %p83 = scmp.eq.s32.totalorder %s19, 1
      %p84 = por %p82, %p83
      %p85 = scmp.ne.s32.totalorder %s76, %s77
      %p86 = scmp.eq.s32.totalorder %s19, 0
      %p87 = por %p85, %p86
      %p88 = scmp.ne.s32.totalorder %s76, %s77
      %p89 = scmp.eq.s32.totalorder %s20, 1
      %p90 = por %p88, %p89
      %p92 = scmp.ne.s32.totalorder %s77, %s91
      %p93 = scmp.eq.s32.totalorder %s20, 0
      %p94 = por %p92, %p93
      %s96 = sadd.s32 %s95, 1
      %p99 = scmp.eq.s32.totalorder %s14, 1
      %p100 = scmp.ne.s32.totalorder %s95, %s97
      %p101 = scmp.eq.s32.totalorder %s14, 0
      %p102 = por %p100, %p101
      %p103 = scmp.ne.s32.totalorder %s95, %s97
      %p104 = scmp.eq.s32.totalorder %s19, 1
      %p105 = por %p103, %p104
      %p106 = scmp.ne.s32.totalorder %s97, %s98
      %p107 = scmp.eq.s32.totalorder %s19, 0
      %p108 = por %p106, %p107
      %p109 = scmp.ne.s32.totalorder %s97, %s98
      %p110 = scmp.eq.s32.totalorder %s20, 1
      %p111 = por %p109, %p110
      %p113 = scmp.ne.s32.totalorder %s98, %s112
      %p114 = scmp.eq.s32.totalorder %s20, 0
      %p115 = por %p113, %p114
      %s117 = sadd.s32 %s116, 1
      %p120 = scmp.eq.s32.totalorder %s14, 1
      %p121 = scmp.ne.s32.totalorder %s116, %s118
      %p122 = scmp.eq.s32.totalorder %s14, 0
      %p123 = por %p121, %p122
      %p124 = scmp.ne.s32.totalorder %s116, %s118
      %p125 = scmp.eq.s32.totalorder %s19, 1
      %p126 = por %p124, %p125
      %p127 = scmp.ne.s32.totalorder %s118, %s119
      %p128 = scmp.eq.s32.totalorder %s19, 0
      %p129 = por %p127, %p128
      %p130 = scmp.ne.s32.totalorder %s118, %s119
      %p131 = scmp.eq.s32.totalorder %s20, 1
      %p132 = por %p130, %p131
      %p134 = scmp.ne.s32.totalorder %s119, %s133
      %p135 = scmp.eq.s32.totalorder %s20, 0
      %p136 = por %p134, %p135
      %s138 = sadd.s32 %s137, 1
      %p141 = scmp.eq.s32.totalorder %s14, 1
      %p142 = scmp.ne.s32.totalorder %s137, %s139
      %p143 = scmp.eq.s32.totalorder %s14, 0
      %p144 = por %p142, %p143
      %p145 = scmp.ne.s32.totalorder %s137, %s139
      %p146 = scmp.eq.s32.totalorder %s19, 1
      %p147 = por %p145, %p146
      %p148 = scmp.ne.s32.totalorder %s139, %s140
      %p149 = scmp.eq.s32.totalorder %s19, 0
      %p150 = por %p148, %p149
      %p151 = scmp.ne.s32.totalorder %s139, %s140
      %p152 = scmp.eq.s32.totalorder %s20, 1
      %p153 = por %p151, %p152
      %p155 = scmp.ne.s32.totalorder %s140, %s154
      %p156 = scmp.eq.s32.totalorder %s20, 0
      %p157 = por %p155, %p156
      %s158 = ssub.s32 %s14, %s21
      %p159 = scmp.eq.s32.totalorder %s158, 0
      %s161 = sadd.s32 %s160, 1
      %s162 = scalar_select %p159, %s160, %s161
      %p165 = pneg %p159
      %p166 = scmp.eq.s32.totalorder %s14, 1
      %p167 = por %p165, %p166
      %p168 = scmp.ne.s32.totalorder %s160, %s163
      %p169 = scmp.eq.s32.totalorder %s14, 0
      %p170 = por %p168, %p169
      %p171 = scmp.ne.s32.totalorder %s160, %s163
      %p172 = scmp.eq.s32.totalorder %s19, 1
      %p173 = por %p171, %p172
      %p174 = scmp.ne.s32.totalorder %s163, %s164
      %p175 = scmp.eq.s32.totalorder %s19, 0
      %p176 = por %p174, %p175
      %p177 = scmp.ne.s32.totalorder %s163, %s164
      %p178 = scmp.eq.s32.totalorder %s20, 1
      %p179 = por %p177, %p178
      %p181 = scmp.ne.s32.totalorder %s164, %s180
      %p182 = scmp.eq.s32.totalorder %s20, 0
      %p183 = por %p181, %p182
      %p184 = scmp.le.s32.totalorder 1, %s14
      %p185 = scmp.lt.s32.totalorder %s14, 3
      %p186 = pnand %p184, %p185
      %p187 = pneg %p186
      // Predicated region
      $region9: #{tpu_custom_call.1} parent=5 // pred_check
        _
      $region10: #{tpu_custom_call.1} parent=5 // pred_check_branch
        %189 = sbr.rel (%p186) target = $region12
      $region11: #{tpu_custom_call.1} parent=5 // pred_region
        %s190 = ssub.s32 %s14, 1
        // Predicated region
        $region13: #{tpu_custom_call.1} parent=11 // pred_check
          %p191 = pneg %p87
        $region14: #{tpu_custom_call.1} parent=11 // pred_check_branch
          %193 = sbr.rel (%p191) target = $region16
        $region15: #{tpu_custom_call.1} parent=11 // pred_region
          _
        $region16: #{tpu_custom_call.1} parent=11 // pred_fallthru
          _
        // Predicated region
        $region17: #{tpu_custom_call.1} parent=11 // pred_check
          %p194 = pneg %p108
        $region18: #{tpu_custom_call.1} parent=11 // pred_check_branch
          %196 = sbr.rel (%p194) target = $region20
        $region19: #{tpu_custom_call.1} parent=11 // pred_region
          %s198 = ssub.s32 11264, 11264
          %199 = vsyncadd [#allocation5], %s198
          %s200 = sshll.u32 [#allocation4], 4
          %s201 = int_to_ptr.vmem [resolvable:$true] %s200
          %206 = dma.hbm_to_vmem [thread:$0]  %s3, 11264, %s201, [#allocation5], 64, 64, 4
        $region20: #{tpu_custom_call.1} parent=11 // pred_fallthru
          _
        // Predicated region
        $region21: #{tpu_custom_call.1} parent=11 // pred_check
          %p207 = pneg %p129
        $region22: #{tpu_custom_call.1} parent=11 // pred_check_branch
          %209 = sbr.rel (%p207) target = $region24
        $region23: #{tpu_custom_call.1} parent=11 // pred_region
          %s211 = ssub.s32 11264, 11264
          %212 = vsyncadd [#allocation7], %s211
          %s213 = sshll.u32 [#allocation6], 4
          %s214 = int_to_ptr.vmem [resolvable:$true] %s213
          %219 = dma.hbm_to_vmem [thread:$0]  %s4, 11264, %s214, [#allocation7], 64, 64, 4
        $region24: #{tpu_custom_call.1} parent=11 // pred_fallthru
          _
        // Predicated region
        $region25: #{tpu_custom_call.1} parent=11 // pred_check
          %p220 = pneg %p150
        $region26: #{tpu_custom_call.1} parent=11 // pred_check_branch
          %222 = sbr.rel (%p220) target = $region28
        $region27: #{tpu_custom_call.1} parent=11 // pred_region
          _
        $region28: #{tpu_custom_call.1} parent=11 // pred_fallthru
          _
      $region12: #{tpu_custom_call.1} parent=5 // pred_fallthru
        _
      %p223 = scmp.lt.s32.totalorder %s14, 2
      // Predicated region
      $region29: #{tpu_custom_call.1} parent=5 // pred_check
        %p224 = pneg %p223
      $region30: #{tpu_custom_call.1} parent=5 // pred_check_branch
        %226 = sbr.rel (%p224) target = $region32
      $region31: #{tpu_custom_call.1} parent=5 // pred_region
        // Predicated region
        $region33: #{tpu_custom_call.1} parent=31 // pred_check
          %p227 = pneg %p34
        $region34: #{tpu_custom_call.1} parent=31 // pred_check_branch
          %229 = sbr.rel (%p227) target = $region36
        $region35: #{tpu_custom_call.1} parent=31 // pred_region
          %p230 = scmp.lt.s32.totalorder %s14, 1
          %s231 = scalar_select %p230, %s14, 1
          %s232 = smul.addr %s231, 18
          %s233 = smul.addr %s232, 8
          %s234 = scalar_lea.vmem %s0, %s233
        $region36: #{tpu_custom_call.1} parent=31 // pred_fallthru
          _
        // Predicated region
        $region37: #{tpu_custom_call.1} parent=31 // pred_check
          %p235 = pneg %p60
        $region38: #{tpu_custom_call.1} parent=31 // pred_check_branch
          %237 = sbr.rel (%p235) target = $region40
        $region39: #{tpu_custom_call.1} parent=31 // pred_region
          %p238 = scmp.lt.s32.totalorder %s14, 1
          %s239 = scalar_select %p238, %s14, 1
          %s240 = smul.addr %s239, 18
          %s241 = smul.addr %s240, 8
          %s242 = scalar_lea.vmem %s1, %s241
        $region40: #{tpu_custom_call.1} parent=31 // pred_fallthru
          _
      $region32: #{tpu_custom_call.1} parent=5 // pred_fallthru
        _
      %p243 = scmp.le.s32.totalorder 1, %s14
      %p244 = scmp.lt.s32.totalorder %s14, 3
      %p245 = pnand %p243, %p244
      %p246 = pneg %p245
      // Predicated region
      $region41: #{tpu_custom_call.1} parent=5 // pred_check
        _
      $region42: #{tpu_custom_call.1} parent=5 // pred_check_branch
        %248 = sbr.rel (%p245) target = $region44
      $region43: #{tpu_custom_call.1} parent=5 // pred_region
        %s249 = ssub.s32 %s14, 1
        // Predicated region
        $region45: #{tpu_custom_call.1} parent=43 // pred_check
          %p250 = pneg %p108
        $region46: #{tpu_custom_call.1} parent=43 // pred_check_branch
          %252 = sbr.rel (%p250) target = $region48
        $region47: #{tpu_custom_call.1} parent=43 // pred_region
          %253 = dma.done [#allocation5], 11264
        $region48: #{tpu_custom_call.1} parent=43 // pred_fallthru
          _
        // Predicated region
        $region49: #{tpu_custom_call.1} parent=43 // pred_check
          %p254 = pneg %p129
        $region50: #{tpu_custom_call.1} parent=43 // pred_check_branch
          %256 = sbr.rel (%p254) target = $region52
        $region51: #{tpu_custom_call.1} parent=43 // pred_region
          %257 = dma.done [#allocation7], 11264
        $region52: #{tpu_custom_call.1} parent=43 // pred_fallthru
          _
        %p258 = scmp.lt.s32.totalorder %s19, 1
        %s259 = scalar_select %p258, %s19, 1
        %s260 = smul.addr %s259, 18
        %s261 = smul.addr %s260, 8
        %s262 = scalar_lea.vmem %s0, %s261
        %p263 = pneg %p40
        %p264 = pneg %p37
        %p265 = scmp.lt.s32.totalorder %s19, 1
        %s266 = scalar_select %p265, %s19, 1
        %s267 = smul.addr %s266, 18
        %s268 = smul.addr %s267, 8
        %s269 = scalar_lea.vmem %s1, %s268
        %p270 = pneg %p66
        %p271 = pneg %p63
        %p272 = pneg %p87
        %p273 = pneg %p84
        %p274 = pneg %p108
        %p275 = pneg %p105
        %p276 = pneg %p129
        %p277 = pneg %p126
        %p278 = pneg %p150
        %p279 = pneg %p147
        %p280 = pneg %p176
        %p281 = pneg %p173
        %p282 = scmp.lt.s32.totalorder %s19, 1
        %s283 = scalar_select %p282, %s19, 1
        %s284 = smul.addr %s283, 2
        %s285 = smul.addr %s284, 8
        %s286 = scalar_lea.vmem %s6, %s285
        %p287 = scmp.lt.s32.totalorder %s19, 1
        %s288 = scalar_select %p287, %s19, 1
        %s289 = smul.addr %s288, 18
        %s290 = smul.addr %s289, 8
        %s291 = scalar_lea.vmem %s0, %s290
        %p292 = scmp.lt.s32.totalorder %s19, 1
        %s293 = scalar_select %p292, %s19, 1
        %s294 = smul.addr %s293, 18
        %s295 = smul.addr %s294, 8
        %s296 = scalar_lea.vmem %s1, %s295
        %p297 = scmp.lt.s32.totalorder %s19, 1
        %s298 = scalar_select %p297, %s19, 1
        %s299 = smul.addr %s298, 2
        %s300 = smul.addr %s299, 8
        %s301 = scalar_lea.vmem %s6, %s300
        %303 = vst [vmem:[#allocation2] sm:$0xff] 0.0
        %304 = vst [vmem:[#allocation2 + $0x8] sm:$0xff] 0.0
        %305 = vst [vmem:[#allocation2 + $0x10] sm:$0xff] 0.0
        %306 = vst [vmem:[#allocation2 + $0x18] sm:$0xff] 0.0
        %307 = vst [vmem:[#allocation2 + $0x20] sm:$0xff] 0.0
        %308 = vst [vmem:[#allocation2 + $0x28] sm:$0xff] 0.0
        %309 = vst [vmem:[#allocation2 + $0x30] sm:$0xff] 0.0
        %310 = vst [vmem:[#allocation2 + $0x38] sm:$0xff] 0.0
        %311 = vst [vmem:[#allocation2 + $0x40] sm:$0xff] 0.0
        %312 = vst [vmem:[#allocation2 + $0x48] sm:$0xf] 0.0
        %313 = vst [vmem:[#allocation3] sm:$0xff] 0.0
        %314 = vst [vmem:[#allocation3 + $0x8] sm:$0xff] 0.0
        %315 = vst [vmem:[#allocation3 + $0x10] sm:$0xff] 0.0
        %316 = vst [vmem:[#allocation3 + $0x18] sm:$0xff] 0.0
        %317 = vst [vmem:[#allocation3 + $0x20] sm:$0xff] 0.0
        %318 = vst [vmem:[#allocation3 + $0x28] sm:$0x3] 0.0
        %v319 = vld [vmem:[%s5] sm:$0x1]
        %v320 = vld [vmem:[%s5 + $0x1] sm:$0x1]
        %v321 = vld [vmem:[%s5 + $0x2] sm:$0x1]
        %v322 = vld [vmem:[%s291] sm:$0xff]
        %v323 = vld [vmem:[%s291 + $0x8] sm:$0xff]
        %v324 = vld [vmem:[%s291 + $0x10] sm:$0xff]
        %v325 = vld [vmem:[%s291 + $0x18] sm:$0xff]
        %v326 = vld [vmem:[%s291 + $0x20] sm:$0xff]
        %v327 = vld [vmem:[%s291 + $0x28] sm:$0xff]
        %v328 = vld [vmem:[%s291 + $0x30] sm:$0xff]
        %v329 = vld [vmem:[%s291 + $0x38] sm:$0xff]
        %v330 = vld [vmem:[%s291 + $0x40] sm:$0xff]
        %v331 = vld [vmem:[%s291 + $0x48] sm:$0xff]
        %v332 = vld [vmem:[%s291 + $0x50] sm:$0xff]
        %v333 = vld [vmem:[%s291 + $0x58] sm:$0xff]
        %v334 = vld [vmem:[%s291 + $0x60] sm:$0xff]
        %v335 = vld [vmem:[%s291 + $0x68] sm:$0xff]
        %v336 = vld [vmem:[%s291 + $0x70] sm:$0xf]
        %v337 = vld [vmem:[%s291 + $0x78] sm:$0xf]
        %v338 = vpack.c.bf16 %v324, %v322
        %v339 = vpack.c.bf16 %v325, %v323
        %v340 = vpack.c.bf16 %v328, %v326
        %v341 = vpack.c.bf16 %v329, %v327
        %v342 = vpack.c.bf16 %v332, %v330
        %v343 = vpack.c.bf16 %v333, %v331
        %v344 = vpack.c.bf16 %v336, %v334
        %v345 = vpack.c.bf16 %v337, %v335
        %v346 = vld [vmem:[%s2] sm:$0xf]
        %v347 = vld [vmem:[%s2 + $0x4] sm:$0xf]
        %v348 = vld [vmem:[%s2 + $0x8] sm:$0xf]
        %v349 = vld [vmem:[%s2 + $0xc] sm:$0xf]
        %v350 = vld [vmem:[%s2 + $0x10] sm:$0xf]
        %v351 = vld [vmem:[%s2 + $0x14] sm:$0xf]
        %v352 = vld [vmem:[%s2 + $0x18] sm:$0xf]
        %v353 = vld [vmem:[%s2 + $0x1c] sm:$0xf]
        %v354 = vld [vmem:[%s2 + $0x20] sm:$0xf]
        %v355 = vld [vmem:[%s2 + $0x24] sm:$0xf]
        %v356 = vld [vmem:[%s2 + $0x28] sm:$0xf]
        %v357 = vld [vmem:[%s2 + $0x2c] sm:$0xf]
        %v358 = vld [vmem:[%s2 + $0x30] sm:$0xf]
        %v359 = vld [vmem:[%s2 + $0x34] sm:$0xf]
        %v360 = vld [vmem:[%s2 + $0x38] sm:$0xf]
        %v361 = vld [vmem:[%s2 + $0x3c] sm:$0xf]
        %v362 = vld [vmem:[%s2 + $0x40] sm:$0x1]
        %v363 = vld [vmem:[%s291] sm:$0xfe]
        %v364 = vld [vmem:[%s291 + $0x8] sm:$0xfe]
        %v365 = vld [vmem:[%s291 + $0x70] sm:$0x1f]
        %v366 = vld [vmem:[%s291 + $0x78] sm:$0x1f]
        %v367 = vpack.c.bf16 %v324, %v363
        %v368 = vpack.c.bf16 %v325, %v364
        %v369 = vpack.c.bf16 %v365, %v334
        %v370 = vpack.c.bf16 %v366, %v335
        %s371 = scalar_lea.vmem %s2, 136
        %v372 = vld [vmem:[%s371] sm:$0xf]
        %v373 = vld [vmem:[%s371 + $0x4] sm:$0xf]
        %v374 = vld [vmem:[%s371 + $0x8] sm:$0xf]
        %v375 = vld [vmem:[%s371 + $0xc] sm:$0xf]
        %v376 = vld [vmem:[%s371 + $0x10] sm:$0xf]
        %v377 = vld [vmem:[%s371 + $0x14] sm:$0xf]
        %v378 = vld [vmem:[%s371 + $0x18] sm:$0xf]
        %v379 = vld [vmem:[%s371 + $0x1c] sm:$0xf]
        %v380 = vld [vmem:[%s371 + $0x20] sm:$0xf]
        %v381 = vld [vmem:[%s371 + $0x24] sm:$0xf]
        %v382 = vld [vmem:[%s371 + $0x28] sm:$0xf]
        %v383 = vld [vmem:[%s371 + $0x2c] sm:$0xf]
        %v384 = vld [vmem:[%s371 + $0x30] sm:$0xf]
        %v385 = vld [vmem:[%s371 + $0x34] sm:$0xf]
        %v386 = vld [vmem:[%s371 + $0x38] sm:$0xf]
        %v387 = vld [vmem:[%s371 + $0x3c] sm:$0xf]
        %v388 = vld [vmem:[%s371 + $0x40] sm:$0x1]
        %vm389 = vsmask.f32 7424
        %v391 = vshrl.u32 %v367, 16
        %v393 = vshll.u32 %v367, 16
        %v395 = vrot.slane %v393, 1
        %v396 = vor.u32 %v391, %v395
        %v398 = vshll.u32 %v340, 16
        %v400 = vrot.slane %v398, 1
        %v401 = vsel %vm389, %v396, %v400
        %v403 = vshrl.u32 %v368, 16
        %v405 = vshll.u32 %v368, 16
        %v407 = vrot.slane %v405, 1
        %v408 = vor.u32 %v403, %v407
        %v410 = vshll.u32 %v341, 16
        %v412 = vrot.slane %v410, 1
        %v413 = vsel %vm389, %v408, %v412
        %v414 = vshrl.u32 %v340, 16
        %v416 = vor.u32 %v414, %v400
        %v418 = vshll.u32 %v342, 16
        %v420 = vrot.slane %v418, 1
        %v421 = vsel %vm389, %v416, %v420
        %v422 = vshrl.u32 %v341, 16
        %v424 = vor.u32 %v422, %v412
        %v426 = vshll.u32 %v343, 16
        %v428 = vrot.slane %v426, 1
        %v429 = vsel %vm389, %v424, %v428
        %v430 = vshrl.u32 %v342, 16
        %v432 = vor.u32 %v430, %v420
        %v434 = vshll.u32 %v369, 16
        %v436 = vrot.slane %v434, 1
        %v437 = vsel %vm389, %v432, %v436
        %v438 = vshrl.u32 %v343, 16
        %v440 = vor.u32 %v438, %v428
        %v442 = vshll.u32 %v370, 16
        %v444 = vrot.slane %v442, 1
        %v445 = vsel %vm389, %v440, %v444
        %v446 = vshrl.u32 %v369, 16
        %v448 = vor.u32 %v446, %v436
        %v449 = vshrl.u32 %v370, 16
        %v451 = vor.u32 %v449, %v444
        %v473 = vunpack.c.l.b16 %v372
        %v474 = vunpack.c.l.b16 %v373
        %v475 = vunpack.c.l.b16 %v374
        %v476 = vunpack.c.l.b16 %v375
        %v477 = vunpack.c.l.b16 %v376
        %v478 = vunpack.c.l.b16 %v377
        %v479 = vunpack.c.l.b16 %v378
        %v480 = vunpack.c.l.b16 %v379
        %v481 = vunpack.c.l.b16 %v380
        %v482 = vunpack.c.l.b16 %v381
        %v483 = vunpack.c.l.b16 %v382
        %v484 = vunpack.c.l.b16 %v383
        %v485 = vunpack.c.l.b16 %v384
        %v486 = vunpack.c.l.b16 %v385
        %v487 = vunpack.c.l.b16 %v386
        %v488 = vunpack.c.l.b16 %v387
        %v489 = vunpack.c.l.b16 %v388
        %v490 = vpack.c.b16 %v474, %v473
        %v491 = vpack.c.b16 %v476, %v475
        %v492 = vpack.c.b16 %v478, %v477
        %v493 = vpack.c.b16 %v480, %v479
        %v494 = vpack.c.b16 %v482, %v481
        %v495 = vpack.c.b16 %v484, %v483
        %v496 = vpack.c.b16 %v486, %v485
        %v497 = vpack.c.b16 %v488, %v487
        %v498 = vpack.c.b16 %v489, %v489
        %vm507 = vcmask 7168
        %v509 = vsel %vm507, %v413, 0
        %v512 = vsel %vm507, %v429, 0
        %v515 = vsel %vm507, %v445, 0
        %v518 = vsel %vm507, %v451, 0
        %vm520 = vcmask 1040384
        %v521 = vsel 0, 4294967295, 65535
        %v522 = vsel %vm520, %v521, 0
        %v524 = vand.u32 %v498, %v522
        %526 = vmatprep.subr.bf16.mxu0 0
        %527 = vmatpush1.bf16.msra.mxu0 %v490
        %528 = vmatprep.subr.bf16.mxu0 0
        %529 = vmatpush1.bf16.msra.mxu0 %v491
        %530 = vmatprep.subr.bf16.mxu0 0
        %531 = vmatpush1.bf16.msra.mxu0 %v492
        %532 = vmatprep.subr.bf16.mxu0 0
        %533 = vmatpush1.bf16.msra.mxu0 %v493
        %534 = vmatprep.subr.bf16.mxu0 0
        %535 = vmatpush1.bf16.msra.mxu0 %v494
        %536 = vmatprep.subr.bf16.mxu0 0
        %537 = vmatpush1.bf16.msra.mxu0 %v495
        %538 = vmatprep.subr.bf16.mxu0 0
        %539 = vmatpush1.bf16.msra.mxu0 %v496
        %540 = vmatprep.subr.bf16.mxu0 0
        %541 = vmatpush1.bf16.msra.mxu0 %v497
        %542 = vmatprep.subr.bf16.mxu0 0
        %543 = vmatpush1.bf16.msra.mxu0 %v524
        %544 = vmatprep.subr.bf16.mxu0 0
        %545 = vmatpush1.bf16.msra.mxu0 0
        %546 = vmatprep.subr.bf16.mxu0 0
        %547 = vmatpush1.bf16.msra.mxu0 0
        %548 = vmatprep.subr.bf16.mxu0 0
        %549 = vmatpush1.bf16.msra.mxu0 0
        %550 = vmatprep.subr.bf16.mxu0 0
        %551 = vmatpush1.bf16.msra.mxu0 0
        %552 = vmatprep.subr.bf16.mxu0 0
        %553 = vmatpush1.bf16.msra.mxu0 0
        %554 = vmatprep.subr.bf16.mxu0 0
        %555 = vmatpush1.bf16.msra.mxu0 0
        %556 = vmatprep.subr.bf16.mxu0 0
        %557 = vmatpush1.bf16.msra.mxu0 0
        %558 = vmatprep.mubr.bf16.mxu0 %v509
        %559 = vmatmul.mubr.bf16.gmra.mrb[0].mxu0 %v401
        %v560 = vpop.f32.mrb[0].mxu0
        %v561 = vadd.f32 0.0, %v560
        %v562 = vpop.f32.mrb[0].mxu0
        %v563 = vpop.f32.mrb[0].mxu0
        %v564 = vadd.f32 0.0, %v563
        %v565 = vpop.f32.mrb[0].mxu0
        %566 = vmatprep.mubr.bf16.mxu0 %v512
        %567 = vmatmul.mubr.bf16.gmra.mrb[0].mxu0 %v421
        %v568 = vpop.f32.mrb[0].mxu0
        %v569 = vadd.f32 0.0, %v568
        %v570 = vpop.f32.mrb[0].mxu0
        %v571 = vpop.f32.mrb[0].mxu0
        %v572 = vadd.f32 0.0, %v571
        %v573 = vpop.f32.mrb[0].mxu0
        %574 = vmatprep.mubr.bf16.mxu0 %v515
        %575 = vmatmul.mubr.bf16.gmra.mrb[0].mxu0 %v437
        %v576 = vpop.f32.mrb[0].mxu0
        %v577 = vadd.f32 0.0, %v576
        %v578 = vpop.f32.mrb[0].mxu0
        %v579 = vpop.f32.mrb[0].mxu0
        %v580 = vadd.f32 0.0, %v579
        %v581 = vpop.f32.mrb[0].mxu0
        %582 = vmatprep.mubr.bf16.mxu0 %v518
        %583 = vmatmul.mubr.bf16.gmra.mrb[0].mxu0 %v448
        %v584 = vpop.f32.mrb[0].mxu0
        %v585 = vadd.f32 0.0, %v584
        %v586 = vpop.f32.mrb[0].mxu0
        %v587 = vpop.f32.mrb[0].mxu0
        %v588 = vadd.f32 0.0, %v587
        %v589 = vpop.f32.mrb[0].mxu0
        %590 = vdwg.mxu0
        %v608 = vunpack.c.l.b16 %v346
        %v609 = vunpack.c.l.b16 %v347
        %v610 = vunpack.c.l.b16 %v348
        %v611 = vunpack.c.l.b16 %v349
        %v612 = vunpack.c.l.b16 %v350
        %v613 = vunpack.c.l.b16 %v351
        %v614 = vunpack.c.l.b16 %v352
        %v615 = vunpack.c.l.b16 %v353
        %v616 = vunpack.c.l.b16 %v354
        %v617 = vunpack.c.l.b16 %v355
        %v618 = vunpack.c.l.b16 %v356
        %v619 = vunpack.c.l.b16 %v357
        %v620 = vunpack.c.l.b16 %v358
        %v621 = vunpack.c.l.b16 %v359
        %v622 = vunpack.c.l.b16 %v360
        %v623 = vunpack.c.l.b16 %v361
        %v624 = vunpack.c.l.b16 %v362
        %v625 = vpack.c.b16 %v609, %v608
        %v626 = vpack.c.b16 %v611, %v610
        %v627 = vpack.c.b16 %v613, %v612
        %v628 = vpack.c.b16 %v615, %v614
        %v629 = vpack.c.b16 %v617, %v616
        %v630 = vpack.c.b16 %v619, %v618
        %v631 = vpack.c.b16 %v621, %v620
        %v632 = vpack.c.b16 %v623, %v622
        %v633 = vpack.c.b16 %v624, %v624
        %v643 = vsel %vm507, %v339, 0
        %v645 = vsel %vm507, %v341, 0
        %v647 = vsel %vm507, %v343, 0
        %v650 = vsel %vm507, %v345, 0
        %v653 = vand.u32 %v633, %v522
        %655 = vmatprep.subr.bf16.mxu0 0
        %656 = vmatpush1.bf16.msra.mxu0 %v625
        %657 = vmatprep.subr.bf16.mxu0 0
        %658 = vmatpush1.bf16.msra.mxu0 %v626
        %659 = vmatprep.subr.bf16.mxu0 0
        %660 = vmatpush1.bf16.msra.mxu0 %v627
        %661 = vmatprep.subr.bf16.mxu0 0
        %662 = vmatpush1.bf16.msra.mxu0 %v628
        %663 = vmatprep.subr.bf16.mxu0 0
        %664 = vmatpush1.bf16.msra.mxu0 %v629
        %665 = vmatprep.subr.bf16.mxu0 0
        %666 = vmatpush1.bf16.msra.mxu0 %v630
        %667 = vmatprep.subr.bf16.mxu0 0
        %668 = vmatpush1.bf16.msra.mxu0 %v631
        %669 = vmatprep.subr.bf16.mxu0 0
        %670 = vmatpush1.bf16.msra.mxu0 %v632
        %671 = vmatprep.subr.bf16.mxu0 0
        %672 = vmatpush1.bf16.msra.mxu0 %v653
        %673 = vmatprep.subr.bf16.mxu0 0
        %674 = vmatpush1.bf16.msra.mxu0 0
        %675 = vmatprep.subr.bf16.mxu0 0
        %676 = vmatpush1.bf16.msra.mxu0 0
        %677 = vmatprep.subr.bf16.mxu0 0
        %678 = vmatpush1.bf16.msra.mxu0 0
        %679 = vmatprep.subr.bf16.mxu0 0
        %680 = vmatpush1.bf16.msra.mxu0 0
        %681 = vmatprep.subr.bf16.mxu0 0
        %682 = vmatpush1.bf16.msra.mxu0 0
        %683 = vmatprep.subr.bf16.mxu0 0
        %684 = vmatpush1.bf16.msra.mxu0 0
        %685 = vmatprep.subr.bf16.mxu0 0
        %686 = vmatpush1.bf16.msra.mxu0 0
        %687 = vmatprep.mubr.bf16.mxu0 %v643
        %688 = vmatmul.mubr.bf16.gmra.mrb[0].mxu0 %v338
        %v689 = vpop.f32.mrb[0].mxu0
        %v690 = vadd.f32 %v561, %v689
        %v691 = vpop.f32.mrb[0].mxu0
        %v692 = vpop.f32.mrb[0].mxu0
        %v693 = vadd.f32 %v564, %v692
        %v694 = vpop.f32.mrb[0].mxu0
        %695 = vmatprep.mubr.bf16.mxu0 %v645
        %696 = vmatmul.mubr.bf16.gmra.mrb[0].mxu0 %v340
        %v697 = vpop.f32.mrb[0].mxu0
        %v698 = vadd.f32 %v569, %v697
        %v699 = vpop.f32.mrb[0].mxu0
        %v700 = vpop.f32.mrb[0].mxu0
        %v701 = vadd.f32 %v572, %v700
        %v702 = vpop.f32.mrb[0].mxu0
        %703 = vmatprep.mubr.bf16.mxu0 %v647
        %704 = vmatmul.mubr.bf16.gmra.mrb[0].mxu0 %v342
        %v705 = vpop.f32.mrb[0].mxu0
        %v706 = vadd.f32 %v577, %v705
        %v707 = vpop.f32.mrb[0].mxu0
        %v708 = vpop.f32.mrb[0].mxu0
        %v709 = vadd.f32 %v580, %v708
        %v710 = vpop.f32.mrb[0].mxu0
        %711 = vmatprep.mubr.bf16.mxu0 %v650
        %712 = vmatmul.mubr.bf16.gmra.mrb[0].mxu0 %v344
        %v713 = vpop.f32.mrb[0].mxu0
        %v714 = vadd.f32 %v585, %v713
        %v715 = vpop.f32.mrb[0].mxu0
        %v716 = vpop.f32.mrb[0].mxu0
        %v717 = vadd.f32 %v588, %v716
        %v718 = vpop.f32.mrb[0].mxu0
        %719 = vdwg.mxu0
        %v720 = vld [vmem:[%s291] sm:$0xfc]
        %v721 = vld [vmem:[%s291 + $0x8] sm:$0xfc]
        %v722 = vld [vmem:[%s291 + $0x70] sm:$0x3f]
        %v723 = vld [vmem:[%s291 + $0x78] sm:$0x3f]
        %v724 = vpack.c.bf16 %v324, %v720
        %v725 = vpack.c.bf16 %v325, %v721
        %v726 = vpack.c.bf16 %v722, %v334
        %v727 = vpack.c.bf16 %v723, %v335
        %s728 = scalar_lea.vmem %s2, 272
        %v729 = vld [vmem:[%s728] sm:$0xf]
        %v730 = vld [vmem:[%s728 + $0x4] sm:$0xf]
        %v731 = vld [vmem:[%s728 + $0x8] sm:$0xf]
        %v732 = vld [vmem:[%s728 + $0xc] sm:$0xf]
        %v733 = vld [vmem:[%s728 + $0x10] sm:$0xf]
        %v734 = vld [vmem:[%s728 + $0x14] sm:$0xf]
        %v735 = vld [vmem:[%s728 + $0x18] sm:$0xf]
        %v736 = vld [vmem:[%s728 + $0x1c] sm:$0xf]
        %v737 = vld [vmem:[%s728 + $0x20] sm:$0xf]
        %v738 = vld [vmem:[%s728 + $0x24] sm:$0xf]
        %v739 = vld [vmem:[%s728 + $0x28] sm:$0xf]
        %v740 = vld [vmem:[%s728 + $0x2c] sm:$0xf]
        %v741 = vld [vmem:[%s728 + $0x30] sm:$0xf]
        %v742 = vld [vmem:[%s728 + $0x34] sm:$0xf]
        %v743 = vld [vmem:[%s728 + $0x38] sm:$0xf]
        %v744 = vld [vmem:[%s728 + $0x3c] sm:$0xf]
        %v745 = vld [vmem:[%s728 + $0x40] sm:$0x1]
        %vm754 = vcmask 1046528
        %v755 = vrot.slane %v724, 1
        %v756 = vrot.slane %v340, 1
        %v757 = vsel %vm754, %v755, %v756
        %v758 = vrot.slane %v725, 1
        %v759 = vrot.slane %v341, 1
        %v760 = vsel %vm754, %v758, %v759
        %v761 = vrot.slane %v342, 1
        %v762 = vsel %vm754, %v756, %v761
        %v763 = vrot.slane %v343, 1
        %v764 = vsel %vm754, %v759, %v763
        %v765 = vrot.slane %v726, 1
        %v766 = vsel %vm754, %v761, %v765
        %v767 = vrot.slane %v727, 1
        %v768 = vsel %vm754, %v763, %v767
        %v790 = vunpack.c.l.b16 %v729
        %v791 = vunpack.c.l.b16 %v730
        %v792 = vunpack.c.l.b16 %v731
        %v793 = vunpack.c.l.b16 %v732
        %v794 = vunpack.c.l.b16 %v733
        %v795 = vunpack.c.l.b16 %v734
        %v796 = vunpack.c.l.b16 %v735
        %v797 = vunpack.c.l.b16 %v736
        %v798 = vunpack.c.l.b16 %v737
        %v799 = vunpack.c.l.b16 %v738
        %v800 = vunpack.c.l.b16 %v739
        %v801 = vunpack.c.l.b16 %v740
        %v802 = vunpack.c.l.b16 %v741
        %v803 = vunpack.c.l.b16 %v742
        %v804 = vunpack.c.l.b16 %v743
        %v805 = vunpack.c.l.b16 %v744
        %v806 = vunpack.c.l.b16 %v745
        %v807 = vpack.c.b16 %v791, %v790
        %v808 = vpack.c.b16 %v793, %v792
        %v809 = vpack.c.b16 %v795, %v794
        %v810 = vpack.c.b16 %v797, %v796
        %v811 = vpack.c.b16 %v799, %v798
        %v812 = vpack.c.b16 %v801, %v800
        %v813 = vpack.c.b16 %v803, %v802
        %v814 = vpack.c.b16 %v805, %v804
        %v815 = vpack.c.b16 %v806, %v806
        %v825 = vsel %vm507, %v760, 0
        %v828 = vsel %vm507, %v764, 0
        %v831 = vsel %vm507, %v768, 0
        %v834 = vsel %vm507, %v767, 0
        %v837 = vand.u32 %v815, %v522
        %839 = vmatprep.subr.bf16.mxu0 0
        %840 = vmatpush1.bf16.msra.mxu0 %v807
        %841 = vmatprep.subr.bf16.mxu0 0
        %842 = vmatpush1.bf16.msra.mxu0 %v808
        %843 = vmatprep.subr.bf16.mxu0 0
        %844 = vmatpush1.bf16.msra.mxu0 %v809
        %845 = vmatprep.subr.bf16.mxu0 0
        %846 = vmatpush1.bf16.msra.mxu0 %v810
        %847 = vmatprep.subr.bf16.mxu0 0
        %848 = vmatpush1.bf16.msra.mxu0 %v811
        %849 = vmatprep.subr.bf16.mxu0 0
        %850 = vmatpush1.bf16.msra.mxu0 %v812
        %851 = vmatprep.subr.bf16.mxu0 0
        %852 = vmatpush1.bf16.msra.mxu0 %v813
        %853 = vmatprep.subr.bf16.mxu0 0
        %854 = vmatpush1.bf16.msra.mxu0 %v814
        %855 = vmatprep.subr.bf16.mxu0 0
        %856 = vmatpush1.bf16.msra.mxu0 %v837
        %857 = vmatprep.subr.bf16.mxu0 0
        %858 = vmatpush1.bf16.msra.mxu0 0
        %859 = vmatprep.subr.bf16.mxu0 0
        %860 = vmatpush1.bf16.msra.mxu0 0
        %861 = vmatprep.subr.bf16.mxu0 0
        %862 = vmatpush1.bf16.msra.mxu0 0
        %863 = vmatprep.subr.bf16.mxu0 0
        %864 = vmatpush1.bf16.msra.mxu0 0
        %865 = vmatprep.subr.bf16.mxu0 0
        %866 = vmatpush1.bf16.msra.mxu0 0
        %867 = vmatprep.subr.bf16.mxu0 0
        %868 = vmatpush1.bf16.msra.mxu0 0
        %869 = vmatprep.subr.bf16.mxu0 0
        %870 = vmatpush1.bf16.msra.mxu0 0
        %871 = vmatprep.mubr.bf16.mxu0 %v825
        %872 = vmatmul.mubr.bf16.gmra.mrb[0].mxu0 %v757
        %v873 = vpop.f32.mrb[0].mxu0
        %v874 = vadd.f32 0.0, %v873
        %v875 = vpop.f32.mrb[0].mxu0
        %v876 = vpop.f32.mrb[0].mxu0
        %v877 = vadd.f32 0.0, %v876
        %v878 = vpop.f32.mrb[0].mxu0
        %879 = vmatprep.mubr.bf16.mxu0 %v828
        %880 = vmatmul.mubr.bf16.gmra.mrb[0].mxu0 %v762
        %v881 = vpop.f32.mrb[0].mxu0
        %v882 = vadd.f32 0.0, %v881
        %v883 = vpop.f32.mrb[0].mxu0
        %v884 = vpop.f32.mrb[0].mxu0
        %v885 = vadd.f32 0.0, %v884
        %v886 = vpop.f32.mrb[0].mxu0
        %887 = vmatprep.mubr.bf16.mxu0 %v831
        %888 = vmatmul.mubr.bf16.gmra.mrb[0].mxu0 %v766
        %v889 = vpop.f32.mrb[0].mxu0
        %v890 = vadd.f32 0.0, %v889
        %v891 = vpop.f32.mrb[0].mxu0
        %v892 = vpop.f32.mrb[0].mxu0
        %v893 = vadd.f32 0.0, %v892
        %v894 = vpop.f32.mrb[0].mxu0
        %895 = vmatprep.mubr.bf16.mxu0 %v834
        %896 = vmatmul.mubr.bf16.gmra.mrb[0].mxu0 %v765
        %v897 = vpop.f32.mrb[0].mxu0
        %v898 = vadd.f32 0.0, %v897
        %v899 = vpop.f32.mrb[0].mxu0
        %v900 = vpop.f32.mrb[0].mxu0
        %v901 = vadd.f32 0.0, %v900
        %v902 = vpop.f32.mrb[0].mxu0
        %903 = vdwg.mxu0
        %v904 = vadd.f32 %v690, %v874
        %v905 = vadd.f32 %v693, %v877
        %v906 = vadd.f32 %v698, %v882
        %v907 = vadd.f32 %v701, %v885
        %v908 = vadd.f32 %v706, %v890
        %v909 = vadd.f32 %v709, %v893
        %v910 = vadd.f32 %v714, %v898
        %v911 = vadd.f32 %v717, %v901
        %v912 = vld [vmem:[%s291] sm:$0xf8]
        %v913 = vld [vmem:[%s291 + $0x8] sm:$0xf8]
        %v914 = vld [vmem:[%s291 + $0x70] sm:$0x7f]
        %v915 = vld [vmem:[%s291 + $0x78] sm:$0x7f]
        %v916 = vpack.c.bf16 %v324, %v912
        %v917 = vpack.c.bf16 %v325, %v913
        %v918 = vpack.c.bf16 %v914, %v334
        %v919 = vpack.c.bf16 %v915, %v335
        %s920 = scalar_lea.vmem %s2, 408
        %v921 = vld [vmem:[%s920] sm:$0xf]
        %v922 = vld [vmem:[%s920 + $0x4] sm:$0xf]
        %v923 = vld [vmem:[%s920 + $0x8] sm:$0xf]
        %v924 = vld [vmem:[%s920 + $0xc] sm:$0xf]
        %v925 = vld [vmem:[%s920 + $0x10] sm:$0xf]
        %v926 = vld [vmem:[%s920 + $0x14] sm:$0xf]
        %v927 = vld [vmem:[%s920 + $0x18] sm:$0xf]
        %v928 = vld [vmem:[%s920 + $0x1c] sm:$0xf]
        %v929 = vld [vmem:[%s920 + $0x20] sm:$0xf]
        %v930 = vld [vmem:[%s920 + $0x24] sm:$0xf]
        %v931 = vld [vmem:[%s920 + $0x28] sm:$0xf]
        %v932 = vld [vmem:[%s920 + $0x2c] sm:$0xf]
        %v933 = vld [vmem:[%s920 + $0x30] sm:$0xf]
        %v934 = vld [vmem:[%s920 + $0x34] sm:$0xf]
        %v935 = vld [vmem:[%s920 + $0x38] sm:$0xf]
        %v936 = vld [vmem:[%s920 + $0x3c] sm:$0xf]
        %v937 = vld [vmem:[%s920 + $0x40] sm:$0x1]
        %vm938 = vsmask.f32 6400
        %v940 = vshrl.u32 %v916, 16
        %v942 = vrot.slane %v940, 1
        %v943 = vshll.u32 %v916, 16
        %v945 = vrot.slane %v943, 2
        %v946 = vor.u32 %v942, %v945
        %v947 = vrot.slane %v414, 1
        %v948 = vrot.slane %v398, 2
        %v949 = vor.u32 %v947, %v948
        %v950 = vsel %vm938, %v946, %v949
        %v952 = vshrl.u32 %v917, 16
        %v954 = vrot.slane %v952, 1
        %v955 = vshll.u32 %v917, 16
        %v957 = vrot.slane %v955, 2
        %v958 = vor.u32 %v954, %v957
        %v959 = vrot.slane %v422, 1
        %v960 = vrot.slane %v410, 2
        %v961 = vor.u32 %v959, %v960
        %v962 = vsel %vm938, %v958, %v961
        %v963 = vrot.slane %v430, 1
        %v964 = vrot.slane %v418, 2
        %v965 = vor.u32 %v963, %v964
        %v966 = vsel %vm938, %v949, %v965
        %v967 = vrot.slane %v438, 1
        %v968 = vrot.slane %v426, 2
        %v969 = vor.u32 %v967, %v968
        %v970 = vsel %vm938, %v961, %v969
        %v972 = vshrl.u32 %v918, 16
        %v974 = vrot.slane %v972, 1
        %v975 = vshll.u32 %v918, 16
        %v977 = vrot.slane %v975, 2
        %v978 = vor.u32 %v974, %v977
        %v979 = vsel %vm938, %v965, %v978
        %v981 = vshrl.u32 %v919, 16
        %v983 = vrot.slane %v981, 1
        %v984 = vshll.u32 %v919, 16
        %v986 = vrot.slane %v984, 2
        %v987 = vor.u32 %v983, %v986
        %v988 = vsel %vm938, %v969, %v987
        %v1010 = vunpack.c.l.b16 %v921
        %v1011 = vunpack.c.l.b16 %v922
        %v1012 = vunpack.c.l.b16 %v923
        %v1013 = vunpack.c.l.b16 %v924
        %v1014 = vunpack.c.l.b16 %v925
        %v1015 = vunpack.c.l.b16 %v926
        %v1016 = vunpack.c.l.b16 %v927
        %v1017 = vunpack.c.l.b16 %v928
        %v1018 = vunpack.c.l.b16 %v929
        %v1019 = vunpack.c.l.b16 %v930
        %v1020 = vunpack.c.l.b16 %v931
        %v1021 = vunpack.c.l.b16 %v932
        %v1022 = vunpack.c.l.b16 %v933
        %v1023 = vunpack.c.l.b16 %v934
        %v1024 = vunpack.c.l.b16 %v935
        %v1025 = vunpack.c.l.b16 %v936
        %v1026 = vunpack.c.l.b16 %v937
        %v1027 = vpack.c.b16 %v1011, %v1010
        %v1028 = vpack.c.b16 %v1013, %v1012
        %v1029 = vpack.c.b16 %v1015, %v1014
        %v1030 = vpack.c.b16 %v1017, %v1016
        %v1031 = vpack.c.b16 %v1019, %v1018
        %v1032 = vpack.c.b16 %v1021, %v1020
        %v1033 = vpack.c.b16 %v1023, %v1022
        %v1034 = vpack.c.b16 %v1025, %v1024
        %v1035 = vpack.c.b16 %v1026, %v1026
        %v1045 = vsel %vm507, %v962, 0
        %v1048 = vsel %vm507, %v970, 0
        %v1051 = vsel %vm507, %v988, 0
        %v1054 = vsel %vm507, %v987, 0
        %v1057 = vand.u32 %v1035, %v522
        %1059 = vmatprep.subr.bf16.mxu0 0
        %1060 = vmatpush1.bf16.msra.mxu0 %v1027
        %1061 = vmatprep.subr.bf16.mxu0 0
        %1062 = vmatpush1.bf16.msra.mxu0 %v1028
        %1063 = vmatprep.subr.bf16.mxu0 0
        %1064 = vmatpush1.bf16.msra.mxu0 %v1029
        %1065 = vmatprep.subr.bf16.mxu0 0
        %1066 = vmatpush1.bf16.msra.mxu0 %v1030
        %1067 = vmatprep.subr.bf16.mxu0 0
        %1068 = vmatpush1.bf16.msra.mxu0 %v1031
        %1069 = vmatprep.subr.bf16.mxu0 0
        %1070 = vmatpush1.bf16.msra.mxu0 %v1032
        %1071 = vmatprep.subr.bf16.mxu0 0
        %1072 = vmatpush1.bf16.msra.mxu0 %v1033
        %1073 = vmatprep.subr.bf16.mxu0 0
        %1074 = vmatpush1.bf16.msra.mxu0 %v1034
        %1075 = vmatprep.subr.bf16.mxu0 0
        %1076 = vmatpush1.bf16.msra.mxu0 %v1057
        %1077 = vmatprep.subr.bf16.mxu0 0
        %1078 = vmatpush1.bf16.msra.mxu0 0
        %1079 = vmatprep.subr.bf16.mxu0 0
        %1080 = vmatpush1.bf16.msra.mxu0 0
        %1081 = vmatprep.subr.bf16.mxu0 0
        %1082 = vmatpush1.bf16.msra.mxu0 0
        %1083 = vmatprep.subr.bf16.mxu0 0
        %1084 = vmatpush1.bf16.msra.mxu0 0
        %1085 = vmatprep.subr.bf16.mxu0 0
        %1086 = vmatpush1.bf16.msra.mxu0 0
        %1087 = vmatprep.subr.bf16.mxu0 0
        %1088 = vmatpush1.bf16.msra.mxu0 0
        %1089 = vmatprep.subr.bf16.mxu0 0
        %1090 = vmatpush1.bf16.msra.mxu0 0
        %1091 = vmatprep.mubr.bf16.mxu0 %v1045
        %1092 = vmatmul.mubr.bf16.gmra.mrb[0].mxu0 %v950
        %v1093 = vpop.f32.mrb[0].mxu0
        %v1094 = vadd.f32 0.0, %v1093
        %v1095 = vpop.f32.mrb[0].mxu0
        %v1096 = vpop.f32.mrb[0].mxu0
        %v1097 = vadd.f32 0.0, %v1096
        %v1098 = vpop.f32.mrb[0].mxu0
        %1099 = vmatprep.mubr.bf16.mxu0 %v1048
        %1100 = vmatmul.mubr.bf16.gmra.mrb[0].mxu0 %v966
        %v1101 = vpop.f32.mrb[0].mxu0
        %v1102 = vadd.f32 0.0, %v1101
        %v1103 = vpop.f32.mrb[0].mxu0
        %v1104 = vpop.f32.mrb[0].mxu0
        %v1105 = vadd.f32 0.0, %v1104
        %v1106 = vpop.f32.mrb[0].mxu0
        %1107 = vmatprep.mubr.bf16.mxu0 %v1051
        %1108 = vmatmul.mubr.bf16.gmra.mrb[0].mxu0 %v979
        %v1109 = vpop.f32.mrb[0].mxu0
        %v1110 = vadd.f32 0.0, %v1109
        %v1111 = vpop.f32.mrb[0].mxu0
        %v1112 = vpop.f32.mrb[0].mxu0
        %v1113 = vadd.f32 0.0, %v1112
        %v1114 = vpop.f32.mrb[0].mxu0
        %1115 = vmatprep.mubr.bf16.mxu0 %v1054
        %1116 = vmatmul.mubr.bf16.gmra.mrb[0].mxu0 %v978
        %v1117 = vpop.f32.mrb[0].mxu0
        %v1118 = vadd.f32 0.0, %v1117
        %v1119 = vpop.f32.mrb[0].mxu0
        %v1120 = vpop.f32.mrb[0].mxu0
        %v1121 = vadd.f32 0.0, %v1120
        %v1122 = vpop.f32.mrb[0].mxu0
        %1123 = vdwg.mxu0
        %v1124 = vadd.f32 %v904, %v1094
        %v1125 = vadd.f32 %v905, %v1097
        %v1126 = vadd.f32 %v906, %v1102
        %v1127 = vadd.f32 %v907, %v1105
        %v1128 = vadd.f32 %v908, %v1110
        %v1129 = vadd.f32 %v909, %v1113
        %v1130 = vadd.f32 %v910, %v1118
        %v1131 = vadd.f32 %v911, %v1121
        %v1132 = vld [vmem:[%s291] sm:$0xf0]
        %v1133 = vld [vmem:[%s291 + $0x8] sm:$0xf0]
        %v1134 = vld [vmem:[%s291 + $0x70] sm:$0xff]
        %v1135 = vld [vmem:[%s291 + $0x78] sm:$0xff]
        %v1136 = vpack.c.bf16 %v324, %v1132
        %v1137 = vpack.c.bf16 %v325, %v1133
        %v1138 = vpack.c.bf16 %v1134, %v334
        %v1139 = vpack.c.bf16 %v1135, %v335
        %s1140 = scalar_lea.vmem %s2, 544
        %v1141 = vld [vmem:[%s1140] sm:$0xf]
        %v1142 = vld [vmem:[%s1140 + $0x4] sm:$0xf]
        %v1143 = vld [vmem:[%s1140 + $0x8] sm:$0xf]
        %v1144 = vld [vmem:[%s1140 + $0xc] sm:$0xf]
        %v1145 = vld [vmem:[%s1140 + $0x10] sm:$0xf]
        %v1146 = vld [vmem:[%s1140 + $0x14] sm:$0xf]
        %v1147 = vld [vmem:[%s1140 + $0x18] sm:$0xf]
        %v1148 = vld [vmem:[%s1140 + $0x1c] sm:$0xf]
        %v1149 = vld [vmem:[%s1140 + $0x20] sm:$0xf]
        %v1150 = vld [vmem:[%s1140 + $0x24] sm:$0xf]
        %v1151 = vld [vmem:[%s1140 + $0x28] sm:$0xf]
        %v1152 = vld [vmem:[%s1140 + $0x2c] sm:$0xf]
        %v1153 = vld [vmem:[%s1140 + $0x30] sm:$0xf]
        %v1154 = vld [vmem:[%s1140 + $0x34] sm:$0xf]
        %v1155 = vld [vmem:[%s1140 + $0x38] sm:$0xf]
        %v1156 = vld [vmem:[%s1140 + $0x3c] sm:$0xf]
        %v1157 = vld [vmem:[%s1140 + $0x40] sm:$0x1]
        %vm1162 = vcmask 1045504
        %v1163 = vrot.slane %v1136, 2
        %v1164 = vrot.slane %v340, 2
        %v1165 = vsel %vm1162, %v1163, %v1164
        %v1166 = vrot.slane %v1137, 2
        %v1167 = vrot.slane %v341, 2
        %v1168 = vsel %vm1162, %v1166, %v1167
        %v1169 = vrot.slane %v342, 2
        %v1170 = vsel %vm1162, %v1164, %v1169
        %v1171 = vrot.slane %v343, 2
        %v1172 = vsel %vm1162, %v1167, %v1171
        %v1173 = vrot.slane %v1138, 2
        %v1174 = vsel %vm1162, %v1169, %v1173
        %v1175 = vrot.slane %v1139, 2
        %v1176 = vsel %vm1162, %v1171, %v1175
        %v1198 = vunpack.c.l.b16 %v1141
        %v1199 = vunpack.c.l.b16 %v1142
        %v1200 = vunpack.c.l.b16 %v1143
        %v1201 = vunpack.c.l.b16 %v1144
        %v1202 = vunpack.c.l.b16 %v1145
        %v1203 = vunpack.c.l.b16 %v1146
        %v1204 = vunpack.c.l.b16 %v1147
        %v1205 = vunpack.c.l.b16 %v1148
        %v1206 = vunpack.c.l.b16 %v1149
        %v1207 = vunpack.c.l.b16 %v1150
        %v1208 = vunpack.c.l.b16 %v1151
        %v1209 = vunpack.c.l.b16 %v1152
        %v1210 = vunpack.c.l.b16 %v1153
        %v1211 = vunpack.c.l.b16 %v1154
        %v1212 = vunpack.c.l.b16 %v1155
        %v1213 = vunpack.c.l.b16 %v1156
        %v1214 = vunpack.c.l.b16 %v1157
        %v1215 = vpack.c.b16 %v1199, %v1198
        %v1216 = vpack.c.b16 %v1201, %v1200
        %v1217 = vpack.c.b16 %v1203, %v1202
        %v1218 = vpack.c.b16 %v1205, %v1204
        %v1219 = vpack.c.b16 %v1207, %v1206
        %v1220 = vpack.c.b16 %v1209, %v1208
        %v1221 = vpack.c.b16 %v1211, %v1210
        %v1222 = vpack.c.b16 %v1213, %v1212
        %v1223 = vpack.c.b16 %v1214, %v1214
        %v1233 = vsel %vm507, %v1168, 0
        %v1236 = vsel %vm507, %v1172, 0
        %v1239 = vsel %vm507, %v1176, 0
        %v1242 = vsel %vm507, %v1175, 0
        %v1245 = vand.u32 %v1223, %v522
        %1247 = vmatprep.subr.bf16.mxu0 0
        %1248 = vmatpush1.bf16.msra.mxu0 %v1215
        %1249 = vmatprep.subr.bf16.mxu0 0
        %1250 = vmatpush1.bf16.msra.mxu0 %v1216
        %1251 = vmatprep.subr.bf16.mxu0 0
        %1252 = vmatpush1.bf16.msra.mxu0 %v1217
        %1253 = vmatprep.subr.bf16.mxu0 0
        %1254 = vmatpush1.bf16.msra.mxu0 %v1218
        %1255 = vmatprep.subr.bf16.mxu0 0
        %1256 = vmatpush1.bf16.msra.mxu0 %v1219
        %1257 = vmatprep.subr.bf16.mxu0 0
        %1258 = vmatpush1.bf16.msra.mxu0 %v1220
        %1259 = vmatprep.subr.bf16.mxu0 0
        %1260 = vmatpush1.bf16.msra.mxu0 %v1221
        %1261 = vmatprep.subr.bf16.mxu0 0
        %1262 = vmatpush1.bf16.msra.mxu0 %v1222
        %1263 = vmatprep.subr.bf16.mxu0 0
        %1264 = vmatpush1.bf16.msra.mxu0 %v1245
        %1265 = vmatprep.subr.bf16.mxu0 0
        %1266 = vmatpush1.bf16.msra.mxu0 0
        %1267 = vmatprep.subr.bf16.mxu0 0
        %1268 = vmatpush1.bf16.msra.mxu0 0
        %1269 = vmatprep.subr.bf16.mxu0 0
        %1270 = vmatpush1.bf16.msra.mxu0 0
        %1271 = vmatprep.subr.bf16.mxu0 0
        %1272 = vmatpush1.bf16.msra.mxu0 0
        %1273 = vmatprep.subr.bf16.mxu0 0
        %1274 = vmatpush1.bf16.msra.mxu0 0
        %1275 = vmatprep.subr.bf16.mxu0 0
        %1276 = vmatpush1.bf16.msra.mxu0 0
        %1277 = vmatprep.subr.bf16.mxu0 0
        %1278 = vmatpush1.bf16.msra.mxu0 0
        %1279 = vmatprep.mubr.bf16.mxu0 %v1233
        %1280 = vmatmul.mubr.bf16.gmra.mrb[0].mxu0 %v1165
        %v1281 = vpop.f32.mrb[0].mxu0
        %v1282 = vadd.f32 0.0, %v1281
        %v1283 = vpop.f32.mrb[0].mxu0
        %v1284 = vpop.f32.mrb[0].mxu0
        %v1285 = vadd.f32 0.0, %v1284
        %v1286 = vpop.f32.mrb[0].mxu0
        %1287 = vmatprep.mubr.bf16.mxu0 %v1236
        %1288 = vmatmul.mubr.bf16.gmra.mrb[0].mxu0 %v1170
        %v1289 = vpop.f32.mrb[0].mxu0
        %v1290 = vadd.f32 0.0, %v1289
        %v1291 = vpop.f32.mrb[0].mxu0
        %v1292 = vpop.f32.mrb[0].mxu0
        %v1293 = vadd.f32 0.0, %v1292
        %v1294 = vpop.f32.mrb[0].mxu0
        %1295 = vmatprep.mubr.bf16.mxu0 %v1239
        %1296 = vmatmul.mubr.bf16.gmra.mrb[0].mxu0 %v1174
        %v1297 = vpop.f32.mrb[0].mxu0
        %v1298 = vadd.f32 0.0, %v1297
        %v1299 = vpop.f32.mrb[0].mxu0
        %v1300 = vpop.f32.mrb[0].mxu0
        %v1301 = vadd.f32 0.0, %v1300
        %v1302 = vpop.f32.mrb[0].mxu0
        %1303 = vmatprep.mubr.bf16.mxu0 %v1242
        %1304 = vmatmul.mubr.bf16.gmra.mrb[0].mxu0 %v1173
        %v1305 = vpop.f32.mrb[0].mxu0
        %v1306 = vadd.f32 0.0, %v1305
        %v1307 = vpop.f32.mrb[0].mxu0
        %v1308 = vpop.f32.mrb[0].mxu0
        %v1309 = vadd.f32 0.0, %v1308
        %v1310 = vpop.f32.mrb[0].mxu0
        %1311 = vdwg.mxu0
        %v1312 = vadd.f32 %v1124, %v1282
        %v1313 = vadd.f32 %v1125, %v1285
        %v1314 = vadd.f32 %v1126, %v1290
        %v1315 = vadd.f32 %v1127, %v1293
        %v1316 = vadd.f32 %v1128, %v1298
        %v1317 = vadd.f32 %v1129, %v1301
        %v1318 = vadd.f32 %v1130, %v1306
        %v1319 = vadd.f32 %v1131, %v1309
        %v1320 = vld [vmem:[%s291] sm:$0xe0]
        %v1321 = vld [vmem:[%s291 + $0x8] sm:$0xe0]
        %v1322 = vld [vmem:[%s291 + $0x10] sm:$0xff]
        %v1323 = vld [vmem:[%s291 + $0x18] sm:$0xff]
        %v1324 = vld [vmem:[%s291 + $0x20] sm:$0xff]
        %v1325 = vld [vmem:[%s291 + $0x28] sm:$0xff]
        %v1326 = vld [vmem:[%s291 + $0x30] sm:$0xff]
        %v1327 = vld [vmem:[%s291 + $0x38] sm:$0xff]
        %v1328 = vld [vmem:[%s291 + $0x40] sm:$0xff]
        %v1329 = vld [vmem:[%s291 + $0x48] sm:$0xff]
        %v1330 = vld [vmem:[%s291 + $0x50] sm:$0xff]
        %v1331 = vld [vmem:[%s291 + $0x58] sm:$0xff]
        %v1332 = vld [vmem:[%s291 + $0x60] sm:$0xff]
        %v1333 = vld [vmem:[%s291 + $0x68] sm:$0xff]
        %v1334 = vld [vmem:[%s291 + $0x70] sm:$0xff]
        %v1335 = vld [vmem:[%s291 + $0x78] sm:$0xff]
        %v1336 = vld [vmem:[%s291 + $0x80] sm:$0x1]
        %v1337 = vld [vmem:[%s291 + $0x88] sm:$0x1]
        %v1338 = vpack.c.bf16 %v1322, %v1320
        %v1339 = vpack.c.bf16 %v1323, %v1321
        %v1340 = vpack.c.bf16 %v1326, %v1324
        %v1341 = vpack.c.bf16 %v1327, %v1325
        %v1342 = vpack.c.bf16 %v1330, %v1328
        %v1343 = vpack.c.bf16 %v1331, %v1329
        %v1344 = vpack.c.bf16 %v1334, %v1332
        %v1345 = vpack.c.bf16 %v1335, %v1333
        %v1346 = vpack.c.bf16 %v1336, %v1336
        %v1347 = vpack.c.bf16 %v1337, %v1337
        %s1348 = scalar_lea.vmem %s2, 680
        %v1349 = vld [vmem:[%s1348] sm:$0xf]
        %v1350 = vld [vmem:[%s1348 + $0x4] sm:$0xf]
        %v1351 = vld [vmem:[%s1348 + $0x8] sm:$0xf]
        %v1352 = vld [vmem:[%s1348 + $0xc] sm:$0xf]
        %v1353 = vld [vmem:[%s1348 + $0x10] sm:$0xf]
        %v1354 = vld [vmem:[%s1348 + $0x14] sm:$0xf]
        %v1355 = vld [vmem:[%s1348 + $0x18] sm:$0xf]
        %v1356 = vld [vmem:[%s1348 + $0x1c] sm:$0xf]
        %v1357 = vld [vmem:[%s1348 + $0x20] sm:$0xf]
        %v1358 = vld [vmem:[%s1348 + $0x24] sm:$0xf]
        %v1359 = vld [vmem:[%s1348 + $0x28] sm:$0xf]
        %v1360 = vld [vmem:[%s1348 + $0x2c] sm:$0xf]
        %v1361 = vld [vmem:[%s1348 + $0x30] sm:$0xf]
        %v1362 = vld [vmem:[%s1348 + $0x34] sm:$0xf]
        %v1363 = vld [vmem:[%s1348 + $0x38] sm:$0xf]
        %v1364 = vld [vmem:[%s1348 + $0x3c] sm:$0xf]
        %v1365 = vld [vmem:[%s1348 + $0x40] sm:$0x1]
        %vm1366 = vsmask.f32 5376
        %v1368 = vshrl.u32 %v1338, 16
        %v1370 = vrot.slane %v1368, 2
        %v1371 = vshll.u32 %v1338, 16
        %v1373 = vrot.slane %v1371, 3
        %v1374 = vor.u32 %v1370, %v1373
        %v1376 = vshrl.u32 %v1340, 16
        %v1378 = vrot.slane %v1376, 2
        %v1379 = vshll.u32 %v1340, 16
        %v1381 = vrot.slane %v1379, 3
        %v1382 = vor.u32 %v1378, %v1381
        %v1383 = vsel %vm1366, %v1374, %v1382
        %v1385 = vshrl.u32 %v1339, 16
        %v1387 = vrot.slane %v1385, 2
        %v1388 = vshll.u32 %v1339, 16
        %v1390 = vrot.slane %v1388, 3
        %v1391 = vor.u32 %v1387, %v1390
        %v1393 = vshrl.u32 %v1341, 16
        %v1395 = vrot.slane %v1393, 2
        %v1396 = vshll.u32 %v1341, 16
        %v1398 = vrot.slane %v1396, 3
        %v1399 = vor.u32 %v1395, %v1398
        %v1400 = vsel %vm1366, %v1391, %v1399
        %v1402 = vshrl.u32 %v1342, 16
        %v1404 = vrot.slane %v1402, 2
        %v1405 = vshll.u32 %v1342, 16
        %v1407 = vrot.slane %v1405, 3
        %v1408 = vor.u32 %v1404, %v1407
        %v1409 = vsel %vm1366, %v1382, %v1408
        %v1411 = vshrl.u32 %v1343, 16
        %v1413 = vrot.slane %v1411, 2
        %v1414 = vshll.u32 %v1343, 16
        %v1416 = vrot.slane %v1414, 3
        %v1417 = vor.u32 %v1413, %v1416
        %v1418 = vsel %vm1366, %v1399, %v1417
        %v1420 = vshrl.u32 %v1344, 16
        %v1422 = vrot.slane %v1420, 2
        %v1423 = vshll.u32 %v1344, 16
        %v1425 = vrot.slane %v1423, 3
        %v1426 = vor.u32 %v1422, %v1425
        %v1427 = vsel %vm1366, %v1408, %v1426
        %v1429 = vshrl.u32 %v1345, 16
        %v1431 = vrot.slane %v1429, 2
        %v1432 = vshll.u32 %v1345, 16
        %v1434 = vrot.slane %v1432, 3
        %v1435 = vor.u32 %v1431, %v1434
        %v1436 = vsel %vm1366, %v1417, %v1435
        %v1438 = vshll.u32 %v1346, 16
        %v1440 = vrot.slane %v1438, 3
        %v1441 = vsel %vm1366, %v1426, %v1440
        %v1443 = vshll.u32 %v1347, 16
        %v1445 = vrot.slane %v1443, 3
        %v1446 = vsel %vm1366, %v1435, %v1445
        %v1468 = vunpack.c.l.b16 %v1349
        %v1469 = vunpack.c.l.b16 %v1350
        %v1470 = vunpack.c.l.b16 %v1351
        %v1471 = vunpack.c.l.b16 %v1352
        %v1472 = vunpack.c.l.b16 %v1353
        %v1473 = vunpack.c.l.b16 %v1354
        %v1474 = vunpack.c.l.b16 %v1355
        %v1475 = vunpack.c.l.b16 %v1356
        %v1476 = vunpack.c.l.b16 %v1357
        %v1477 = vunpack.c.l.b16 %v1358
        %v1478 = vunpack.c.l.b16 %v1359
        %v1479 = vunpack.c.l.b16 %v1360
        %v1480 = vunpack.c.l.b16 %v1361
        %v1481 = vunpack.c.l.b16 %v1362
        %v1482 = vunpack.c.l.b16 %v1363
        %v1483 = vunpack.c.l.b16 %v1364
        %v1484 = vunpack.c.l.b16 %v1365
        %v1485 = vpack.c.b16 %v1469, %v1468
        %v1486 = vpack.c.b16 %v1471, %v1470
        %v1487 = vpack.c.b16 %v1473, %v1472
        %v1488 = vpack.c.b16 %v1475, %v1474
        %v1489 = vpack.c.b16 %v1477, %v1476
        %v1490 = vpack.c.b16 %v1479, %v1478
        %v1491 = vpack.c.b16 %v1481, %v1480
        %v1492 = vpack.c.b16 %v1483, %v1482
        %v1493 = vpack.c.b16 %v1484, %v1484
        %v1503 = vsel %vm507, %v1400, 0
        %v1506 = vsel %vm507, %v1418, 0
        %v1509 = vsel %vm507, %v1436, 0
        %v1512 = vsel %vm507, %v1446, 0
        %v1515 = vand.u32 %v1493, %v522
        %1517 = vmatprep.subr.bf16.mxu0 0
        %1518 = vmatpush1.bf16.msra.mxu0 %v1485
        %1519 = vmatprep.subr.bf16.mxu0 0
        %1520 = vmatpush1.bf16.msra.mxu0 %v1486
        %1521 = vmatprep.subr.bf16.mxu0 0
        %1522 = vmatpush1.bf16.msra.mxu0 %v1487
        %1523 = vmatprep.subr.bf16.mxu0 0
        %1524 = vmatpush1.bf16.msra.mxu0 %v1488
        %1525 = vmatprep.subr.bf16.mxu0 0
        %1526 = vmatpush1.bf16.msra.mxu0 %v1489
        %1527 = vmatprep.subr.bf16.mxu0 0
        %1528 = vmatpush1.bf16.msra.mxu0 %v1490
        %1529 = vmatprep.subr.bf16.mxu0 0
        %1530 = vmatpush1.bf16.msra.mxu0 %v1491
        %1531 = vmatprep.subr.bf16.mxu0 0
        %1532 = vmatpush1.bf16.msra.mxu0 %v1492
        %1533 = vmatprep.subr.bf16.mxu0 0
        %1534 = vmatpush1.bf16.msra.mxu0 %v1515
        %1535 = vmatprep.subr.bf16.mxu0 0
        %1536 = vmatpush1.bf16.msra.mxu0 0
        %1537 = vmatprep.subr.bf16.mxu0 0
        %1538 = vmatpush1.bf16.msra.mxu0 0
        %1539 = vmatprep.subr.bf16.mxu0 0
        %1540 = vmatpush1.bf16.msra.mxu0 0
        %1541 = vmatprep.subr.bf16.mxu0 0
        %1542 = vmatpush1.bf16.msra.mxu0 0
        %1543 = vmatprep.subr.bf16.mxu0 0
        %1544 = vmatpush1.bf16.msra.mxu0 0
        %1545 = vmatprep.subr.bf16.mxu0 0
        %1546 = vmatpush1.bf16.msra.mxu0 0
        %1547 = vmatprep.subr.bf16.mxu0 0
        %1548 = vmatpush1.bf16.msra.mxu0 0
        %1549 = vmatprep.mubr.bf16.mxu0 %v1503
        %1550 = vmatmul.mubr.bf16.gmra.mrb[0].mxu0 %v1383
        %v1551 = vpop.f32.mrb[0].mxu0
        %v1552 = vadd.f32 0.0, %v1551
        %v1553 = vpop.f32.mrb[0].mxu0
        %v1554 = vpop.f32.mrb[0].mxu0
        %v1555 = vadd.f32 0.0, %v1554
        %v1556 = vpop.f32.mrb[0].mxu0
        %1557 = vmatprep.mubr.bf16.mxu0 %v1506
        %1558 = vmatmul.mubr.bf16.gmra.mrb[0].mxu0 %v1409
        %v1559 = vpop.f32.mrb[0].mxu0
        %v1560 = vadd.f32 0.0, %v1559
        %v1561 = vpop.f32.mrb[0].mxu0
        %v1562 = vpop.f32.mrb[0].mxu0
        %v1563 = vadd.f32 0.0, %v1562
        %v1564 = vpop.f32.mrb[0].mxu0
        %1565 = vmatprep.mubr.bf16.mxu0 %v1509
        %1566 = vmatmul.mubr.bf16.gmra.mrb[0].mxu0 %v1427
        %v1567 = vpop.f32.mrb[0].mxu0
        %v1568 = vadd.f32 0.0, %v1567
        %v1569 = vpop.f32.mrb[0].mxu0
        %v1570 = vpop.f32.mrb[0].mxu0
        %v1571 = vadd.f32 0.0, %v1570
        %v1572 = vpop.f32.mrb[0].mxu0
        %1573 = vmatprep.mubr.bf16.mxu0 %v1512
        %1574 = vmatmul.mubr.bf16.gmra.mrb[0].mxu0 %v1441
        %v1575 = vpop.f32.mrb[0].mxu0
        %v1576 = vadd.f32 0.0, %v1575
        %v1577 = vpop.f32.mrb[0].mxu0
        %v1578 = vpop.f32.mrb[0].mxu0
        %v1579 = vadd.f32 0.0, %v1578
        %v1580 = vpop.f32.mrb[0].mxu0
        %1581 = vdwg.mxu0
        %v1582 = vadd.f32 %v1312, %v1552
        %v1583 = vadd.f32 %v1313, %v1555
        %v1584 = vadd.f32 %v1314, %v1560
        %v1585 = vadd.f32 %v1315, %v1563
        %v1586 = vadd.f32 %v1316, %v1568
        %v1587 = vadd.f32 %v1317, %v1571
        %v1588 = vadd.f32 %v1318, %v1576
        %v1589 = vadd.f32 %v1319, %v1579
        %v1590 = vld [vmem:[%s296] sm:$0xff]
        %v1591 = vld [vmem:[%s296 + $0x8] sm:$0xff]
        %v1592 = vld [vmem:[%s296 + $0x10] sm:$0xff]
        %v1593 = vld [vmem:[%s296 + $0x18] sm:$0xff]
        %v1594 = vld [vmem:[%s296 + $0x20] sm:$0xff]
        %v1595 = vld [vmem:[%s296 + $0x28] sm:$0xff]
        %v1596 = vld [vmem:[%s296 + $0x30] sm:$0xff]
        %v1597 = vld [vmem:[%s296 + $0x38] sm:$0xff]
        %v1598 = vld [vmem:[%s296 + $0x40] sm:$0xff]
        %v1599 = vld [vmem:[%s296 + $0x48] sm:$0xff]
        %v1600 = vld [vmem:[%s296 + $0x50] sm:$0xff]
        %v1601 = vld [vmem:[%s296 + $0x58] sm:$0xff]
        %v1602 = vld [vmem:[%s296 + $0x60] sm:$0xff]
        %v1603 = vld [vmem:[%s296 + $0x68] sm:$0xff]
        %v1604 = vld [vmem:[%s296 + $0x70] sm:$0xf]
        %v1605 = vld [vmem:[%s296 + $0x78] sm:$0xf]
        %v1606 = vpack.c.bf16 %v1592, %v1590
        %v1607 = vpack.c.bf16 %v1593, %v1591
        %v1608 = vpack.c.bf16 %v1596, %v1594
        %v1609 = vpack.c.bf16 %v1597, %v1595
        %v1610 = vpack.c.bf16 %v1600, %v1598
        %v1611 = vpack.c.bf16 %v1601, %v1599
        %v1612 = vpack.c.bf16 %v1604, %v1602
        %v1613 = vpack.c.bf16 %v1605, %v1603
        %s1614 = scalar_lea.vmem %s2, 68
        %v1615 = vld [vmem:[%s1614] sm:$0xf]
        %v1616 = vld [vmem:[%s1614 + $0x4] sm:$0xf]
        %v1617 = vld [vmem:[%s1614 + $0x8] sm:$0xf]
        %v1618 = vld [vmem:[%s1614 + $0xc] sm:$0xf]
        %v1619 = vld [vmem:[%s1614 + $0x10] sm:$0xf]
        %v1620 = vld [vmem:[%s1614 + $0x14] sm:$0xf]
        %v1621 = vld [vmem:[%s1614 + $0x18] sm:$0xf]
        %v1622 = vld [vmem:[%s1614 + $0x1c] sm:$0xf]
        %v1623 = vld [vmem:[%s1614 + $0x20] sm:$0xf]
        %v1624 = vld [vmem:[%s1614 + $0x24] sm:$0xf]
        %v1625 = vld [vmem:[%s1614 + $0x28] sm:$0xf]
        %v1626 = vld [vmem:[%s1614 + $0x2c] sm:$0xf]
        %v1627 = vld [vmem:[%s1614 + $0x30] sm:$0xf]
        %v1628 = vld [vmem:[%s1614 + $0x34] sm:$0xf]
        %v1629 = vld [vmem:[%s1614 + $0x38] sm:$0xf]
        %v1630 = vld [vmem:[%s1614 + $0x3c] sm:$0xf]
        %v1631 = vld [vmem:[%s1614 + $0x40] sm:$0x1]
        %v1649 = vunpack.c.l.b16 %v1615
        %v1650 = vunpack.c.l.b16 %v1616
        %v1651 = vunpack.c.l.b16 %v1617
        %v1652 = vunpack.c.l.b16 %v1618
        %v1653 = vunpack.c.l.b16 %v1619
        %v1654 = vunpack.c.l.b16 %v1620
        %v1655 = vunpack.c.l.b16 %v1621
        %v1656 = vunpack.c.l.b16 %v1622
        %v1657 = vunpack.c.l.b16 %v1623
        %v1658 = vunpack.c.l.b16 %v1624
        %v1659 = vunpack.c.l.b16 %v1625
        %v1660 = vunpack.c.l.b16 %v1626
        %v1661 = vunpack.c.l.b16 %v1627
        %v1662 = vunpack.c.l.b16 %v1628
        %v1663 = vunpack.c.l.b16 %v1629
        %v1664 = vunpack.c.l.b16 %v1630
        %v1665 = vunpack.c.l.b16 %v1631
        %v1666 = vpack.c.b16 %v1650, %v1649
        %v1667 = vpack.c.b16 %v1652, %v1651
        %v1668 = vpack.c.b16 %v1654, %v1653
        %v1669 = vpack.c.b16 %v1656, %v1655
        %v1670 = vpack.c.b16 %v1658, %v1657
        %v1671 = vpack.c.b16 %v1660, %v1659
        %v1672 = vpack.c.b16 %v1662, %v1661
        %v1673 = vpack.c.b16 %v1664, %v1663
        %v1674 = vpack.c.b16 %v1665, %v1665
        %v1684 = vsel %vm507, %v1607, 0
        %v1687 = vsel %vm507, %v1609, 0
        %v1690 = vsel %vm507, %v1611, 0
        %v1693 = vsel %vm507, %v1613, 0
        %v1696 = vand.u32 %v1674, %v522
        %1698 = vmatprep.subr.bf16.mxu0 0
        %1699 = vmatpush1.bf16.msra.mxu0 %v1666
        %1700 = vmatprep.subr.bf16.mxu0 0
        %1701 = vmatpush1.bf16.msra.mxu0 %v1667
        %1702 = vmatprep.subr.bf16.mxu0 0
        %1703 = vmatpush1.bf16.msra.mxu0 %v1668
        %1704 = vmatprep.subr.bf16.mxu0 0
        %1705 = vmatpush1.bf16.msra.mxu0 %v1669
        %1706 = vmatprep.subr.bf16.mxu0 0
        %1707 = vmatpush1.bf16.msra.mxu0 %v1670
        %1708 = vmatprep.subr.bf16.mxu0 0
        %1709 = vmatpush1.bf16.msra.mxu0 %v1671
        %1710 = vmatprep.subr.bf16.mxu0 0
        %1711 = vmatpush1.bf16.msra.mxu0 %v1672
        %1712 = vmatprep.subr.bf16.mxu0 0
        %1713 = vmatpush1.bf16.msra.mxu0 %v1673
        %1714 = vmatprep.subr.bf16.mxu0 0
        %1715 = vmatpush1.bf16.msra.mxu0 %v1696
        %1716 = vmatprep.subr.bf16.mxu0 0
        %1717 = vmatpush1.bf16.msra.mxu0 0
        %1718 = vmatprep.subr.bf16.mxu0 0
        %1719 = vmatpush1.bf16.msra.mxu0 0
        %1720 = vmatprep.subr.bf16.mxu0 0
        %1721 = vmatpush1.bf16.msra.mxu0 0
        %1722 = vmatprep.subr.bf16.mxu0 0
        %1723 = vmatpush1.bf16.msra.mxu0 0
        %1724 = vmatprep.subr.bf16.mxu0 0
        %1725 = vmatpush1.bf16.msra.mxu0 0
        %1726 = vmatprep.subr.bf16.mxu0 0
        %1727 = vmatpush1.bf16.msra.mxu0 0
        %1728 = vmatprep.subr.bf16.mxu0 0
        %1729 = vmatpush1.bf16.msra.mxu0 0
        %1730 = vmatprep.mubr.bf16.mxu0 %v1684
        %1731 = vmatmul.mubr.bf16.gmra.mrb[0].mxu0 %v1606
        %v1732 = vpop.f32.mrb[0].mxu0
        %v1733 = vadd.f32 0.0, %v1732
        %v1734 = vpop.f32.mrb[0].mxu0
        %v1735 = vpop.f32.mrb[0].mxu0
        %v1736 = vadd.f32 0.0, %v1735
        %v1737 = vpop.f32.mrb[0].mxu0
        %1738 = vmatprep.mubr.bf16.mxu0 %v1687
        %1739 = vmatmul.mubr.bf16.gmra.mrb[0].mxu0 %v1608
        %v1740 = vpop.f32.mrb[0].mxu0
        %v1741 = vadd.f32 0.0, %v1740
        %v1742 = vpop.f32.mrb[0].mxu0
        %v1743 = vpop.f32.mrb[0].mxu0
        %v1744 = vadd.f32 0.0, %v1743
        %v1745 = vpop.f32.mrb[0].mxu0
        %1746 = vmatprep.mubr.bf16.mxu0 %v1690
        %1747 = vmatmul.mubr.bf16.gmra.mrb[0].mxu0 %v1610
        %v1748 = vpop.f32.mrb[0].mxu0
        %v1749 = vadd.f32 0.0, %v1748
        %v1750 = vpop.f32.mrb[0].mxu0
        %v1751 = vpop.f32.mrb[0].mxu0
        %v1752 = vadd.f32 0.0, %v1751
        %v1753 = vpop.f32.mrb[0].mxu0
        %1754 = vmatprep.mubr.bf16.mxu0 %v1693
        %1755 = vmatmul.mubr.bf16.gmra.mrb[0].mxu0 %v1612
        %v1756 = vpop.f32.mrb[0].mxu0
        %v1757 = vadd.f32 0.0, %v1756
        %v1758 = vpop.f32.mrb[0].mxu0
        %v1759 = vpop.f32.mrb[0].mxu0
        %v1760 = vadd.f32 0.0, %v1759
        %v1761 = vpop.f32.mrb[0].mxu0
        %1762 = vdwg.mxu0
        %v1763 = vadd.f32 %v1582, %v1733
        %v1764 = vadd.f32 %v1583, %v1736
        %v1765 = vadd.f32 %v1584, %v1741
        %v1766 = vadd.f32 %v1585, %v1744
        %v1767 = vadd.f32 %v1586, %v1749
        %v1768 = vadd.f32 %v1587, %v1752
        %v1769 = vadd.f32 %v1588, %v1757
        %v1770 = vadd.f32 %v1589, %v1760
        %v1771 = vld [vmem:[%s296] sm:$0xfe]
        %v1772 = vld [vmem:[%s296 + $0x8] sm:$0xfe]
        %v1773 = vld [vmem:[%s296 + $0x70] sm:$0x1f]
        %v1774 = vld [vmem:[%s296 + $0x78] sm:$0x1f]
        %v1775 = vpack.c.bf16 %v1592, %v1771
        %v1776 = vpack.c.bf16 %v1593, %v1772
        %v1777 = vpack.c.bf16 %v1773, %v1602
        %v1778 = vpack.c.bf16 %v1774, %v1603
        %s1779 = scalar_lea.vmem %s2, 204
        %v1780 = vld [vmem:[%s1779] sm:$0xf]
        %v1781 = vld [vmem:[%s1779 + $0x4] sm:$0xf]
        %v1782 = vld [vmem:[%s1779 + $0x8] sm:$0xf]
        %v1783 = vld [vmem:[%s1779 + $0xc] sm:$0xf]
        %v1784 = vld [vmem:[%s1779 + $0x10] sm:$0xf]
        %v1785 = vld [vmem:[%s1779 + $0x14] sm:$0xf]
        %v1786 = vld [vmem:[%s1779 + $0x18] sm:$0xf]
        %v1787 = vld [vmem:[%s1779 + $0x1c] sm:$0xf]
        %v1788 = vld [vmem:[%s1779 + $0x20] sm:$0xf]
        %v1789 = vld [vmem:[%s1779 + $0x24] sm:$0xf]
        %v1790 = vld [vmem:[%s1779 + $0x28] sm:$0xf]
        %v1791 = vld [vmem:[%s1779 + $0x2c] sm:$0xf]
        %v1792 = vld [vmem:[%s1779 + $0x30] sm:$0xf]
        %v1793 = vld [vmem:[%s1779 + $0x34] sm:$0xf]
        %v1794 = vld [vmem:[%s1779 + $0x38] sm:$0xf]
        %v1795 = vld [vmem:[%s1779 + $0x3c] sm:$0xf]
        %v1796 = vld [vmem:[%s1779 + $0x40] sm:$0x1]
        %v1798 = vshrl.u32 %v1775, 16
        %v1800 = vshll.u32 %v1775, 16
        %v1802 = vrot.slane %v1800, 1
        %v1803 = vor.u32 %v1798, %v1802
        %v1805 = vshll.u32 %v1608, 16
        %v1807 = vrot.slane %v1805, 1
        %v1808 = vsel %vm389, %v1803, %v1807
        %v1810 = vshrl.u32 %v1776, 16
        %v1812 = vshll.u32 %v1776, 16
        %v1814 = vrot.slane %v1812, 1
        %v1815 = vor.u32 %v1810, %v1814
        %v1816 = vshll.u32 %v1609, 16
        %v1818 = vrot.slane %v1816, 1
        %v1819 = vsel %vm389, %v1815, %v1818
        %v1820 = vshrl.u32 %v1608, 16
        %v1822 = vor.u32 %v1820, %v1807
        %v1824 = vshll.u32 %v1610, 16
        %v1826 = vrot.slane %v1824, 1
        %v1827 = vsel %vm389, %v1822, %v1826
        %v1828 = vshrl.u32 %v1609, 16
        %v1830 = vor.u32 %v1828, %v1818
        %v1831 = vshll.u32 %v1611, 16
        %v1833 = vrot.slane %v1831, 1
        %v1834 = vsel %vm389, %v1830, %v1833
        %v1835 = vshrl.u32 %v1610, 16
        %v1837 = vor.u32 %v1835, %v1826
        %v1839 = vshll.u32 %v1777, 16
        %v1841 = vrot.slane %v1839, 1
        %v1842 = vsel %vm389, %v1837, %v1841
        %v1843 = vshrl.u32 %v1611, 16
        %v1845 = vor.u32 %v1843, %v1833
        %v1847 = vshll.u32 %v1778, 16
        %v1849 = vrot.slane %v1847, 1
        %v1850 = vsel %vm389, %v1845, %v1849
        %v1851 = vshrl.u32 %v1777, 16
        %v1853 = vor.u32 %v1851, %v1841
        %v1854 = vshrl.u32 %v1778, 16
        %v1856 = vor.u32 %v1854, %v1849
        %v1878 = vunpack.c.l.b16 %v1780
        %v1879 = vunpack.c.l.b16 %v1781
        %v1880 = vunpack.c.l.b16 %v1782
        %v1881 = vunpack.c.l.b16 %v1783
        %v1882 = vunpack.c.l.b16 %v1784
        %v1883 = vunpack.c.l.b16 %v1785
        %v1884 = vunpack.c.l.b16 %v1786
        %v1885 = vunpack.c.l.b16 %v1787
        %v1886 = vunpack.c.l.b16 %v1788
        %v1887 = vunpack.c.l.b16 %v1789
        %v1888 = vunpack.c.l.b16 %v1790
        %v1889 = vunpack.c.l.b16 %v1791
        %v1890 = vunpack.c.l.b16 %v1792
        %v1891 = vunpack.c.l.b16 %v1793
        %v1892 = vunpack.c.l.b16 %v1794
        %v1893 = vunpack.c.l.b16 %v1795
        %v1894 = vunpack.c.l.b16 %v1796
        %v1895 = vpack.c.b16 %v1879, %v1878
        %v1896 = vpack.c.b16 %v1881, %v1880
        %v1897 = vpack.c.b16 %v1883, %v1882
        %v1898 = vpack.c.b16 %v1885, %v1884
        %v1899 = vpack.c.b16 %v1887, %v1886
        %v1900 = vpack.c.b16 %v1889, %v1888
        %v1901 = vpack.c.b16 %v1891, %v1890
        %v1902 = vpack.c.b16 %v1893, %v1892
        %v1903 = vpack.c.b16 %v1894, %v1894
        %v1913 = vsel %vm507, %v1819, 0
        %v1916 = vsel %vm507, %v1834, 0
        %v1919 = vsel %vm507, %v1850, 0
        %v1922 = vsel %vm507, %v1856, 0
        %v1925 = vand.u32 %v1903, %v522
        %1927 = vmatprep.subr.bf16.mxu0 0
        %1928 = vmatpush1.bf16.msra.mxu0 %v1895
        %1929 = vmatprep.subr.bf16.mxu0 0
        %1930 = vmatpush1.bf16.msra.mxu0 %v1896
        %1931 = vmatprep.subr.bf16.mxu0 0
        %1932 = vmatpush1.bf16.msra.mxu0 %v1897
        %1933 = vmatprep.subr.bf16.mxu0 0
        %1934 = vmatpush1.bf16.msra.mxu0 %v1898
        %1935 = vmatprep.subr.bf16.mxu0 0
        %1936 = vmatpush1.bf16.msra.mxu0 %v1899
        %1937 = vmatprep.subr.bf16.mxu0 0
        %1938 = vmatpush1.bf16.msra.mxu0 %v1900
        %1939 = vmatprep.subr.bf16.mxu0 0
        %1940 = vmatpush1.bf16.msra.mxu0 %v1901
        %1941 = vmatprep.subr.bf16.mxu0 0
        %1942 = vmatpush1.bf16.msra.mxu0 %v1902
        %1943 = vmatprep.subr.bf16.mxu0 0
        %1944 = vmatpush1.bf16.msra.mxu0 %v1925
        %1945 = vmatprep.subr.bf16.mxu0 0
        %1946 = vmatpush1.bf16.msra.mxu0 0
        %1947 = vmatprep.subr.bf16.mxu0 0
        %1948 = vmatpush1.bf16.msra.mxu0 0
        %1949 = vmatprep.subr.bf16.mxu0 0
        %1950 = vmatpush1.bf16.msra.mxu0 0
        %1951 = vmatprep.subr.bf16.mxu0 0
        %1952 = vmatpush1.bf16.msra.mxu0 0
        %1953 = vmatprep.subr.bf16.mxu0 0
        %1954 = vmatpush1.bf16.msra.mxu0 0
        %1955 = vmatprep.subr.bf16.mxu0 0
        %1956 = vmatpush1.bf16.msra.mxu0 0
        %1957 = vmatprep.subr.bf16.mxu0 0
        %1958 = vmatpush1.bf16.msra.mxu0 0
        %1959 = vmatprep.mubr.bf16.mxu0 %v1913
        %1960 = vmatmul.mubr.bf16.gmra.mrb[0].mxu0 %v1808
        %v1961 = vpop.f32.mrb[0].mxu0
        %v1962 = vadd.f32 0.0, %v1961
        %v1963 = vpop.f32.mrb[0].mxu0
        %v1964 = vpop.f32.mrb[0].mxu0
        %v1965 = vadd.f32 0.0, %v1964
        %v1966 = vpop.f32.mrb[0].mxu0
        %1967 = vmatprep.mubr.bf16.mxu0 %v1916
        %1968 = vmatmul.mubr.bf16.gmra.mrb[0].mxu0 %v1827
        %v1969 = vpop.f32.mrb[0].mxu0
        %v1970 = vadd.f32 0.0, %v1969
        %v1971 = vpop.f32.mrb[0].mxu0
        %v1972 = vpop.f32.mrb[0].mxu0
        %v1973 = vadd.f32 0.0, %v1972
        %v1974 = vpop.f32.mrb[0].mxu0
        %1975 = vmatprep.mubr.bf16.mxu0 %v1919
        %1976 = vmatmul.mubr.bf16.gmra.mrb[0].mxu0 %v1842
        %v1977 = vpop.f32.mrb[0].mxu0
        %v1978 = vadd.f32 0.0, %v1977
        %v1979 = vpop.f32.mrb[0].mxu0
        %v1980 = vpop.f32.mrb[0].mxu0
        %v1981 = vadd.f32 0.0, %v1980
        %v1982 = vpop.f32.mrb[0].mxu0
        %1983 = vmatprep.mubr.bf16.mxu0 %v1922
        %1984 = vmatmul.mubr.bf16.gmra.mrb[0].mxu0 %v1853
        %v1985 = vpop.f32.mrb[0].mxu0
        %v1986 = vadd.f32 0.0, %v1985
        %v1987 = vpop.f32.mrb[0].mxu0
        %v1988 = vpop.f32.mrb[0].mxu0
        %v1989 = vadd.f32 0.0, %v1988
        %v1990 = vpop.f32.mrb[0].mxu0
        %1991 = vdwg.mxu0
        %v1992 = vadd.f32 %v1763, %v1962
        %v1993 = vadd.f32 %v1764, %v1965
        %v1994 = vadd.f32 %v1765, %v1970
        %v1995 = vadd.f32 %v1766, %v1973
        %v1996 = vadd.f32 %v1767, %v1978
        %v1997 = vadd.f32 %v1768, %v1981
        %v1998 = vadd.f32 %v1769, %v1986
        %v1999 = vadd.f32 %v1770, %v1989
        %v2000 = vld [vmem:[%s296] sm:$0xfc]
        %v2001 = vld [vmem:[%s296 + $0x8] sm:$0xfc]
        %v2002 = vld [vmem:[%s296 + $0x70] sm:$0x3f]
        %v2003 = vld [vmem:[%s296 + $0x78] sm:$0x3f]
        %v2004 = vpack.c.bf16 %v1592, %v2000
        %v2005 = vpack.c.bf16 %v1593, %v2001
        %v2006 = vpack.c.bf16 %v2002, %v1602
        %v2007 = vpack.c.bf16 %v2003, %v1603
        %s2008 = scalar_lea.vmem %s2, 340
        %v2009 = vld [vmem:[%s2008] sm:$0xf]
        %v2010 = vld [vmem:[%s2008 + $0x4] sm:$0xf]
        %v2011 = vld [vmem:[%s2008 + $0x8] sm:$0xf]
        %v2012 = vld [vmem:[%s2008 + $0xc] sm:$0xf]
        %v2013 = vld [vmem:[%s2008 + $0x10] sm:$0xf]
        %v2014 = vld [vmem:[%s2008 + $0x14] sm:$0xf]
        %v2015 = vld [vmem:[%s2008 + $0x18] sm:$0xf]
        %v2016 = vld [vmem:[%s2008 + $0x1c] sm:$0xf]
        %v2017 = vld [vmem:[%s2008 + $0x20] sm:$0xf]
        %v2018 = vld [vmem:[%s2008 + $0x24] sm:$0xf]
        %v2019 = vld [vmem:[%s2008 + $0x28] sm:$0xf]
        %v2020 = vld [vmem:[%s2008 + $0x2c] sm:$0xf]
        %v2021 = vld [vmem:[%s2008 + $0x30] sm:$0xf]
        %v2022 = vld [vmem:[%s2008 + $0x34] sm:$0xf]
        %v2023 = vld [vmem:[%s2008 + $0x38] sm:$0xf]
        %v2024 = vld [vmem:[%s2008 + $0x3c] sm:$0xf]
        %v2025 = vld [vmem:[%s2008 + $0x40] sm:$0x1]
        %v2034 = vrot.slane %v2004, 1
        %v2035 = vrot.slane %v1608, 1
        %v2036 = vsel %vm754, %v2034, %v2035
        %v2037 = vrot.slane %v2005, 1
        %v2038 = vrot.slane %v1609, 1
        %v2039 = vsel %vm754, %v2037, %v2038
        %v2040 = vrot.slane %v1610, 1
        %v2041 = vsel %vm754, %v2035, %v2040
        %v2042 = vrot.slane %v1611, 1
        %v2043 = vsel %vm754, %v2038, %v2042
        %v2044 = vrot.slane %v2006, 1
        %v2045 = vsel %vm754, %v2040, %v2044
        %v2046 = vrot.slane %v2007, 1
        %v2047 = vsel %vm754, %v2042, %v2046
        %v2069 = vunpack.c.l.b16 %v2009
        %v2070 = vunpack.c.l.b16 %v2010
        %v2071 = vunpack.c.l.b16 %v2011
        %v2072 = vunpack.c.l.b16 %v2012
        %v2073 = vunpack.c.l.b16 %v2013
        %v2074 = vunpack.c.l.b16 %v2014
        %v2075 = vunpack.c.l.b16 %v2015
        %v2076 = vunpack.c.l.b16 %v2016
        %v2077 = vunpack.c.l.b16 %v2017
        %v2078 = vunpack.c.l.b16 %v2018
        %v2079 = vunpack.c.l.b16 %v2019
        %v2080 = vunpack.c.l.b16 %v2020
        %v2081 = vunpack.c.l.b16 %v2021
        %v2082 = vunpack.c.l.b16 %v2022
        %v2083 = vunpack.c.l.b16 %v2023
        %v2084 = vunpack.c.l.b16 %v2024
        %v2085 = vunpack.c.l.b16 %v2025
        %v2086 = vpack.c.b16 %v2070, %v2069
        %v2087 = vpack.c.b16 %v2072, %v2071
        %v2088 = vpack.c.b16 %v2074, %v2073
        %v2089 = vpack.c.b16 %v2076, %v2075
        %v2090 = vpack.c.b16 %v2078, %v2077
        %v2091 = vpack.c.b16 %v2080, %v2079
        %v2092 = vpack.c.b16 %v2082, %v2081
        %v2093 = vpack.c.b16 %v2084, %v2083
        %v2094 = vpack.c.b16 %v2085, %v2085
        %v2104 = vsel %vm507, %v2039, 0
        %v2107 = vsel %vm507, %v2043, 0
        %v2110 = vsel %vm507, %v2047, 0
        %v2113 = vsel %vm507, %v2046, 0
        %v2116 = vand.u32 %v2094, %v522
        %2118 = vmatprep.subr.bf16.mxu0 0
        %2119 = vmatpush1.bf16.msra.mxu0 %v2086
        %2120 = vmatprep.subr.bf16.mxu0 0
        %2121 = vmatpush1.bf16.msra.mxu0 %v2087
        %2122 = vmatprep.subr.bf16.mxu0 0
        %2123 = vmatpush1.bf16.msra.mxu0 %v2088
        %2124 = vmatprep.subr.bf16.mxu0 0
        %2125 = vmatpush1.bf16.msra.mxu0 %v2089
        %2126 = vmatprep.subr.bf16.mxu0 0
        %2127 = vmatpush1.bf16.msra.mxu0 %v2090
        %2128 = vmatprep.subr.bf16.mxu0 0
        %2129 = vmatpush1.bf16.msra.mxu0 %v2091
        %2130 = vmatprep.subr.bf16.mxu0 0
        %2131 = vmatpush1.bf16.msra.mxu0 %v2092
        %2132 = vmatprep.subr.bf16.mxu0 0
        %2133 = vmatpush1.bf16.msra.mxu0 %v2093
        %2134 = vmatprep.subr.bf16.mxu0 0
        %2135 = vmatpush1.bf16.msra.mxu0 %v2116
        %2136 = vmatprep.subr.bf16.mxu0 0
        %2137 = vmatpush1.bf16.msra.mxu0 0
        %2138 = vmatprep.subr.bf16.mxu0 0
        %2139 = vmatpush1.bf16.msra.mxu0 0
        %2140 = vmatprep.subr.bf16.mxu0 0
        %2141 = vmatpush1.bf16.msra.mxu0 0
        %2142 = vmatprep.subr.bf16.mxu0 0
        %2143 = vmatpush1.bf16.msra.mxu0 0
        %2144 = vmatprep.subr.bf16.mxu0 0
        %2145 = vmatpush1.bf16.msra.mxu0 0
        %2146 = vmatprep.subr.bf16.mxu0 0
        %2147 = vmatpush1.bf16.msra.mxu0 0
        %2148 = vmatprep.subr.bf16.mxu0 0
        %2149 = vmatpush1.bf16.msra.mxu0 0
        %2150 = vmatprep.mubr.bf16.mxu0 %v2104
        %2151 = vmatmul.mubr.bf16.gmra.mrb[0].mxu0 %v2036
        %v2152 = vpop.f32.mrb[0].mxu0
        %v2153 = vadd.f32 0.0, %v2152
        %v2154 = vpop.f32.mrb[0].mxu0
        %v2155 = vpop.f32.mrb[0].mxu0
        %v2156 = vadd.f32 0.0, %v2155
        %v2157 = vpop.f32.mrb[0].mxu0
        %2158 = vmatprep.mubr.bf16.mxu0 %v2107
        %2159 = vmatmul.mubr.bf16.gmra.mrb[0].mxu0 %v2041
        %v2160 = vpop.f32.mrb[0].mxu0
        %v2161 = vadd.f32 0.0, %v2160
        %v2162 = vpop.f32.mrb[0].mxu0
        %v2163 = vpop.f32.mrb[0].mxu0
        %v2164 = vadd.f32 0.0, %v2163
        %v2165 = vpop.f32.mrb[0].mxu0
        %2166 = vmatprep.mubr.bf16.mxu0 %v2110
        %2167 = vmatmul.mubr.bf16.gmra.mrb[0].mxu0 %v2045
        %v2168 = vpop.f32.mrb[0].mxu0
        %v2169 = vadd.f32 0.0, %v2168
        %v2170 = vpop.f32.mrb[0].mxu0
        %v2171 = vpop.f32.mrb[0].mxu0
        %v2172 = vadd.f32 0.0, %v2171
        %v2173 = vpop.f32.mrb[0].mxu0
        %2174 = vmatprep.mubr.bf16.mxu0 %v2113
        %2175 = vmatmul.mubr.bf16.gmra.mrb[0].mxu0 %v2044
        %v2176 = vpop.f32.mrb[0].mxu0
        %v2177 = vadd.f32 0.0, %v2176
        %v2178 = vpop.f32.mrb[0].mxu0
        %v2179 = vpop.f32.mrb[0].mxu0
        %v2180 = vadd.f32 0.0, %v2179
        %v2181 = vpop.f32.mrb[0].mxu0
        %2182 = vdwg.mxu0
        %v2183 = vadd.f32 %v1992, %v2153
        %v2184 = vadd.f32 %v1993, %v2156
        %v2185 = vadd.f32 %v1994, %v2161
        %v2186 = vadd.f32 %v1995, %v2164
        %v2187 = vadd.f32 %v1996, %v2169
        %v2188 = vadd.f32 %v1997, %v2172
        %v2189 = vadd.f32 %v1998, %v2177
        %v2190 = vadd.f32 %v1999, %v2180
        %v2191 = vld [vmem:[%s296] sm:$0xf8]
        %v2192 = vld [vmem:[%s296 + $0x8] sm:$0xf8]
        %v2193 = vld [vmem:[%s296 + $0x70] sm:$0x7f]
        %v2194 = vld [vmem:[%s296 + $0x78] sm:$0x7f]
        %v2195 = vpack.c.bf16 %v1592, %v2191
        %v2196 = vpack.c.bf16 %v1593, %v2192
        %v2197 = vpack.c.bf16 %v2193, %v1602
        %v2198 = vpack.c.bf16 %v2194, %v1603
        %s2199 = scalar_lea.vmem %s2, 476
        %v2200 = vld [vmem:[%s2199] sm:$0xf]
        %v2201 = vld [vmem:[%s2199 + $0x4] sm:$0xf]
        %v2202 = vld [vmem:[%s2199 + $0x8] sm:$0xf]
        %v2203 = vld [vmem:[%s2199 + $0xc] sm:$0xf]
        %v2204 = vld [vmem:[%s2199 + $0x10] sm:$0xf]
        %v2205 = vld [vmem:[%s2199 + $0x14] sm:$0xf]
        %v2206 = vld [vmem:[%s2199 + $0x18] sm:$0xf]
        %v2207 = vld [vmem:[%s2199 + $0x1c] sm:$0xf]
        %v2208 = vld [vmem:[%s2199 + $0x20] sm:$0xf]
        %v2209 = vld [vmem:[%s2199 + $0x24] sm:$0xf]
        %v2210 = vld [vmem:[%s2199 + $0x28] sm:$0xf]
        %v2211 = vld [vmem:[%s2199 + $0x2c] sm:$0xf]
        %v2212 = vld [vmem:[%s2199 + $0x30] sm:$0xf]
        %v2213 = vld [vmem:[%s2199 + $0x34] sm:$0xf]
        %v2214 = vld [vmem:[%s2199 + $0x38] sm:$0xf]
        %v2215 = vld [vmem:[%s2199 + $0x3c] sm:$0xf]
        %v2216 = vld [vmem:[%s2199 + $0x40] sm:$0x1]
        %v2218 = vshrl.u32 %v2195, 16
        %v2220 = vrot.slane %v2218, 1
        %v2221 = vshll.u32 %v2195, 16
        %v2223 = vrot.slane %v2221, 2
        %v2224 = vor.u32 %v2220, %v2223
        %v2225 = vrot.slane %v1820, 1
        %v2226 = vrot.slane %v1805, 2
        %v2227 = vor.u32 %v2225, %v2226
        %v2228 = vsel %vm938, %v2224, %v2227
        %v2230 = vshrl.u32 %v2196, 16
        %v2232 = vrot.slane %v2230, 1
        %v2233 = vshll.u32 %v2196, 16
        %v2235 = vrot.slane %v2233, 2
        %v2236 = vor.u32 %v2232, %v2235
        %v2237 = vrot.slane %v1828, 1
        %v2238 = vrot.slane %v1816, 2
        %v2239 = vor.u32 %v2237, %v2238
        %v2240 = vsel %vm938, %v2236, %v2239
        %v2241 = vrot.slane %v1835, 1
        %v2242 = vrot.slane %v1824, 2
        %v2243 = vor.u32 %v2241, %v2242
        %v2244 = vsel %vm938, %v2227, %v2243
        %v2245 = vrot.slane %v1843, 1
        %v2246 = vrot.slane %v1831, 2
        %v2247 = vor.u32 %v2245, %v2246
        %v2248 = vsel %vm938, %v2239, %v2247
        %v2250 = vshrl.u32 %v2197, 16
        %v2252 = vrot.slane %v2250, 1
        %v2253 = vshll.u32 %v2197, 16
        %v2255 = vrot.slane %v2253, 2
        %v2256 = vor.u32 %v2252, %v2255
        %v2257 = vsel %vm938, %v2243, %v2256
        %v2259 = vshrl.u32 %v2198, 16
        %v2261 = vrot.slane %v2259, 1
        %v2262 = vshll.u32 %v2198, 16
        %v2264 = vrot.slane %v2262, 2
        %v2265 = vor.u32 %v2261, %v2264
        %v2266 = vsel %vm938, %v2247, %v2265
        %v2288 = vunpack.c.l.b16 %v2200
        %v2289 = vunpack.c.l.b16 %v2201
        %v2290 = vunpack.c.l.b16 %v2202
        %v2291 = vunpack.c.l.b16 %v2203
        %v2292 = vunpack.c.l.b16 %v2204
        %v2293 = vunpack.c.l.b16 %v2205
        %v2294 = vunpack.c.l.b16 %v2206
        %v2295 = vunpack.c.l.b16 %v2207
        %v2296 = vunpack.c.l.b16 %v2208
        %v2297 = vunpack.c.l.b16 %v2209
        %v2298 = vunpack.c.l.b16 %v2210
        %v2299 = vunpack.c.l.b16 %v2211
        %v2300 = vunpack.c.l.b16 %v2212
        %v2301 = vunpack.c.l.b16 %v2213
        %v2302 = vunpack.c.l.b16 %v2214
        %v2303 = vunpack.c.l.b16 %v2215
        %v2304 = vunpack.c.l.b16 %v2216
        %v2305 = vpack.c.b16 %v2289, %v2288
        %v2306 = vpack.c.b16 %v2291, %v2290
        %v2307 = vpack.c.b16 %v2293, %v2292
        %v2308 = vpack.c.b16 %v2295, %v2294
        %v2309 = vpack.c.b16 %v2297, %v2296
        %v2310 = vpack.c.b16 %v2299, %v2298
        %v2311 = vpack.c.b16 %v2301, %v2300
        %v2312 = vpack.c.b16 %v2303, %v2302
        %v2313 = vpack.c.b16 %v2304, %v2304
        %v2323 = vsel %vm507, %v2240, 0
        %v2326 = vsel %vm507, %v2248, 0
        %v2329 = vsel %vm507, %v2266, 0
        %v2332 = vsel %vm507, %v2265, 0
        %v2335 = vand.u32 %v2313, %v522
        %2337 = vmatprep.subr.bf16.mxu0 0
        %2338 = vmatpush1.bf16.msra.mxu0 %v2305
        %2339 = vmatprep.subr.bf16.mxu0 0
        %2340 = vmatpush1.bf16.msra.mxu0 %v2306
        %2341 = vmatprep.subr.bf16.mxu0 0
        %2342 = vmatpush1.bf16.msra.mxu0 %v2307
        %2343 = vmatprep.subr.bf16.mxu0 0
        %2344 = vmatpush1.bf16.msra.mxu0 %v2308
        %2345 = vmatprep.subr.bf16.mxu0 0
        %2346 = vmatpush1.bf16.msra.mxu0 %v2309
        %2347 = vmatprep.subr.bf16.mxu0 0
        %2348 = vmatpush1.bf16.msra.mxu0 %v2310
        %2349 = vmatprep.subr.bf16.mxu0 0
        %2350 = vmatpush1.bf16.msra.mxu0 %v2311
        %2351 = vmatprep.subr.bf16.mxu0 0
        %2352 = vmatpush1.bf16.msra.mxu0 %v2312
        %2353 = vmatprep.subr.bf16.mxu0 0
        %2354 = vmatpush1.bf16.msra.mxu0 %v2335
        %2355 = vmatprep.subr.bf16.mxu0 0
        %2356 = vmatpush1.bf16.msra.mxu0 0
        %2357 = vmatprep.subr.bf16.mxu0 0
        %2358 = vmatpush1.bf16.msra.mxu0 0
        %2359 = vmatprep.subr.bf16.mxu0 0
        %2360 = vmatpush1.bf16.msra.mxu0 0
        %2361 = vmatprep.subr.bf16.mxu0 0
        %2362 = vmatpush1.bf16.msra.mxu0 0
        %2363 = vmatprep.subr.bf16.mxu0 0
        %2364 = vmatpush1.bf16.msra.mxu0 0
        %2365 = vmatprep.subr.bf16.mxu0 0
        %2366 = vmatpush1.bf16.msra.mxu0 0
        %2367 = vmatprep.subr.bf16.mxu0 0
        %2368 = vmatpush1.bf16.msra.mxu0 0
        %2369 = vmatprep.mubr.bf16.mxu0 %v2323
        %2370 = vmatmul.mubr.bf16.gmra.mrb[0].mxu0 %v2228
        %v2371 = vpop.f32.mrb[0].mxu0
        %v2372 = vadd.f32 0.0, %v2371
        %v2373 = vpop.f32.mrb[0].mxu0
        %v2374 = vpop.f32.mrb[0].mxu0
        %v2375 = vadd.f32 0.0, %v2374
        %v2376 = vpop.f32.mrb[0].mxu0
        %2377 = vmatprep.mubr.bf16.mxu0 %v2326
        %2378 = vmatmul.mubr.bf16.gmra.mrb[0].mxu0 %v2244
        %v2379 = vpop.f32.mrb[0].mxu0
        %v2380 = vadd.f32 0.0, %v2379
        %v2381 = vpop.f32.mrb[0].mxu0
        %v2382 = vpop.f32.mrb[0].mxu0
        %v2383 = vadd.f32 0.0, %v2382
        %v2384 = vpop.f32.mrb[0].mxu0
        %2385 = vmatprep.mubr.bf16.mxu0 %v2329
        %2386 = vmatmul.mubr.bf16.gmra.mrb[0].mxu0 %v2257
        %v2387 = vpop.f32.mrb[0].mxu0
        %v2388 = vadd.f32 0.0, %v2387
        %v2389 = vpop.f32.mrb[0].mxu0
        %v2390 = vpop.f32.mrb[0].mxu0
        %v2391 = vadd.f32 0.0, %v2390
        %v2392 = vpop.f32.mrb[0].mxu0
        %2393 = vmatprep.mubr.bf16.mxu0 %v2332
        %2394 = vmatmul.mubr.bf16.gmra.mrb[0].mxu0 %v2256
        %v2395 = vpop.f32.mrb[0].mxu0
        %v2396 = vadd.f32 0.0, %v2395
        %v2397 = vpop.f32.mrb[0].mxu0
        %v2398 = vpop.f32.mrb[0].mxu0
        %v2399 = vadd.f32 0.0, %v2398
        %v2400 = vpop.f32.mrb[0].mxu0
        %2401 = vdwg.mxu0
        %v2402 = vadd.f32 %v2183, %v2372
        %v2403 = vadd.f32 %v2184, %v2375
        %v2404 = vadd.f32 %v2185, %v2380
        %v2405 = vadd.f32 %v2186, %v2383
        %v2406 = vadd.f32 %v2187, %v2388
        %v2407 = vadd.f32 %v2188, %v2391
        %v2408 = vadd.f32 %v2189, %v2396
        %v2409 = vadd.f32 %v2190, %v2399
        %v2410 = vld [vmem:[%s296] sm:$0xf0]
        %v2411 = vld [vmem:[%s296 + $0x8] sm:$0xf0]
        %v2412 = vld [vmem:[%s296 + $0x70] sm:$0xff]
        %v2413 = vld [vmem:[%s296 + $0x78] sm:$0xff]
        %v2414 = vpack.c.bf16 %v1592, %v2410
        %v2415 = vpack.c.bf16 %v1593, %v2411
        %v2416 = vpack.c.bf16 %v2412, %v1602
        %v2417 = vpack.c.bf16 %v2413, %v1603
        %s2418 = scalar_lea.vmem %s2, 612
        %v2419 = vld [vmem:[%s2418] sm:$0xf]
        %v2420 = vld [vmem:[%s2418 + $0x4] sm:$0xf]
        %v2421 = vld [vmem:[%s2418 + $0x8] sm:$0xf]
        %v2422 = vld [vmem:[%s2418 + $0xc] sm:$0xf]
        %v2423 = vld [vmem:[%s2418 + $0x10] sm:$0xf]
        %v2424 = vld [vmem:[%s2418 + $0x14] sm:$0xf]
        %v2425 = vld [vmem:[%s2418 + $0x18] sm:$0xf]
        %v2426 = vld [vmem:[%s2418 + $0x1c] sm:$0xf]
        %v2427 = vld [vmem:[%s2418 + $0x20] sm:$0xf]
        %v2428 = vld [vmem:[%s2418 + $0x24] sm:$0xf]
        %v2429 = vld [vmem:[%s2418 + $0x28] sm:$0xf]
        %v2430 = vld [vmem:[%s2418 + $0x2c] sm:$0xf]
        %v2431 = vld [vmem:[%s2418 + $0x30] sm:$0xf]
        %v2432 = vld [vmem:[%s2418 + $0x34] sm:$0xf]
        %v2433 = vld [vmem:[%s2418 + $0x38] sm:$0xf]
        %v2434 = vld [vmem:[%s2418 + $0x3c] sm:$0xf]
        %v2435 = vld [vmem:[%s2418 + $0x40] sm:$0x1]
        %v2440 = vrot.slane %v2414, 2
        %v2441 = vrot.slane %v1608, 2
        %v2442 = vsel %vm1162, %v2440, %v2441
        %v2443 = vrot.slane %v2415, 2
        %v2444 = vrot.slane %v1609, 2
        %v2445 = vsel %vm1162, %v2443, %v2444
        %v2446 = vrot.slane %v1610, 2
        %v2447 = vsel %vm1162, %v2441, %v2446
        %v2448 = vrot.slane %v1611, 2
        %v2449 = vsel %vm1162, %v2444, %v2448
        %v2450 = vrot.slane %v2416, 2
        %v2451 = vsel %vm1162, %v2446, %v2450
        %v2452 = vrot.slane %v2417, 2
        %v2453 = vsel %vm1162, %v2448, %v2452
        %v2475 = vunpack.c.l.b16 %v2419
        %v2476 = vunpack.c.l.b16 %v2420
        %v2477 = vunpack.c.l.b16 %v2421
        %v2478 = vunpack.c.l.b16 %v2422
        %v2479 = vunpack.c.l.b16 %v2423
        %v2480 = vunpack.c.l.b16 %v2424
        %v2481 = vunpack.c.l.b16 %v2425
        %v2482 = vunpack.c.l.b16 %v2426
        %v2483 = vunpack.c.l.b16 %v2427
        %v2484 = vunpack.c.l.b16 %v2428
        %v2485 = vunpack.c.l.b16 %v2429
        %v2486 = vunpack.c.l.b16 %v2430
        %v2487 = vunpack.c.l.b16 %v2431
        %v2488 = vunpack.c.l.b16 %v2432
        %v2489 = vunpack.c.l.b16 %v2433
        %v2490 = vunpack.c.l.b16 %v2434
        %v2491 = vunpack.c.l.b16 %v2435
        %v2492 = vpack.c.b16 %v2476, %v2475
        %v2493 = vpack.c.b16 %v2478, %v2477
        %v2494 = vpack.c.b16 %v2480, %v2479
        %v2495 = vpack.c.b16 %v2482, %v2481
        %v2496 = vpack.c.b16 %v2484, %v2483
        %v2497 = vpack.c.b16 %v2486, %v2485
        %v2498 = vpack.c.b16 %v2488, %v2487
        %v2499 = vpack.c.b16 %v2490, %v2489
        %v2500 = vpack.c.b16 %v2491, %v2491
        %v2510 = vsel %vm507, %v2445, 0
        %v2513 = vsel %vm507, %v2449, 0
        %v2516 = vsel %vm507, %v2453, 0
        %v2519 = vsel %vm507, %v2452, 0
        %v2522 = vand.u32 %v2500, %v522
        %2524 = vmatprep.subr.bf16.mxu0 0
        %2525 = vmatpush1.bf16.msra.mxu0 %v2492
        %2526 = vmatprep.subr.bf16.mxu0 0
        %2527 = vmatpush1.bf16.msra.mxu0 %v2493
        %2528 = vmatprep.subr.bf16.mxu0 0
        %2529 = vmatpush1.bf16.msra.mxu0 %v2494
        %2530 = vmatprep.subr.bf16.mxu0 0
        %2531 = vmatpush1.bf16.msra.mxu0 %v2495
        %2532 = vmatprep.subr.bf16.mxu0 0
        %2533 = vmatpush1.bf16.msra.mxu0 %v2496
        %2534 = vmatprep.subr.bf16.mxu0 0
        %2535 = vmatpush1.bf16.msra.mxu0 %v2497
        %2536 = vmatprep.subr.bf16.mxu0 0
        %2537 = vmatpush1.bf16.msra.mxu0 %v2498
        %2538 = vmatprep.subr.bf16.mxu0 0
        %2539 = vmatpush1.bf16.msra.mxu0 %v2499
        %2540 = vmatprep.subr.bf16.mxu0 0
        %2541 = vmatpush1.bf16.msra.mxu0 %v2522
        %2542 = vmatprep.subr.bf16.mxu0 0
        %2543 = vmatpush1.bf16.msra.mxu0 0
        %2544 = vmatprep.subr.bf16.mxu0 0
        %2545 = vmatpush1.bf16.msra.mxu0 0
        %2546 = vmatprep.subr.bf16.mxu0 0
        %2547 = vmatpush1.bf16.msra.mxu0 0
        %2548 = vmatprep.subr.bf16.mxu0 0
        %2549 = vmatpush1.bf16.msra.mxu0 0
        %2550 = vmatprep.subr.bf16.mxu0 0
        %2551 = vmatpush1.bf16.msra.mxu0 0
        %2552 = vmatprep.subr.bf16.mxu0 0
        %2553 = vmatpush1.bf16.msra.mxu0 0
        %2554 = vmatprep.subr.bf16.mxu0 0
        %2555 = vmatpush1.bf16.msra.mxu0 0
        %2556 = vmatprep.mubr.bf16.mxu0 %v2510
        %2557 = vmatmul.mubr.bf16.gmra.mrb[0].mxu0 %v2442
        %v2558 = vpop.f32.mrb[0].mxu0
        %v2559 = vadd.f32 0.0, %v2558
        %v2560 = vpop.f32.mrb[0].mxu0
        %v2561 = vpop.f32.mrb[0].mxu0
        %v2562 = vadd.f32 0.0, %v2561
        %v2563 = vpop.f32.mrb[0].mxu0
        %2564 = vmatprep.mubr.bf16.mxu0 %v2513
        %2565 = vmatmul.mubr.bf16.gmra.mrb[0].mxu0 %v2447
        %v2566 = vpop.f32.mrb[0].mxu0
        %v2567 = vadd.f32 0.0, %v2566
        %v2568 = vpop.f32.mrb[0].mxu0
        %v2569 = vpop.f32.mrb[0].mxu0
        %v2570 = vadd.f32 0.0, %v2569
        %v2571 = vpop.f32.mrb[0].mxu0
        %2572 = vmatprep.mubr.bf16.mxu0 %v2516
        %2573 = vmatmul.mubr.bf16.gmra.mrb[0].mxu0 %v2451
        %v2574 = vpop.f32.mrb[0].mxu0
        %v2575 = vadd.f32 0.0, %v2574
        %v2576 = vpop.f32.mrb[0].mxu0
        %v2577 = vpop.f32.mrb[0].mxu0
        %v2578 = vadd.f32 0.0, %v2577
        %v2579 = vpop.f32.mrb[0].mxu0
        %2580 = vmatprep.mubr.bf16.mxu0 %v2519
        %2581 = vmatmul.mubr.bf16.gmra.mrb[0].mxu0 %v2450
        %v2582 = vpop.f32.mrb[0].mxu0
        %v2583 = vadd.f32 0.0, %v2582
        %v2584 = vpop.f32.mrb[0].mxu0
        %v2585 = vpop.f32.mrb[0].mxu0
        %v2586 = vadd.f32 0.0, %v2585
        %v2587 = vpop.f32.mrb[0].mxu0
        %2588 = vdwg.mxu0
        %v2589 = vadd.f32 %v2402, %v2559
        %v2590 = vadd.f32 %v2403, %v2562
        %v2591 = vadd.f32 %v2404, %v2567
        %v2592 = vadd.f32 %v2405, %v2570
        %v2593 = vadd.f32 %v2406, %v2575
        %v2594 = vadd.f32 %v2407, %v2578
        %v2595 = vadd.f32 %v2408, %v2583
        %v2596 = vadd.f32 %v2409, %v2586
        %v2597 = vlaneseq
        %v2598 = vshrl.u32 %v2597, 7
        %v2599 = vsub.s32 0, %v2598
        %v2600 = vrot.slane %v319, %v2599
        %v2601 = vadd.f32 %v2589, %v2600
        %v2602 = vadd.f32 %v2590, %v2600
        %v2603 = vadd.f32 %v2591, %v2600
        %v2604 = vadd.f32 %v2592, %v2600
        %v2605 = vadd.f32 %v2593, %v2600
        %v2606 = vadd.f32 %v2594, %v2600
        %v2607 = vadd.f32 %v2595, %v2600
        %v2608 = vadd.f32 %v2596, %v2600
        %v2609 = vmax.f32 %v2601, 0.0
        %v2610 = vmax.f32 %v2602, 0.0
        %v2611 = vmax.f32 %v2603, 0.0
        %v2612 = vmax.f32 %v2604, 0.0
        %v2613 = vmax.f32 %v2605, 0.0
        %v2614 = vmax.f32 %v2606, 0.0
        %v2615 = vmax.f32 %v2607, 0.0
        %v2616 = vmax.f32 %v2608, 0.0
        %2617 = vst [vmem:[#allocation2 + $0x8] sm:$0xff] %v2609
        %2618 = vst [vmem:[#allocation2 + $0x10] sm:$0xff] %v2610
        %2619 = vst [vmem:[#allocation2 + $0x18] sm:$0xff] %v2611
        %2620 = vst [vmem:[#allocation2 + $0x20] sm:$0xff] %v2612
        %2621 = vst [vmem:[#allocation2 + $0x28] sm:$0xff] %v2613
        %2622 = vst [vmem:[#allocation2 + $0x30] sm:$0xff] %v2614
        %2623 = vst [vmem:[#allocation2 + $0x38] sm:$0xff] %v2615
        %2624 = vst [vmem:[#allocation2 + $0x40] sm:$0xf] %v2616
        %s2625 = scalar_lea.vmem [#allocation2], 7
        %v2626 = vld [vmem:[%s2625] ss:$2 sm:$0xff]
        %s2627 = scalar_lea.vmem [#allocation2], 23
        %v2628 = vld [vmem:[%s2627] ss:$2 sm:$0xff]
        %s2629 = scalar_lea.vmem [#allocation2], 39
        %v2630 = vld [vmem:[%s2629] ss:$2 sm:$0xff]
        %s2631 = scalar_lea.vmem [#allocation2], 55
        %v2632 = vld [vmem:[%s2631] ss:$2 sm:$0x3]
        %v2633 = vpack.c.bf16 %v2628, %v2626
        %v2634 = vpack.c.bf16 %v2632, %v2630
        %v2635 = vld [vmem:[#allocation4] sm:$0xf]
        %v2636 = vld [vmem:[#allocation4 + $0x4] sm:$0xf]
        %v2637 = vld [vmem:[#allocation4 + $0x8] sm:$0xf]
        %v2638 = vld [vmem:[#allocation4 + $0xc] sm:$0xf]
        %v2639 = vld [vmem:[#allocation4 + $0x10] sm:$0xf]
        %v2640 = vld [vmem:[#allocation4 + $0x14] sm:$0xf]
        %v2641 = vld [vmem:[#allocation4 + $0x18] sm:$0xf]
        %v2642 = vld [vmem:[#allocation4 + $0x1c] sm:$0xf]
        %v2643 = vld [vmem:[#allocation4 + $0x20] sm:$0xf]
        %v2644 = vld [vmem:[#allocation4 + $0x24] sm:$0xf]
        %v2645 = vld [vmem:[#allocation4 + $0x28] sm:$0xf]
        %v2646 = vld [vmem:[#allocation4 + $0x2c] sm:$0xf]
        %v2647 = vld [vmem:[#allocation4 + $0x30] sm:$0xf]
        %v2648 = vld [vmem:[#allocation4 + $0x34] sm:$0xf]
        %v2649 = vld [vmem:[#allocation4 + $0x38] sm:$0xf]
        %v2650 = vld [vmem:[#allocation4 + $0x3c] sm:$0xf]
        %s2651 = scalar_lea.vmem [#allocation2], 8
        %v2652 = vld [vmem:[%s2651] ss:$2 sm:$0xff]
        %s2653 = scalar_lea.vmem [#allocation2], 24
        %v2654 = vld [vmem:[%s2653] ss:$2 sm:$0xff]
        %s2655 = scalar_lea.vmem [#allocation2], 40
        %v2656 = vld [vmem:[%s2655] ss:$2 sm:$0xff]
        %s2657 = scalar_lea.vmem [#allocation2], 56
        %v2658 = vld [vmem:[%s2657] ss:$2 sm:$0x3]
        %v2659 = vpack.c.bf16 %v2654, %v2652
        %v2660 = vpack.c.bf16 %v2658, %v2656
        %s2661 = scalar_lea.vmem [#allocation4], 64
        %v2662 = vld [vmem:[%s2661] sm:$0xf]
        %v2663 = vld [vmem:[%s2661 + $0x4] sm:$0xf]
        %v2664 = vld [vmem:[%s2661 + $0x8] sm:$0xf]
        %v2665 = vld [vmem:[%s2661 + $0xc] sm:$0xf]
        %v2666 = vld [vmem:[%s2661 + $0x10] sm:$0xf]
        %v2667 = vld [vmem:[%s2661 + $0x14] sm:$0xf]
        %v2668 = vld [vmem:[%s2661 + $0x18] sm:$0xf]
        %v2669 = vld [vmem:[%s2661 + $0x1c] sm:$0xf]
        %v2670 = vld [vmem:[%s2661 + $0x20] sm:$0xf]
        %v2671 = vld [vmem:[%s2661 + $0x24] sm:$0xf]
        %v2672 = vld [vmem:[%s2661 + $0x28] sm:$0xf]
        %v2673 = vld [vmem:[%s2661 + $0x2c] sm:$0xf]
        %v2674 = vld [vmem:[%s2661 + $0x30] sm:$0xf]
        %v2675 = vld [vmem:[%s2661 + $0x34] sm:$0xf]
        %v2676 = vld [vmem:[%s2661 + $0x38] sm:$0xf]
        %v2677 = vld [vmem:[%s2661 + $0x3c] sm:$0xf]
        %v2694 = vunpack.c.l.b16 %v2662
        %v2695 = vunpack.c.l.b16 %v2663
        %v2696 = vunpack.c.l.b16 %v2664
        %v2697 = vunpack.c.l.b16 %v2665
        %v2698 = vunpack.c.l.b16 %v2666
        %v2699 = vunpack.c.l.b16 %v2667
        %v2700 = vunpack.c.l.b16 %v2668
        %v2701 = vunpack.c.l.b16 %v2669
        %v2702 = vunpack.c.l.b16 %v2670
        %v2703 = vunpack.c.l.b16 %v2671
        %v2704 = vunpack.c.l.b16 %v2672
        %v2705 = vunpack.c.l.b16 %v2673
        %v2706 = vunpack.c.l.b16 %v2674
        %v2707 = vunpack.c.l.b16 %v2675
        %v2708 = vunpack.c.l.b16 %v2676
        %v2709 = vunpack.c.l.b16 %v2677
        %v2710 = vpack.c.b16 %v2695, %v2694
        %v2711 = vpack.c.b16 %v2697, %v2696
        %v2712 = vpack.c.b16 %v2699, %v2698
        %v2713 = vpack.c.b16 %v2701, %v2700
        %v2714 = vpack.c.b16 %v2703, %v2702
        %v2715 = vpack.c.b16 %v2705, %v2704
        %v2716 = vpack.c.b16 %v2707, %v2706
        %v2717 = vpack.c.b16 %v2709, %v2708
        %2726 = vmatprep.subr.bf16.mxu0 0
        %2727 = vmatpush1.bf16.msra.mxu0 %v2710
        %2728 = vmatprep.subr.bf16.mxu0 0
        %2729 = vmatpush1.bf16.msra.mxu0 %v2711
        %2730 = vmatprep.subr.bf16.mxu0 0
        %2731 = vmatpush1.bf16.msra.mxu0 %v2712
        %2732 = vmatprep.subr.bf16.mxu0 0
        %2733 = vmatpush1.bf16.msra.mxu0 %v2713
        %2734 = vmatprep.subr.bf16.mxu0 0
        %2735 = vmatpush1.bf16.msra.mxu0 %v2714
        %2736 = vmatprep.subr.bf16.mxu0 0
        %2737 = vmatpush1.bf16.msra.mxu0 %v2715
        %2738 = vmatprep.subr.bf16.mxu0 0
        %2739 = vmatpush1.bf16.msra.mxu0 %v2716
        %2740 = vmatprep.subr.bf16.mxu0 0
        %2741 = vmatpush1.bf16.msra.mxu0 %v2717
        %2742 = vmatprep.subr.bf16.mxu0 0
        %2743 = vmatpush1.bf16.msra.mxu0 0
        %2744 = vmatprep.subr.bf16.mxu0 0
        %2745 = vmatpush1.bf16.msra.mxu0 0
        %2746 = vmatprep.subr.bf16.mxu0 0
        %2747 = vmatpush1.bf16.msra.mxu0 0
        %2748 = vmatprep.subr.bf16.mxu0 0
        %2749 = vmatpush1.bf16.msra.mxu0 0
        %2750 = vmatprep.subr.bf16.mxu0 0
        %2751 = vmatpush1.bf16.msra.mxu0 0
        %2752 = vmatprep.subr.bf16.mxu0 0
        %2753 = vmatpush1.bf16.msra.mxu0 0
        %2754 = vmatprep.subr.bf16.mxu0 0
        %2755 = vmatpush1.bf16.msra.mxu0 0
        %2756 = vmatprep.subr.bf16.mxu0 0
        %2757 = vmatpush1.bf16.msra.mxu0 0
        %2758 = vmatprep.mubr.bf16.mxu0 0
        %2759 = vmatmul.mubr.bf16.gmra.mrb[0].mxu0 %v2659
        %v2760 = vpop.f32.mrb[0].mxu0
        %v2761 = vadd.f32 0.0, %v2760
        %v2762 = vpop.f32.mrb[0].mxu0
        %v2763 = vpop.f32.mrb[0].mxu0
        %v2764 = vadd.f32 0.0, %v2763
        %v2765 = vpop.f32.mrb[0].mxu0
        %2766 = vmatprep.mubr.bf16.mxu0 0
        %2767 = vmatmul.mubr.bf16.gmra.mrb[0].mxu0 %v2660
        %v2768 = vpop.f32.mrb[0].mxu0
        %v2769 = vadd.f32 0.0, %v2768
        %v2770 = vpop.f32.mrb[0].mxu0
        %v2771 = vpop.f32.mrb[0].mxu0
        %v2772 = vadd.f32 0.0, %v2771
        %v2773 = vpop.f32.mrb[0].mxu0
        %2774 = vdwg.mxu0
        %v2791 = vunpack.c.l.b16 %v2635
        %v2792 = vunpack.c.l.b16 %v2636
        %v2793 = vunpack.c.l.b16 %v2637
        %v2794 = vunpack.c.l.b16 %v2638
        %v2795 = vunpack.c.l.b16 %v2639
        %v2796 = vunpack.c.l.b16 %v2640
        %v2797 = vunpack.c.l.b16 %v2641
        %v2798 = vunpack.c.l.b16 %v2642
        %v2799 = vunpack.c.l.b16 %v2643
        %v2800 = vunpack.c.l.b16 %v2644
        %v2801 = vunpack.c.l.b16 %v2645
        %v2802 = vunpack.c.l.b16 %v2646
        %v2803 = vunpack.c.l.b16 %v2647
        %v2804 = vunpack.c.l.b16 %v2648
        %v2805 = vunpack.c.l.b16 %v2649
        %v2806 = vunpack.c.l.b16 %v2650
        %v2807 = vpack.c.b16 %v2792, %v2791
        %v2808 = vpack.c.b16 %v2794, %v2793
        %v2809 = vpack.c.b16 %v2796, %v2795
        %v2810 = vpack.c.b16 %v2798, %v2797
        %v2811 = vpack.c.b16 %v2800, %v2799
        %v2812 = vpack.c.b16 %v2802, %v2801
        %v2813 = vpack.c.b16 %v2804, %v2803
        %v2814 = vpack.c.b16 %v2806, %v2805
        %2823 = vmatprep.subr.bf16.mxu0 0
        %2824 = vmatpush1.bf16.msra.mxu0 %v2807
        %2825 = vmatprep.subr.bf16.mxu0 0
        %2826 = vmatpush1.bf16.msra.mxu0 %v2808
        %2827 = vmatprep.subr.bf16.mxu0 0
        %2828 = vmatpush1.bf16.msra.mxu0 %v2809
        %2829 = vmatprep.subr.bf16.mxu0 0
        %2830 = vmatpush1.bf16.msra.mxu0 %v2810
        %2831 = vmatprep.subr.bf16.mxu0 0
        %2832 = vmatpush1.bf16.msra.mxu0 %v2811
        %2833 = vmatprep.subr.bf16.mxu0 0
        %2834 = vmatpush1.bf16.msra.mxu0 %v2812
        %2835 = vmatprep.subr.bf16.mxu0 0
        %2836 = vmatpush1.bf16.msra.mxu0 %v2813
        %2837 = vmatprep.subr.bf16.mxu0 0
        %2838 = vmatpush1.bf16.msra.mxu0 %v2814
        %2839 = vmatprep.subr.bf16.mxu0 0
        %2840 = vmatpush1.bf16.msra.mxu0 0
        %2841 = vmatprep.subr.bf16.mxu0 0
        %2842 = vmatpush1.bf16.msra.mxu0 0
        %2843 = vmatprep.subr.bf16.mxu0 0
        %2844 = vmatpush1.bf16.msra.mxu0 0
        %2845 = vmatprep.subr.bf16.mxu0 0
        %2846 = vmatpush1.bf16.msra.mxu0 0
        %2847 = vmatprep.subr.bf16.mxu0 0
        %2848 = vmatpush1.bf16.msra.mxu0 0
        %2849 = vmatprep.subr.bf16.mxu0 0
        %2850 = vmatpush1.bf16.msra.mxu0 0
        %2851 = vmatprep.subr.bf16.mxu0 0
        %2852 = vmatpush1.bf16.msra.mxu0 0
        %2853 = vmatprep.subr.bf16.mxu0 0
        %2854 = vmatpush1.bf16.msra.mxu0 0
        %2855 = vmatprep.mubr.bf16.mxu0 0
        %2856 = vmatmul.mubr.bf16.gmra.mrb[0].mxu0 %v2633
        %v2857 = vpop.f32.mrb[0].mxu0
        %v2858 = vadd.f32 %v2761, %v2857
        %v2859 = vpop.f32.mrb[0].mxu0
        %v2860 = vpop.f32.mrb[0].mxu0
        %v2861 = vadd.f32 %v2764, %v2860
        %v2862 = vpop.f32.mrb[0].mxu0
        %2863 = vmatprep.mubr.bf16.mxu0 0
        %2864 = vmatmul.mubr.bf16.gmra.mrb[0].mxu0 %v2634
        %v2865 = vpop.f32.mrb[0].mxu0
        %v2866 = vadd.f32 %v2769, %v2865
        %v2867 = vpop.f32.mrb[0].mxu0
        %v2868 = vpop.f32.mrb[0].mxu0
        %v2869 = vadd.f32 %v2772, %v2868
        %v2870 = vpop.f32.mrb[0].mxu0
        %2871 = vdwg.mxu0
        %s2872 = scalar_lea.vmem [#allocation2], 9
        %v2873 = vld [vmem:[%s2872] ss:$2 sm:$0xff]
        %s2874 = scalar_lea.vmem [#allocation2], 25
        %v2875 = vld [vmem:[%s2874] ss:$2 sm:$0xff]
        %s2876 = scalar_lea.vmem [#allocation2], 41
        %v2877 = vld [vmem:[%s2876] ss:$2 sm:$0xff]
        %s2878 = scalar_lea.vmem [#allocation2], 57
        %v2879 = vld [vmem:[%s2878] ss:$2 sm:$0x3]
        %v2880 = vpack.c.bf16 %v2875, %v2873
        %v2881 = vpack.c.bf16 %v2879, %v2877
        %s2882 = scalar_lea.vmem [#allocation4], 128
        %v2883 = vld [vmem:[%s2882] sm:$0xf]
        %v2884 = vld [vmem:[%s2882 + $0x4] sm:$0xf]
        %v2885 = vld [vmem:[%s2882 + $0x8] sm:$0xf]
        %v2886 = vld [vmem:[%s2882 + $0xc] sm:$0xf]
        %v2887 = vld [vmem:[%s2882 + $0x10] sm:$0xf]
        %v2888 = vld [vmem:[%s2882 + $0x14] sm:$0xf]
        %v2889 = vld [vmem:[%s2882 + $0x18] sm:$0xf]
        %v2890 = vld [vmem:[%s2882 + $0x1c] sm:$0xf]
        %v2891 = vld [vmem:[%s2882 + $0x20] sm:$0xf]
        %v2892 = vld [vmem:[%s2882 + $0x24] sm:$0xf]
        %v2893 = vld [vmem:[%s2882 + $0x28] sm:$0xf]
        %v2894 = vld [vmem:[%s2882 + $0x2c] sm:$0xf]
        %v2895 = vld [vmem:[%s2882 + $0x30] sm:$0xf]
        %v2896 = vld [vmem:[%s2882 + $0x34] sm:$0xf]
        %v2897 = vld [vmem:[%s2882 + $0x38] sm:$0xf]
        %v2898 = vld [vmem:[%s2882 + $0x3c] sm:$0xf]
        %v2915 = vunpack.c.l.b16 %v2883
        %v2916 = vunpack.c.l.b16 %v2884
        %v2917 = vunpack.c.l.b16 %v2885
        %v2918 = vunpack.c.l.b16 %v2886
        %v2919 = vunpack.c.l.b16 %v2887
        %v2920 = vunpack.c.l.b16 %v2888
        %v2921 = vunpack.c.l.b16 %v2889
        %v2922 = vunpack.c.l.b16 %v2890
        %v2923 = vunpack.c.l.b16 %v2891
        %v2924 = vunpack.c.l.b16 %v2892
        %v2925 = vunpack.c.l.b16 %v2893
        %v2926 = vunpack.c.l.b16 %v2894
        %v2927 = vunpack.c.l.b16 %v2895
        %v2928 = vunpack.c.l.b16 %v2896
        %v2929 = vunpack.c.l.b16 %v2897
        %v2930 = vunpack.c.l.b16 %v2898
        %v2931 = vpack.c.b16 %v2916, %v2915
        %v2932 = vpack.c.b16 %v2918, %v2917
        %v2933 = vpack.c.b16 %v2920, %v2919
        %v2934 = vpack.c.b16 %v2922, %v2921
        %v2935 = vpack.c.b16 %v2924, %v2923
        %v2936 = vpack.c.b16 %v2926, %v2925
        %v2937 = vpack.c.b16 %v2928, %v2927
        %v2938 = vpack.c.b16 %v2930, %v2929
        %2947 = vmatprep.subr.bf16.mxu0 0
        %2948 = vmatpush1.bf16.msra.mxu0 %v2931
        %2949 = vmatprep.subr.bf16.mxu0 0
        %2950 = vmatpush1.bf16.msra.mxu0 %v2932
        %2951 = vmatprep.subr.bf16.mxu0 0
        %2952 = vmatpush1.bf16.msra.mxu0 %v2933
        %2953 = vmatprep.subr.bf16.mxu0 0
        %2954 = vmatpush1.bf16.msra.mxu0 %v2934
        %2955 = vmatprep.subr.bf16.mxu0 0
        %2956 = vmatpush1.bf16.msra.mxu0 %v2935
        %2957 = vmatprep.subr.bf16.mxu0 0
        %2958 = vmatpush1.bf16.msra.mxu0 %v2936
        %2959 = vmatprep.subr.bf16.mxu0 0
        %2960 = vmatpush1.bf16.msra.mxu0 %v2937
        %2961 = vmatprep.subr.bf16.mxu0 0
        %2962 = vmatpush1.bf16.msra.mxu0 %v2938
        %2963 = vmatprep.subr.bf16.mxu0 0
        %2964 = vmatpush1.bf16.msra.mxu0 0
        %2965 = vmatprep.subr.bf16.mxu0 0
        %2966 = vmatpush1.bf16.msra.mxu0 0
        %2967 = vmatprep.subr.bf16.mxu0 0
        %2968 = vmatpush1.bf16.msra.mxu0 0
        %2969 = vmatprep.subr.bf16.mxu0 0
        %2970 = vmatpush1.bf16.msra.mxu0 0
        %2971 = vmatprep.subr.bf16.mxu0 0
        %2972 = vmatpush1.bf16.msra.mxu0 0
        %2973 = vmatprep.subr.bf16.mxu0 0
        %2974 = vmatpush1.bf16.msra.mxu0 0
        %2975 = vmatprep.subr.bf16.mxu0 0
        %2976 = vmatpush1.bf16.msra.mxu0 0
        %2977 = vmatprep.subr.bf16.mxu0 0
        %2978 = vmatpush1.bf16.msra.mxu0 0
        %2979 = vmatprep.mubr.bf16.mxu0 0
        %2980 = vmatmul.mubr.bf16.gmra.mrb[0].mxu0 %v2880
        %v2981 = vpop.f32.mrb[0].mxu0
        %v2982 = vadd.f32 0.0, %v2981
        %v2983 = vpop.f32.mrb[0].mxu0
        %v2984 = vpop.f32.mrb[0].mxu0
        %v2985 = vadd.f32 0.0, %v2984
        %v2986 = vpop.f32.mrb[0].mxu0
        %2987 = vmatprep.mubr.bf16.mxu0 0
        %2988 = vmatmul.mubr.bf16.gmra.mrb[0].mxu0 %v2881
        %v2989 = vpop.f32.mrb[0].mxu0
        %v2990 = vadd.f32 0.0, %v2989
        %v2991 = vpop.f32.mrb[0].mxu0
        %v2992 = vpop.f32.mrb[0].mxu0
        %v2993 = vadd.f32 0.0, %v2992
        %v2994 = vpop.f32.mrb[0].mxu0
        %2995 = vdwg.mxu0
        %v2996 = vadd.f32 %v2858, %v2982
        %v2997 = vadd.f32 %v2861, %v2985
        %v2998 = vadd.f32 %v2866, %v2990
        %v2999 = vadd.f32 %v2869, %v2993
        %s3000 = scalar_lea.vmem [#allocation2], 10
        %v3001 = vld [vmem:[%s3000] ss:$2 sm:$0xff]
        %s3002 = scalar_lea.vmem [#allocation2], 26
        %v3003 = vld [vmem:[%s3002] ss:$2 sm:$0xff]
        %s3004 = scalar_lea.vmem [#allocation2], 42
        %v3005 = vld [vmem:[%s3004] ss:$2 sm:$0xff]
        %s3006 = scalar_lea.vmem [#allocation2], 58
        %v3007 = vld [vmem:[%s3006] ss:$2 sm:$0x3]
        %v3008 = vpack.c.bf16 %v3003, %v3001
        %v3009 = vpack.c.bf16 %v3007, %v3005
        %s3010 = scalar_lea.vmem [#allocation4], 192
        %v3011 = vld [vmem:[%s3010] sm:$0xf]
        %v3012 = vld [vmem:[%s3010 + $0x4] sm:$0xf]
        %v3013 = vld [vmem:[%s3010 + $0x8] sm:$0xf]
        %v3014 = vld [vmem:[%s3010 + $0xc] sm:$0xf]
        %v3015 = vld [vmem:[%s3010 + $0x10] sm:$0xf]
        %v3016 = vld [vmem:[%s3010 + $0x14] sm:$0xf]
        %v3017 = vld [vmem:[%s3010 + $0x18] sm:$0xf]
        %v3018 = vld [vmem:[%s3010 + $0x1c] sm:$0xf]
        %v3019 = vld [vmem:[%s3010 + $0x20] sm:$0xf]
        %v3020 = vld [vmem:[%s3010 + $0x24] sm:$0xf]
        %v3021 = vld [vmem:[%s3010 + $0x28] sm:$0xf]
        %v3022 = vld [vmem:[%s3010 + $0x2c] sm:$0xf]
        %v3023 = vld [vmem:[%s3010 + $0x30] sm:$0xf]
        %v3024 = vld [vmem:[%s3010 + $0x34] sm:$0xf]
        %v3025 = vld [vmem:[%s3010 + $0x38] sm:$0xf]
        %v3026 = vld [vmem:[%s3010 + $0x3c] sm:$0xf]
        %v3043 = vunpack.c.l.b16 %v3011
        %v3044 = vunpack.c.l.b16 %v3012
        %v3045 = vunpack.c.l.b16 %v3013
        %v3046 = vunpack.c.l.b16 %v3014
        %v3047 = vunpack.c.l.b16 %v3015
        %v3048 = vunpack.c.l.b16 %v3016
        %v3049 = vunpack.c.l.b16 %v3017
        %v3050 = vunpack.c.l.b16 %v3018
        %v3051 = vunpack.c.l.b16 %v3019
        %v3052 = vunpack.c.l.b16 %v3020
        %v3053 = vunpack.c.l.b16 %v3021
        %v3054 = vunpack.c.l.b16 %v3022
        %v3055 = vunpack.c.l.b16 %v3023
        %v3056 = vunpack.c.l.b16 %v3024
        %v3057 = vunpack.c.l.b16 %v3025
        %v3058 = vunpack.c.l.b16 %v3026
        %v3059 = vpack.c.b16 %v3044, %v3043
        %v3060 = vpack.c.b16 %v3046, %v3045
        %v3061 = vpack.c.b16 %v3048, %v3047
        %v3062 = vpack.c.b16 %v3050, %v3049
        %v3063 = vpack.c.b16 %v3052, %v3051
        %v3064 = vpack.c.b16 %v3054, %v3053
        %v3065 = vpack.c.b16 %v3056, %v3055
        %v3066 = vpack.c.b16 %v3058, %v3057
        %3075 = vmatprep.subr.bf16.mxu0 0
        %3076 = vmatpush1.bf16.msra.mxu0 %v3059
        %3077 = vmatprep.subr.bf16.mxu0 0
        %3078 = vmatpush1.bf16.msra.mxu0 %v3060
        %3079 = vmatprep.subr.bf16.mxu0 0
        %3080 = vmatpush1.bf16.msra.mxu0 %v3061
        %3081 = vmatprep.subr.bf16.mxu0 0
        %3082 = vmatpush1.bf16.msra.mxu0 %v3062
        %3083 = vmatprep.subr.bf16.mxu0 0
        %3084 = vmatpush1.bf16.msra.mxu0 %v3063
        %3085 = vmatprep.subr.bf16.mxu0 0
        %3086 = vmatpush1.bf16.msra.mxu0 %v3064
        %3087 = vmatprep.subr.bf16.mxu0 0
        %3088 = vmatpush1.bf16.msra.mxu0 %v3065
        %3089 = vmatprep.subr.bf16.mxu0 0
        %3090 = vmatpush1.bf16.msra.mxu0 %v3066
        %3091 = vmatprep.subr.bf16.mxu0 0
        %3092 = vmatpush1.bf16.msra.mxu0 0
        %3093 = vmatprep.subr.bf16.mxu0 0
        %3094 = vmatpush1.bf16.msra.mxu0 0
        %3095 = vmatprep.subr.bf16.mxu0 0
        %3096 = vmatpush1.bf16.msra.mxu0 0
        %3097 = vmatprep.subr.bf16.mxu0 0
        %3098 = vmatpush1.bf16.msra.mxu0 0
        %3099 = vmatprep.subr.bf16.mxu0 0
        %3100 = vmatpush1.bf16.msra.mxu0 0
        %3101 = vmatprep.subr.bf16.mxu0 0
        %3102 = vmatpush1.bf16.msra.mxu0 0
        %3103 = vmatprep.subr.bf16.mxu0 0
        %3104 = vmatpush1.bf16.msra.mxu0 0
        %3105 = vmatprep.subr.bf16.mxu0 0
        %3106 = vmatpush1.bf16.msra.mxu0 0
        %3107 = vmatprep.mubr.bf16.mxu0 0
        %3108 = vmatmul.mubr.bf16.gmra.mrb[0].mxu0 %v3008
        %v3109 = vpop.f32.mrb[0].mxu0
        %v3110 = vadd.f32 0.0, %v3109
        %v3111 = vpop.f32.mrb[0].mxu0
        %v3112 = vpop.f32.mrb[0].mxu0
        %v3113 = vadd.f32 0.0, %v3112
        %v3114 = vpop.f32.mrb[0].mxu0
        %3115 = vmatprep.mubr.bf16.mxu0 0
        %3116 = vmatmul.mubr.bf16.gmra.mrb[0].mxu0 %v3009
        %v3117 = vpop.f32.mrb[0].mxu0
        %v3118 = vadd.f32 0.0, %v3117
        %v3119 = vpop.f32.mrb[0].mxu0
        %v3120 = vpop.f32.mrb[0].mxu0
        %v3121 = vadd.f32 0.0, %v3120
        %v3122 = vpop.f32.mrb[0].mxu0
        %3123 = vdwg.mxu0
        %v3124 = vadd.f32 %v2996, %v3110
        %v3125 = vadd.f32 %v2997, %v3113
        %v3126 = vadd.f32 %v2998, %v3118
        %v3127 = vadd.f32 %v2999, %v3121
        %s3128 = scalar_lea.vmem [#allocation2], 11
        %v3129 = vld [vmem:[%s3128] ss:$2 sm:$0xff]
        %s3130 = scalar_lea.vmem [#allocation2], 27
        %v3131 = vld [vmem:[%s3130] ss:$2 sm:$0xff]
        %s3132 = scalar_lea.vmem [#allocation2], 43
        %v3133 = vld [vmem:[%s3132] ss:$2 sm:$0xff]
        %s3134 = scalar_lea.vmem [#allocation2], 59
        %v3135 = vld [vmem:[%s3134] ss:$2 sm:$0x3]
        %v3136 = vpack.c.bf16 %v3131, %v3129
        %v3137 = vpack.c.bf16 %v3135, %v3133
        %s3138 = scalar_lea.vmem [#allocation4], 256
        %v3139 = vld [vmem:[%s3138] sm:$0xf]
        %v3140 = vld [vmem:[%s3138 + $0x4] sm:$0xf]
        %v3141 = vld [vmem:[%s3138 + $0x8] sm:$0xf]
        %v3142 = vld [vmem:[%s3138 + $0xc] sm:$0xf]
        %v3143 = vld [vmem:[%s3138 + $0x10] sm:$0xf]
        %v3144 = vld [vmem:[%s3138 + $0x14] sm:$0xf]
        %v3145 = vld [vmem:[%s3138 + $0x18] sm:$0xf]
        %v3146 = vld [vmem:[%s3138 + $0x1c] sm:$0xf]
        %v3147 = vld [vmem:[%s3138 + $0x20] sm:$0xf]
        %v3148 = vld [vmem:[%s3138 + $0x24] sm:$0xf]
        %v3149 = vld [vmem:[%s3138 + $0x28] sm:$0xf]
        %v3150 = vld [vmem:[%s3138 + $0x2c] sm:$0xf]
        %v3151 = vld [vmem:[%s3138 + $0x30] sm:$0xf]
        %v3152 = vld [vmem:[%s3138 + $0x34] sm:$0xf]
        %v3153 = vld [vmem:[%s3138 + $0x38] sm:$0xf]
        %v3154 = vld [vmem:[%s3138 + $0x3c] sm:$0xf]
        %v3171 = vunpack.c.l.b16 %v3139
        %v3172 = vunpack.c.l.b16 %v3140
        %v3173 = vunpack.c.l.b16 %v3141
        %v3174 = vunpack.c.l.b16 %v3142
        %v3175 = vunpack.c.l.b16 %v3143
        %v3176 = vunpack.c.l.b16 %v3144
        %v3177 = vunpack.c.l.b16 %v3145
        %v3178 = vunpack.c.l.b16 %v3146
        %v3179 = vunpack.c.l.b16 %v3147
        %v3180 = vunpack.c.l.b16 %v3148
        %v3181 = vunpack.c.l.b16 %v3149
        %v3182 = vunpack.c.l.b16 %v3150
        %v3183 = vunpack.c.l.b16 %v3151
        %v3184 = vunpack.c.l.b16 %v3152
        %v3185 = vunpack.c.l.b16 %v3153
        %v3186 = vunpack.c.l.b16 %v3154
        %v3187 = vpack.c.b16 %v3172, %v3171
        %v3188 = vpack.c.b16 %v3174, %v3173
        %v3189 = vpack.c.b16 %v3176, %v3175
        %v3190 = vpack.c.b16 %v3178, %v3177
        %v3191 = vpack.c.b16 %v3180, %v3179
        %v3192 = vpack.c.b16 %v3182, %v3181
        %v3193 = vpack.c.b16 %v3184, %v3183
        %v3194 = vpack.c.b16 %v3186, %v3185
        %3203 = vmatprep.subr.bf16.mxu0 0
        %3204 = vmatpush1.bf16.msra.mxu0 %v3187
        %3205 = vmatprep.subr.bf16.mxu0 0
        %3206 = vmatpush1.bf16.msra.mxu0 %v3188
        %3207 = vmatprep.subr.bf16.mxu0 0
        %3208 = vmatpush1.bf16.msra.mxu0 %v3189
        %3209 = vmatprep.subr.bf16.mxu0 0
        %3210 = vmatpush1.bf16.msra.mxu0 %v3190
        %3211 = vmatprep.subr.bf16.mxu0 0
        %3212 = vmatpush1.bf16.msra.mxu0 %v3191
        %3213 = vmatprep.subr.bf16.mxu0 0
        %3214 = vmatpush1.bf16.msra.mxu0 %v3192
        %3215 = vmatprep.subr.bf16.mxu0 0
        %3216 = vmatpush1.bf16.msra.mxu0 %v3193
        %3217 = vmatprep.subr.bf16.mxu0 0
        %3218 = vmatpush1.bf16.msra.mxu0 %v3194
        %3219 = vmatprep.subr.bf16.mxu0 0
        %3220 = vmatpush1.bf16.msra.mxu0 0
        %3221 = vmatprep.subr.bf16.mxu0 0
        %3222 = vmatpush1.bf16.msra.mxu0 0
        %3223 = vmatprep.subr.bf16.mxu0 0
        %3224 = vmatpush1.bf16.msra.mxu0 0
        %3225 = vmatprep.subr.bf16.mxu0 0
        %3226 = vmatpush1.bf16.msra.mxu0 0
        %3227 = vmatprep.subr.bf16.mxu0 0
        %3228 = vmatpush1.bf16.msra.mxu0 0
        %3229 = vmatprep.subr.bf16.mxu0 0
        %3230 = vmatpush1.bf16.msra.mxu0 0
        %3231 = vmatprep.subr.bf16.mxu0 0
        %3232 = vmatpush1.bf16.msra.mxu0 0
        %3233 = vmatprep.subr.bf16.mxu0 0
        %3234 = vmatpush1.bf16.msra.mxu0 0
        %3235 = vmatprep.mubr.bf16.mxu0 0
        %3236 = vmatmul.mubr.bf16.gmra.mrb[0].mxu0 %v3136
        %v3237 = vpop.f32.mrb[0].mxu0
        %v3238 = vadd.f32 0.0, %v3237
        %v3239 = vpop.f32.mrb[0].mxu0
        %v3240 = vpop.f32.mrb[0].mxu0
        %v3241 = vadd.f32 0.0, %v3240
        %v3242 = vpop.f32.mrb[0].mxu0
        %3243 = vmatprep.mubr.bf16.mxu0 0
        %3244 = vmatmul.mubr.bf16.gmra.mrb[0].mxu0 %v3137
        %v3245 = vpop.f32.mrb[0].mxu0
        %v3246 = vadd.f32 0.0, %v3245
        %v3247 = vpop.f32.mrb[0].mxu0
        %v3248 = vpop.f32.mrb[0].mxu0
        %v3249 = vadd.f32 0.0, %v3248
        %v3250 = vpop.f32.mrb[0].mxu0
        %3251 = vdwg.mxu0
        %v3252 = vadd.f32 %v3124, %v3238
        %v3253 = vadd.f32 %v3125, %v3241
        %v3254 = vadd.f32 %v3126, %v3246
        %v3255 = vadd.f32 %v3127, %v3249
        %s3256 = scalar_lea.vmem [#allocation2], 12
        %v3257 = vld [vmem:[%s3256] ss:$2 sm:$0xff]
        %s3258 = scalar_lea.vmem [#allocation2], 28
        %v3259 = vld [vmem:[%s3258] ss:$2 sm:$0xff]
        %s3260 = scalar_lea.vmem [#allocation2], 44
        %v3261 = vld [vmem:[%s3260] ss:$2 sm:$0xff]
        %s3262 = scalar_lea.vmem [#allocation2], 60
        %v3263 = vld [vmem:[%s3262] ss:$2 sm:$0x3]
        %v3264 = vpack.c.bf16 %v3259, %v3257
        %v3265 = vpack.c.bf16 %v3263, %v3261
        %s3266 = scalar_lea.vmem [#allocation4], 320
        %v3267 = vld [vmem:[%s3266] sm:$0xf]
        %v3268 = vld [vmem:[%s3266 + $0x4] sm:$0xf]
        %v3269 = vld [vmem:[%s3266 + $0x8] sm:$0xf]
        %v3270 = vld [vmem:[%s3266 + $0xc] sm:$0xf]
        %v3271 = vld [vmem:[%s3266 + $0x10] sm:$0xf]
        %v3272 = vld [vmem:[%s3266 + $0x14] sm:$0xf]
        %v3273 = vld [vmem:[%s3266 + $0x18] sm:$0xf]
        %v3274 = vld [vmem:[%s3266 + $0x1c] sm:$0xf]
        %v3275 = vld [vmem:[%s3266 + $0x20] sm:$0xf]
        %v3276 = vld [vmem:[%s3266 + $0x24] sm:$0xf]
        %v3277 = vld [vmem:[%s3266 + $0x28] sm:$0xf]
        %v3278 = vld [vmem:[%s3266 + $0x2c] sm:$0xf]
        %v3279 = vld [vmem:[%s3266 + $0x30] sm:$0xf]
        %v3280 = vld [vmem:[%s3266 + $0x34] sm:$0xf]
        %v3281 = vld [vmem:[%s3266 + $0x38] sm:$0xf]
        %v3282 = vld [vmem:[%s3266 + $0x3c] sm:$0xf]
        %v3299 = vunpack.c.l.b16 %v3267
        %v3300 = vunpack.c.l.b16 %v3268
        %v3301 = vunpack.c.l.b16 %v3269
        %v3302 = vunpack.c.l.b16 %v3270
        %v3303 = vunpack.c.l.b16 %v3271
        %v3304 = vunpack.c.l.b16 %v3272
        %v3305 = vunpack.c.l.b16 %v3273
        %v3306 = vunpack.c.l.b16 %v3274
        %v3307 = vunpack.c.l.b16 %v3275
        %v3308 = vunpack.c.l.b16 %v3276
        %v3309 = vunpack.c.l.b16 %v3277
        %v3310 = vunpack.c.l.b16 %v3278
        %v3311 = vunpack.c.l.b16 %v3279
        %v3312 = vunpack.c.l.b16 %v3280
        %v3313 = vunpack.c.l.b16 %v3281
        %v3314 = vunpack.c.l.b16 %v3282
        %v3315 = vpack.c.b16 %v3300, %v3299
        %v3316 = vpack.c.b16 %v3302, %v3301
        %v3317 = vpack.c.b16 %v3304, %v3303
        %v3318 = vpack.c.b16 %v3306, %v3305
        %v3319 = vpack.c.b16 %v3308, %v3307
        %v3320 = vpack.c.b16 %v3310, %v3309
        %v3321 = vpack.c.b16 %v3312, %v3311
        %v3322 = vpack.c.b16 %v3314, %v3313
        %3331 = vmatprep.subr.bf16.mxu0 0
        %3332 = vmatpush1.bf16.msra.mxu0 %v3315
        %3333 = vmatprep.subr.bf16.mxu0 0
        %3334 = vmatpush1.bf16.msra.mxu0 %v3316
        %3335 = vmatprep.subr.bf16.mxu0 0
        %3336 = vmatpush1.bf16.msra.mxu0 %v3317
        %3337 = vmatprep.subr.bf16.mxu0 0
        %3338 = vmatpush1.bf16.msra.mxu0 %v3318
        %3339 = vmatprep.subr.bf16.mxu0 0
        %3340 = vmatpush1.bf16.msra.mxu0 %v3319
        %3341 = vmatprep.subr.bf16.mxu0 0
        %3342 = vmatpush1.bf16.msra.mxu0 %v3320
        %3343 = vmatprep.subr.bf16.mxu0 0
        %3344 = vmatpush1.bf16.msra.mxu0 %v3321
        %3345 = vmatprep.subr.bf16.mxu0 0
        %3346 = vmatpush1.bf16.msra.mxu0 %v3322
        %3347 = vmatprep.subr.bf16.mxu0 0
        %3348 = vmatpush1.bf16.msra.mxu0 0
        %3349 = vmatprep.subr.bf16.mxu0 0
        %3350 = vmatpush1.bf16.msra.mxu0 0
        %3351 = vmatprep.subr.bf16.mxu0 0
        %3352 = vmatpush1.bf16.msra.mxu0 0
        %3353 = vmatprep.subr.bf16.mxu0 0
        %3354 = vmatpush1.bf16.msra.mxu0 0
        %3355 = vmatprep.subr.bf16.mxu0 0
        %3356 = vmatpush1.bf16.msra.mxu0 0
        %3357 = vmatprep.subr.bf16.mxu0 0
        %3358 = vmatpush1.bf16.msra.mxu0 0
        %3359 = vmatprep.subr.bf16.mxu0 0
        %3360 = vmatpush1.bf16.msra.mxu0 0
        %3361 = vmatprep.subr.bf16.mxu0 0
        %3362 = vmatpush1.bf16.msra.mxu0 0
        %3363 = vmatprep.mubr.bf16.mxu0 0
        %3364 = vmatmul.mubr.bf16.gmra.mrb[0].mxu0 %v3264
        %v3365 = vpop.f32.mrb[0].mxu0
        %v3366 = vadd.f32 0.0, %v3365
        %v3367 = vpop.f32.mrb[0].mxu0
        %v3368 = vpop.f32.mrb[0].mxu0
        %v3369 = vadd.f32 0.0, %v3368
        %v3370 = vpop.f32.mrb[0].mxu0
        %3371 = vmatprep.mubr.bf16.mxu0 0
        %3372 = vmatmul.mubr.bf16.gmra.mrb[0].mxu0 %v3265
        %v3373 = vpop.f32.mrb[0].mxu0
        %v3374 = vadd.f32 0.0, %v3373
        %v3375 = vpop.f32.mrb[0].mxu0
        %v3376 = vpop.f32.mrb[0].mxu0
        %v3377 = vadd.f32 0.0, %v3376
        %v3378 = vpop.f32.mrb[0].mxu0
        %3379 = vdwg.mxu0
        %v3380 = vadd.f32 %v3252, %v3366
        %v3381 = vadd.f32 %v3253, %v3369
        %v3382 = vadd.f32 %v3254, %v3374
        %v3383 = vadd.f32 %v3255, %v3377
        %s3384 = scalar_lea.vmem [#allocation2], 13
        %v3385 = vld [vmem:[%s3384] ss:$2 sm:$0xff]
        %s3386 = scalar_lea.vmem [#allocation2], 29
        %v3387 = vld [vmem:[%s3386] ss:$2 sm:$0xff]
        %s3388 = scalar_lea.vmem [#allocation2], 45
        %v3389 = vld [vmem:[%s3388] ss:$2 sm:$0xff]
        %s3390 = scalar_lea.vmem [#allocation2], 61
        %v3391 = vld [vmem:[%s3390] ss:$2 sm:$0x3]
        %v3392 = vpack.c.bf16 %v3387, %v3385
        %v3393 = vpack.c.bf16 %v3391, %v3389
        %s3394 = scalar_lea.vmem [#allocation4], 384
        %v3395 = vld [vmem:[%s3394] sm:$0xf]
        %v3396 = vld [vmem:[%s3394 + $0x4] sm:$0xf]
        %v3397 = vld [vmem:[%s3394 + $0x8] sm:$0xf]
        %v3398 = vld [vmem:[%s3394 + $0xc] sm:$0xf]
        %v3399 = vld [vmem:[%s3394 + $0x10] sm:$0xf]
        %v3400 = vld [vmem:[%s3394 + $0x14] sm:$0xf]
        %v3401 = vld [vmem:[%s3394 + $0x18] sm:$0xf]
        %v3402 = vld [vmem:[%s3394 + $0x1c] sm:$0xf]
        %v3403 = vld [vmem:[%s3394 + $0x20] sm:$0xf]
        %v3404 = vld [vmem:[%s3394 + $0x24] sm:$0xf]
        %v3405 = vld [vmem:[%s3394 + $0x28] sm:$0xf]
        %v3406 = vld [vmem:[%s3394 + $0x2c] sm:$0xf]
        %v3407 = vld [vmem:[%s3394 + $0x30] sm:$0xf]
        %v3408 = vld [vmem:[%s3394 + $0x34] sm:$0xf]
        %v3409 = vld [vmem:[%s3394 + $0x38] sm:$0xf]
        %v3410 = vld [vmem:[%s3394 + $0x3c] sm:$0xf]
        %v3427 = vunpack.c.l.b16 %v3395
        %v3428 = vunpack.c.l.b16 %v3396
        %v3429 = vunpack.c.l.b16 %v3397
        %v3430 = vunpack.c.l.b16 %v3398
        %v3431 = vunpack.c.l.b16 %v3399
        %v3432 = vunpack.c.l.b16 %v3400
        %v3433 = vunpack.c.l.b16 %v3401
        %v3434 = vunpack.c.l.b16 %v3402
        %v3435 = vunpack.c.l.b16 %v3403
        %v3436 = vunpack.c.l.b16 %v3404
        %v3437 = vunpack.c.l.b16 %v3405
        %v3438 = vunpack.c.l.b16 %v3406
        %v3439 = vunpack.c.l.b16 %v3407
        %v3440 = vunpack.c.l.b16 %v3408
        %v3441 = vunpack.c.l.b16 %v3409
        %v3442 = vunpack.c.l.b16 %v3410
        %v3443 = vpack.c.b16 %v3428, %v3427
        %v3444 = vpack.c.b16 %v3430, %v3429
        %v3445 = vpack.c.b16 %v3432, %v3431
        %v3446 = vpack.c.b16 %v3434, %v3433
        %v3447 = vpack.c.b16 %v3436, %v3435
        %v3448 = vpack.c.b16 %v3438, %v3437
        %v3449 = vpack.c.b16 %v3440, %v3439
        %v3450 = vpack.c.b16 %v3442, %v3441
        %3459 = vmatprep.subr.bf16.mxu0 0
        %3460 = vmatpush1.bf16.msra.mxu0 %v3443
        %3461 = vmatprep.subr.bf16.mxu0 0
        %3462 = vmatpush1.bf16.msra.mxu0 %v3444
        %3463 = vmatprep.subr.bf16.mxu0 0
        %3464 = vmatpush1.bf16.msra.mxu0 %v3445
        %3465 = vmatprep.subr.bf16.mxu0 0
        %3466 = vmatpush1.bf16.msra.mxu0 %v3446
        %3467 = vmatprep.subr.bf16.mxu0 0
        %3468 = vmatpush1.bf16.msra.mxu0 %v3447
        %3469 = vmatprep.subr.bf16.mxu0 0
        %3470 = vmatpush1.bf16.msra.mxu0 %v3448
        %3471 = vmatprep.subr.bf16.mxu0 0
        %3472 = vmatpush1.bf16.msra.mxu0 %v3449
        %3473 = vmatprep.subr.bf16.mxu0 0
        %3474 = vmatpush1.bf16.msra.mxu0 %v3450
        %3475 = vmatprep.subr.bf16.mxu0 0
        %3476 = vmatpush1.bf16.msra.mxu0 0
        %3477 = vmatprep.subr.bf16.mxu0 0
        %3478 = vmatpush1.bf16.msra.mxu0 0
        %3479 = vmatprep.subr.bf16.mxu0 0
        %3480 = vmatpush1.bf16.msra.mxu0 0
        %3481 = vmatprep.subr.bf16.mxu0 0
        %3482 = vmatpush1.bf16.msra.mxu0 0
        %3483 = vmatprep.subr.bf16.mxu0 0
        %3484 = vmatpush1.bf16.msra.mxu0 0
        %3485 = vmatprep.subr.bf16.mxu0 0
        %3486 = vmatpush1.bf16.msra.mxu0 0
        %3487 = vmatprep.subr.bf16.mxu0 0
        %3488 = vmatpush1.bf16.msra.mxu0 0
        %3489 = vmatprep.subr.bf16.mxu0 0
        %3490 = vmatpush1.bf16.msra.mxu0 0
        %3491 = vmatprep.mubr.bf16.mxu0 0
        %3492 = vmatmul.mubr.bf16.gmra.mrb[0].mxu0 %v3392
        %v3493 = vpop.f32.mrb[0].mxu0
        %v3494 = vadd.f32 0.0, %v3493
        %v3495 = vpop.f32.mrb[0].mxu0
        %v3496 = vpop.f32.mrb[0].mxu0
        %v3497 = vadd.f32 0.0, %v3496
        %v3498 = vpop.f32.mrb[0].mxu0
        %3499 = vmatprep.mubr.bf16.mxu0 0
        %3500 = vmatmul.mubr.bf16.gmra.mrb[0].mxu0 %v3393
        %v3501 = vpop.f32.mrb[0].mxu0
        %v3502 = vadd.f32 0.0, %v3501
        %v3503 = vpop.f32.mrb[0].mxu0
        %v3504 = vpop.f32.mrb[0].mxu0
        %v3505 = vadd.f32 0.0, %v3504
        %v3506 = vpop.f32.mrb[0].mxu0
        %3507 = vdwg.mxu0
        %v3508 = vadd.f32 %v3380, %v3494
        %v3509 = vadd.f32 %v3381, %v3497
        %v3510 = vadd.f32 %v3382, %v3502
        %v3511 = vadd.f32 %v3383, %v3505
        %s3512 = scalar_lea.vmem [#allocation2], 14
        %v3513 = vld [vmem:[%s3512] ss:$2 sm:$0xff]
        %s3514 = scalar_lea.vmem [#allocation2], 30
        %v3515 = vld [vmem:[%s3514] ss:$2 sm:$0xff]
        %s3516 = scalar_lea.vmem [#allocation2], 46
        %v3517 = vld [vmem:[%s3516] ss:$2 sm:$0xff]
        %s3518 = scalar_lea.vmem [#allocation2], 62
        %v3519 = vld [vmem:[%s3518] ss:$2 sm:$0x3]
        %v3520 = vpack.c.bf16 %v3515, %v3513
        %v3521 = vpack.c.bf16 %v3519, %v3517
        %s3522 = scalar_lea.vmem [#allocation4], 448
        %v3523 = vld [vmem:[%s3522] sm:$0xf]
        %v3524 = vld [vmem:[%s3522 + $0x4] sm:$0xf]
        %v3525 = vld [vmem:[%s3522 + $0x8] sm:$0xf]
        %v3526 = vld [vmem:[%s3522 + $0xc] sm:$0xf]
        %v3527 = vld [vmem:[%s3522 + $0x10] sm:$0xf]
        %v3528 = vld [vmem:[%s3522 + $0x14] sm:$0xf]
        %v3529 = vld [vmem:[%s3522 + $0x18] sm:$0xf]
        %v3530 = vld [vmem:[%s3522 + $0x1c] sm:$0xf]
        %v3531 = vld [vmem:[%s3522 + $0x20] sm:$0xf]
        %v3532 = vld [vmem:[%s3522 + $0x24] sm:$0xf]
        %v3533 = vld [vmem:[%s3522 + $0x28] sm:$0xf]
        %v3534 = vld [vmem:[%s3522 + $0x2c] sm:$0xf]
        %v3535 = vld [vmem:[%s3522 + $0x30] sm:$0xf]
        %v3536 = vld [vmem:[%s3522 + $0x34] sm:$0xf]
        %v3537 = vld [vmem:[%s3522 + $0x38] sm:$0xf]
        %v3538 = vld [vmem:[%s3522 + $0x3c] sm:$0xf]
        %v3555 = vunpack.c.l.b16 %v3523
        %v3556 = vunpack.c.l.b16 %v3524
        %v3557 = vunpack.c.l.b16 %v3525
        %v3558 = vunpack.c.l.b16 %v3526
        %v3559 = vunpack.c.l.b16 %v3527
        %v3560 = vunpack.c.l.b16 %v3528
        %v3561 = vunpack.c.l.b16 %v3529
        %v3562 = vunpack.c.l.b16 %v3530
        %v3563 = vunpack.c.l.b16 %v3531
        %v3564 = vunpack.c.l.b16 %v3532
        %v3565 = vunpack.c.l.b16 %v3533
        %v3566 = vunpack.c.l.b16 %v3534
        %v3567 = vunpack.c.l.b16 %v3535
        %v3568 = vunpack.c.l.b16 %v3536
        %v3569 = vunpack.c.l.b16 %v3537
        %v3570 = vunpack.c.l.b16 %v3538
        %v3571 = vpack.c.b16 %v3556, %v3555
        %v3572 = vpack.c.b16 %v3558, %v3557
        %v3573 = vpack.c.b16 %v3560, %v3559
        %v3574 = vpack.c.b16 %v3562, %v3561
        %v3575 = vpack.c.b16 %v3564, %v3563
        %v3576 = vpack.c.b16 %v3566, %v3565
        %v3577 = vpack.c.b16 %v3568, %v3567
        %v3578 = vpack.c.b16 %v3570, %v3569
        %3587 = vmatprep.subr.bf16.mxu0 0
        %3588 = vmatpush1.bf16.msra.mxu0 %v3571
        %3589 = vmatprep.subr.bf16.mxu0 0
        %3590 = vmatpush1.bf16.msra.mxu0 %v3572
        %3591 = vmatprep.subr.bf16.mxu0 0
        %3592 = vmatpush1.bf16.msra.mxu0 %v3573
        %3593 = vmatprep.subr.bf16.mxu0 0
        %3594 = vmatpush1.bf16.msra.mxu0 %v3574
        %3595 = vmatprep.subr.bf16.mxu0 0
        %3596 = vmatpush1.bf16.msra.mxu0 %v3575
        %3597 = vmatprep.subr.bf16.mxu0 0
        %3598 = vmatpush1.bf16.msra.mxu0 %v3576
        %3599 = vmatprep.subr.bf16.mxu0 0
        %3600 = vmatpush1.bf16.msra.mxu0 %v3577
        %3601 = vmatprep.subr.bf16.mxu0 0
        %3602 = vmatpush1.bf16.msra.mxu0 %v3578
        %3603 = vmatprep.subr.bf16.mxu0 0
        %3604 = vmatpush1.bf16.msra.mxu0 0
        %3605 = vmatprep.subr.bf16.mxu0 0
        %3606 = vmatpush1.bf16.msra.mxu0 0
        %3607 = vmatprep.subr.bf16.mxu0 0
        %3608 = vmatpush1.bf16.msra.mxu0 0
        %3609 = vmatprep.subr.bf16.mxu0 0
        %3610 = vmatpush1.bf16.msra.mxu0 0
        %3611 = vmatprep.subr.bf16.mxu0 0
        %3612 = vmatpush1.bf16.msra.mxu0 0
        %3613 = vmatprep.subr.bf16.mxu0 0
        %3614 = vmatpush1.bf16.msra.mxu0 0
        %3615 = vmatprep.subr.bf16.mxu0 0
        %3616 = vmatpush1.bf16.msra.mxu0 0
        %3617 = vmatprep.subr.bf16.mxu0 0
        %3618 = vmatpush1.bf16.msra.mxu0 0
        %3619 = vmatprep.mubr.bf16.mxu0 0
        %3620 = vmatmul.mubr.bf16.gmra.mrb[0].mxu0 %v3520
        %v3621 = vpop.f32.mrb[0].mxu0
        %v3622 = vadd.f32 0.0, %v3621
        %v3623 = vpop.f32.mrb[0].mxu0
        %v3624 = vpop.f32.mrb[0].mxu0
        %v3625 = vadd.f32 0.0, %v3624
        %v3626 = vpop.f32.mrb[0].mxu0
        %3627 = vmatprep.mubr.bf16.mxu0 0
        %3628 = vmatmul.mubr.bf16.gmra.mrb[0].mxu0 %v3521
        %v3629 = vpop.f32.mrb[0].mxu0
        %v3630 = vadd.f32 0.0, %v3629
        %v3631 = vpop.f32.mrb[0].mxu0
        %v3632 = vpop.f32.mrb[0].mxu0
        %v3633 = vadd.f32 0.0, %v3632
        %v3634 = vpop.f32.mrb[0].mxu0
        %3635 = vdwg.mxu0
        %v3636 = vadd.f32 %v3508, %v3622
        %v3637 = vadd.f32 %v3509, %v3625
        %v3638 = vadd.f32 %v3510, %v3630
        %v3639 = vadd.f32 %v3511, %v3633
        %s3640 = scalar_lea.vmem [#allocation2], 15
        %v3641 = vld [vmem:[%s3640] ss:$2 sm:$0xff]
        %s3642 = scalar_lea.vmem [#allocation2], 31
        %v3643 = vld [vmem:[%s3642] ss:$2 sm:$0xff]
        %s3644 = scalar_lea.vmem [#allocation2], 47
        %v3645 = vld [vmem:[%s3644] ss:$2 sm:$0xff]
        %s3646 = scalar_lea.vmem [#allocation2], 63
        %v3647 = vld [vmem:[%s3646] ss:$2 sm:$0x3]
        %v3648 = vpack.c.bf16 %v3643, %v3641
        %v3649 = vpack.c.bf16 %v3647, %v3645
        %s3650 = scalar_lea.vmem [#allocation4], 512
        %v3651 = vld [vmem:[%s3650] sm:$0xf]
        %v3652 = vld [vmem:[%s3650 + $0x4] sm:$0xf]
        %v3653 = vld [vmem:[%s3650 + $0x8] sm:$0xf]
        %v3654 = vld [vmem:[%s3650 + $0xc] sm:$0xf]
        %v3655 = vld [vmem:[%s3650 + $0x10] sm:$0xf]
        %v3656 = vld [vmem:[%s3650 + $0x14] sm:$0xf]
        %v3657 = vld [vmem:[%s3650 + $0x18] sm:$0xf]
        %v3658 = vld [vmem:[%s3650 + $0x1c] sm:$0xf]
        %v3659 = vld [vmem:[%s3650 + $0x20] sm:$0xf]
        %v3660 = vld [vmem:[%s3650 + $0x24] sm:$0xf]
        %v3661 = vld [vmem:[%s3650 + $0x28] sm:$0xf]
        %v3662 = vld [vmem:[%s3650 + $0x2c] sm:$0xf]
        %v3663 = vld [vmem:[%s3650 + $0x30] sm:$0xf]
        %v3664 = vld [vmem:[%s3650 + $0x34] sm:$0xf]
        %v3665 = vld [vmem:[%s3650 + $0x38] sm:$0xf]
        %v3666 = vld [vmem:[%s3650 + $0x3c] sm:$0xf]
        %v3683 = vunpack.c.l.b16 %v3651
        %v3684 = vunpack.c.l.b16 %v3652
        %v3685 = vunpack.c.l.b16 %v3653
        %v3686 = vunpack.c.l.b16 %v3654
        %v3687 = vunpack.c.l.b16 %v3655
        %v3688 = vunpack.c.l.b16 %v3656
        %v3689 = vunpack.c.l.b16 %v3657
        %v3690 = vunpack.c.l.b16 %v3658
        %v3691 = vunpack.c.l.b16 %v3659
        %v3692 = vunpack.c.l.b16 %v3660
        %v3693 = vunpack.c.l.b16 %v3661
        %v3694 = vunpack.c.l.b16 %v3662
        %v3695 = vunpack.c.l.b16 %v3663
        %v3696 = vunpack.c.l.b16 %v3664
        %v3697 = vunpack.c.l.b16 %v3665
        %v3698 = vunpack.c.l.b16 %v3666
        %v3699 = vpack.c.b16 %v3684, %v3683
        %v3700 = vpack.c.b16 %v3686, %v3685
        %v3701 = vpack.c.b16 %v3688, %v3687
        %v3702 = vpack.c.b16 %v3690, %v3689
        %v3703 = vpack.c.b16 %v3692, %v3691
        %v3704 = vpack.c.b16 %v3694, %v3693
        %v3705 = vpack.c.b16 %v3696, %v3695
        %v3706 = vpack.c.b16 %v3698, %v3697
        %3715 = vmatprep.subr.bf16.mxu0 0
        %3716 = vmatpush1.bf16.msra.mxu0 %v3699
        %3717 = vmatprep.subr.bf16.mxu0 0
        %3718 = vmatpush1.bf16.msra.mxu0 %v3700
        %3719 = vmatprep.subr.bf16.mxu0 0
        %3720 = vmatpush1.bf16.msra.mxu0 %v3701
        %3721 = vmatprep.subr.bf16.mxu0 0
        %3722 = vmatpush1.bf16.msra.mxu0 %v3702
        %3723 = vmatprep.subr.bf16.mxu0 0
        %3724 = vmatpush1.bf16.msra.mxu0 %v3703
        %3725 = vmatprep.subr.bf16.mxu0 0
        %3726 = vmatpush1.bf16.msra.mxu0 %v3704
        %3727 = vmatprep.subr.bf16.mxu0 0
        %3728 = vmatpush1.bf16.msra.mxu0 %v3705
        %3729 = vmatprep.subr.bf16.mxu0 0
        %3730 = vmatpush1.bf16.msra.mxu0 %v3706
        %3731 = vmatprep.subr.bf16.mxu0 0
        %3732 = vmatpush1.bf16.msra.mxu0 0
        %3733 = vmatprep.subr.bf16.mxu0 0
        %3734 = vmatpush1.bf16.msra.mxu0 0
        %3735 = vmatprep.subr.bf16.mxu0 0
        %3736 = vmatpush1.bf16.msra.mxu0 0
        %3737 = vmatprep.subr.bf16.mxu0 0
        %3738 = vmatpush1.bf16.msra.mxu0 0
        %3739 = vmatprep.subr.bf16.mxu0 0
        %3740 = vmatpush1.bf16.msra.mxu0 0
        %3741 = vmatprep.subr.bf16.mxu0 0
        %3742 = vmatpush1.bf16.msra.mxu0 0
        %3743 = vmatprep.subr.bf16.mxu0 0
        %3744 = vmatpush1.bf16.msra.mxu0 0
        %3745 = vmatprep.subr.bf16.mxu0 0
        %3746 = vmatpush1.bf16.msra.mxu0 0
        %3747 = vmatprep.mubr.bf16.mxu0 0
        %3748 = vmatmul.mubr.bf16.gmra.mrb[0].mxu0 %v3648
        %v3749 = vpop.f32.mrb[0].mxu0
        %v3750 = vadd.f32 0.0, %v3749
        %v3751 = vpop.f32.mrb[0].mxu0
        %v3752 = vpop.f32.mrb[0].mxu0
        %v3753 = vadd.f32 0.0, %v3752
        %v3754 = vpop.f32.mrb[0].mxu0
        %3755 = vmatprep.mubr.bf16.mxu0 0
        %3756 = vmatmul.mubr.bf16.gmra.mrb[0].mxu0 %v3649
        %v3757 = vpop.f32.mrb[0].mxu0
        %v3758 = vadd.f32 0.0, %v3757
        %v3759 = vpop.f32.mrb[0].mxu0
        %v3760 = vpop.f32.mrb[0].mxu0
        %v3761 = vadd.f32 0.0, %v3760
        %v3762 = vpop.f32.mrb[0].mxu0
        %3763 = vdwg.mxu0
        %v3764 = vadd.f32 %v3636, %v3750
        %v3765 = vadd.f32 %v3637, %v3753
        %v3766 = vadd.f32 %v3638, %v3758
        %v3767 = vadd.f32 %v3639, %v3761
        %s3768 = scalar_lea.vmem [#allocation2], 16
        %v3769 = vld [vmem:[%s3768] ss:$2 sm:$0xff]
        %s3770 = scalar_lea.vmem [#allocation2], 32
        %v3771 = vld [vmem:[%s3770] ss:$2 sm:$0xff]
        %s3772 = scalar_lea.vmem [#allocation2], 48
        %v3773 = vld [vmem:[%s3772] ss:$2 sm:$0xff]
        %s3774 = scalar_lea.vmem [#allocation2], 64
        %v3775 = vld [vmem:[%s3774] ss:$2 sm:$0x3]
        %v3776 = vpack.c.bf16 %v3771, %v3769
        %v3777 = vpack.c.bf16 %v3775, %v3773
        %s3778 = scalar_lea.vmem [#allocation4], 576
        %v3779 = vld [vmem:[%s3778] sm:$0xf]
        %v3780 = vld [vmem:[%s3778 + $0x4] sm:$0xf]
        %v3781 = vld [vmem:[%s3778 + $0x8] sm:$0xf]
        %v3782 = vld [vmem:[%s3778 + $0xc] sm:$0xf]
        %v3783 = vld [vmem:[%s3778 + $0x10] sm:$0xf]
        %v3784 = vld [vmem:[%s3778 + $0x14] sm:$0xf]
        %v3785 = vld [vmem:[%s3778 + $0x18] sm:$0xf]
        %v3786 = vld [vmem:[%s3778 + $0x1c] sm:$0xf]
        %v3787 = vld [vmem:[%s3778 + $0x20] sm:$0xf]
        %v3788 = vld [vmem:[%s3778 + $0x24] sm:$0xf]
        %v3789 = vld [vmem:[%s3778 + $0x28] sm:$0xf]
        %v3790 = vld [vmem:[%s3778 + $0x2c] sm:$0xf]
        %v3791 = vld [vmem:[%s3778 + $0x30] sm:$0xf]
        %v3792 = vld [vmem:[%s3778 + $0x34] sm:$0xf]
        %v3793 = vld [vmem:[%s3778 + $0x38] sm:$0xf]
        %v3794 = vld [vmem:[%s3778 + $0x3c] sm:$0xf]
        %v3811 = vunpack.c.l.b16 %v3779
        %v3812 = vunpack.c.l.b16 %v3780
        %v3813 = vunpack.c.l.b16 %v3781
        %v3814 = vunpack.c.l.b16 %v3782
        %v3815 = vunpack.c.l.b16 %v3783
        %v3816 = vunpack.c.l.b16 %v3784
        %v3817 = vunpack.c.l.b16 %v3785
        %v3818 = vunpack.c.l.b16 %v3786
        %v3819 = vunpack.c.l.b16 %v3787
        %v3820 = vunpack.c.l.b16 %v3788
        %v3821 = vunpack.c.l.b16 %v3789
        %v3822 = vunpack.c.l.b16 %v3790
        %v3823 = vunpack.c.l.b16 %v3791
        %v3824 = vunpack.c.l.b16 %v3792
        %v3825 = vunpack.c.l.b16 %v3793
        %v3826 = vunpack.c.l.b16 %v3794
        %v3827 = vpack.c.b16 %v3812, %v3811
        %v3828 = vpack.c.b16 %v3814, %v3813
        %v3829 = vpack.c.b16 %v3816, %v3815
        %v3830 = vpack.c.b16 %v3818, %v3817
        %v3831 = vpack.c.b16 %v3820, %v3819
        %v3832 = vpack.c.b16 %v3822, %v3821
        %v3833 = vpack.c.b16 %v3824, %v3823
        %v3834 = vpack.c.b16 %v3826, %v3825
        %3843 = vmatprep.subr.bf16.mxu0 0
        %3844 = vmatpush1.bf16.msra.mxu0 %v3827
        %3845 = vmatprep.subr.bf16.mxu0 0
        %3846 = vmatpush1.bf16.msra.mxu0 %v3828
        %3847 = vmatprep.subr.bf16.mxu0 0
        %3848 = vmatpush1.bf16.msra.mxu0 %v3829
        %3849 = vmatprep.subr.bf16.mxu0 0
        %3850 = vmatpush1.bf16.msra.mxu0 %v3830
        %3851 = vmatprep.subr.bf16.mxu0 0
        %3852 = vmatpush1.bf16.msra.mxu0 %v3831
        %3853 = vmatprep.subr.bf16.mxu0 0
        %3854 = vmatpush1.bf16.msra.mxu0 %v3832
        %3855 = vmatprep.subr.bf16.mxu0 0
        %3856 = vmatpush1.bf16.msra.mxu0 %v3833
        %3857 = vmatprep.subr.bf16.mxu0 0
        %3858 = vmatpush1.bf16.msra.mxu0 %v3834
        %3859 = vmatprep.subr.bf16.mxu0 0
        %3860 = vmatpush1.bf16.msra.mxu0 0
        %3861 = vmatprep.subr.bf16.mxu0 0
        %3862 = vmatpush1.bf16.msra.mxu0 0
        %3863 = vmatprep.subr.bf16.mxu0 0
        %3864 = vmatpush1.bf16.msra.mxu0 0
        %3865 = vmatprep.subr.bf16.mxu0 0
        %3866 = vmatpush1.bf16.msra.mxu0 0
        %3867 = vmatprep.subr.bf16.mxu0 0
        %3868 = vmatpush1.bf16.msra.mxu0 0
        %3869 = vmatprep.subr.bf16.mxu0 0
        %3870 = vmatpush1.bf16.msra.mxu0 0
        %3871 = vmatprep.subr.bf16.mxu0 0
        %3872 = vmatpush1.bf16.msra.mxu0 0
        %3873 = vmatprep.subr.bf16.mxu0 0
        %3874 = vmatpush1.bf16.msra.mxu0 0
        %3875 = vmatprep.mubr.bf16.mxu0 0
        %3876 = vmatmul.mubr.bf16.gmra.mrb[0].mxu0 %v3776
        %v3877 = vpop.f32.mrb[0].mxu0
        %v3878 = vadd.f32 0.0, %v3877
        %v3879 = vpop.f32.mrb[0].mxu0
        %v3880 = vpop.f32.mrb[0].mxu0
        %v3881 = vadd.f32 0.0, %v3880
        %v3882 = vpop.f32.mrb[0].mxu0
        %3883 = vmatprep.mubr.bf16.mxu0 0
        %3884 = vmatmul.mubr.bf16.gmra.mrb[0].mxu0 %v3777
        %v3885 = vpop.f32.mrb[0].mxu0
        %v3886 = vadd.f32 0.0, %v3885
        %v3887 = vpop.f32.mrb[0].mxu0
        %v3888 = vpop.f32.mrb[0].mxu0
        %v3889 = vadd.f32 0.0, %v3888
        %v3890 = vpop.f32.mrb[0].mxu0
        %3891 = vdwg.mxu0
        %v3892 = vadd.f32 %v3764, %v3878
        %v3893 = vadd.f32 %v3765, %v3881
        %v3894 = vadd.f32 %v3766, %v3886
        %v3895 = vadd.f32 %v3767, %v3889
        %s3896 = scalar_lea.vmem [#allocation2], 17
        %v3897 = vld [vmem:[%s3896] ss:$2 sm:$0xff]
        %s3898 = scalar_lea.vmem [#allocation2], 33
        %v3899 = vld [vmem:[%s3898] ss:$2 sm:$0xff]
        %s3900 = scalar_lea.vmem [#allocation2], 49
        %v3901 = vld [vmem:[%s3900] ss:$2 sm:$0xff]
        %s3902 = scalar_lea.vmem [#allocation2], 65
        %v3903 = vld [vmem:[%s3902] ss:$2 sm:$0x3]
        %v3904 = vpack.c.bf16 %v3899, %v3897
        %v3905 = vpack.c.bf16 %v3903, %v3901
        %s3906 = scalar_lea.vmem [#allocation4], 640
        %v3907 = vld [vmem:[%s3906] sm:$0xf]
        %v3908 = vld [vmem:[%s3906 + $0x4] sm:$0xf]
        %v3909 = vld [vmem:[%s3906 + $0x8] sm:$0xf]
        %v3910 = vld [vmem:[%s3906 + $0xc] sm:$0xf]
        %v3911 = vld [vmem:[%s3906 + $0x10] sm:$0xf]
        %v3912 = vld [vmem:[%s3906 + $0x14] sm:$0xf]
        %v3913 = vld [vmem:[%s3906 + $0x18] sm:$0xf]
        %v3914 = vld [vmem:[%s3906 + $0x1c] sm:$0xf]
        %v3915 = vld [vmem:[%s3906 + $0x20] sm:$0xf]
        %v3916 = vld [vmem:[%s3906 + $0x24] sm:$0xf]
        %v3917 = vld [vmem:[%s3906 + $0x28] sm:$0xf]
        %v3918 = vld [vmem:[%s3906 + $0x2c] sm:$0xf]
        %v3919 = vld [vmem:[%s3906 + $0x30] sm:$0xf]
        %v3920 = vld [vmem:[%s3906 + $0x34] sm:$0xf]
        %v3921 = vld [vmem:[%s3906 + $0x38] sm:$0xf]
        %v3922 = vld [vmem:[%s3906 + $0x3c] sm:$0xf]
        %v3939 = vunpack.c.l.b16 %v3907
        %v3940 = vunpack.c.l.b16 %v3908
        %v3941 = vunpack.c.l.b16 %v3909
        %v3942 = vunpack.c.l.b16 %v3910
        %v3943 = vunpack.c.l.b16 %v3911
        %v3944 = vunpack.c.l.b16 %v3912
        %v3945 = vunpack.c.l.b16 %v3913
        %v3946 = vunpack.c.l.b16 %v3914
        %v3947 = vunpack.c.l.b16 %v3915
        %v3948 = vunpack.c.l.b16 %v3916
        %v3949 = vunpack.c.l.b16 %v3917
        %v3950 = vunpack.c.l.b16 %v3918
        %v3951 = vunpack.c.l.b16 %v3919
        %v3952 = vunpack.c.l.b16 %v3920
        %v3953 = vunpack.c.l.b16 %v3921
        %v3954 = vunpack.c.l.b16 %v3922
        %v3955 = vpack.c.b16 %v3940, %v3939
        %v3956 = vpack.c.b16 %v3942, %v3941
        %v3957 = vpack.c.b16 %v3944, %v3943
        %v3958 = vpack.c.b16 %v3946, %v3945
        %v3959 = vpack.c.b16 %v3948, %v3947
        %v3960 = vpack.c.b16 %v3950, %v3949
        %v3961 = vpack.c.b16 %v3952, %v3951
        %v3962 = vpack.c.b16 %v3954, %v3953
        %3971 = vmatprep.subr.bf16.mxu0 0
        %3972 = vmatpush1.bf16.msra.mxu0 %v3955
        %3973 = vmatprep.subr.bf16.mxu0 0
        %3974 = vmatpush1.bf16.msra.mxu0 %v3956
        %3975 = vmatprep.subr.bf16.mxu0 0
        %3976 = vmatpush1.bf16.msra.mxu0 %v3957
        %3977 = vmatprep.subr.bf16.mxu0 0
        %3978 = vmatpush1.bf16.msra.mxu0 %v3958
        %3979 = vmatprep.subr.bf16.mxu0 0
        %3980 = vmatpush1.bf16.msra.mxu0 %v3959
        %3981 = vmatprep.subr.bf16.mxu0 0
        %3982 = vmatpush1.bf16.msra.mxu0 %v3960
        %3983 = vmatprep.subr.bf16.mxu0 0
        %3984 = vmatpush1.bf16.msra.mxu0 %v3961
        %3985 = vmatprep.subr.bf16.mxu0 0
        %3986 = vmatpush1.bf16.msra.mxu0 %v3962
        %3987 = vmatprep.subr.bf16.mxu0 0
        %3988 = vmatpush1.bf16.msra.mxu0 0
        %3989 = vmatprep.subr.bf16.mxu0 0
        %3990 = vmatpush1.bf16.msra.mxu0 0
        %3991 = vmatprep.subr.bf16.mxu0 0
        %3992 = vmatpush1.bf16.msra.mxu0 0
        %3993 = vmatprep.subr.bf16.mxu0 0
        %3994 = vmatpush1.bf16.msra.mxu0 0
        %3995 = vmatprep.subr.bf16.mxu0 0
        %3996 = vmatpush1.bf16.msra.mxu0 0
        %3997 = vmatprep.subr.bf16.mxu0 0
        %3998 = vmatpush1.bf16.msra.mxu0 0
        %3999 = vmatprep.subr.bf16.mxu0 0
        %4000 = vmatpush1.bf16.msra.mxu0 0
        %4001 = vmatprep.subr.bf16.mxu0 0
        %4002 = vmatpush1.bf16.msra.mxu0 0
        %4003 = vmatprep.mubr.bf16.mxu0 0
        %4004 = vmatmul.mubr.bf16.gmra.mrb[0].mxu0 %v3904
        %v4005 = vpop.f32.mrb[0].mxu0
        %v4006 = vadd.f32 0.0, %v4005
        %v4007 = vpop.f32.mrb[0].mxu0
        %v4008 = vpop.f32.mrb[0].mxu0
        %v4009 = vadd.f32 0.0, %v4008
        %v4010 = vpop.f32.mrb[0].mxu0
        %4011 = vmatprep.mubr.bf16.mxu0 0
        %4012 = vmatmul.mubr.bf16.gmra.mrb[0].mxu0 %v3905
        %v4013 = vpop.f32.mrb[0].mxu0
        %v4014 = vadd.f32 0.0, %v4013
        %v4015 = vpop.f32.mrb[0].mxu0
        %v4016 = vpop.f32.mrb[0].mxu0
        %v4017 = vadd.f32 0.0, %v4016
        %v4018 = vpop.f32.mrb[0].mxu0
        %4019 = vdwg.mxu0
        %v4020 = vadd.f32 %v3892, %v4006
        %v4021 = vadd.f32 %v3893, %v4009
        %v4022 = vadd.f32 %v3894, %v4014
        %v4023 = vadd.f32 %v3895, %v4017
        %v4024 = vlaneseq
        %v4025 = vshrl.u32 %v4024, 7
        %v4026 = vsub.s32 0, %v4025
        %v4027 = vrot.slane %v320, %v4026
        %v4028 = vadd.f32 %v4020, %v4027
        %v4029 = vadd.f32 %v4021, %v4027
        %v4030 = vadd.f32 %v4022, %v4027
        %v4031 = vadd.f32 %v4023, %v4027
        %v4032 = vmax.f32 %v4028, 0.0
        %v4033 = vmax.f32 %v4029, 0.0
        %v4034 = vmax.f32 %v4030, 0.0
        %v4035 = vmax.f32 %v4031, 0.0
        %4036 = vst [vmem:[#allocation3 + $0x8] sm:$0xff] %v4032
        %4037 = vst [vmem:[#allocation3 + $0x10] sm:$0xff] %v4033
        %4038 = vst [vmem:[#allocation3 + $0x18] sm:$0xff] %v4034
        %4039 = vst [vmem:[#allocation3 + $0x20] sm:$0x3] %v4035
        %s4040 = scalar_lea.vmem [#allocation3], 7
        %v4041 = vld [vmem:[%s4040] ss:$2 sm:$0xff]
        %s4042 = scalar_lea.vmem [#allocation3], 23
        %v4043 = vld [vmem:[%s4042] ss:$2 sm:$0x1]
        %v4044 = vpack.c.bf16 %v4043, %v4041
        %v4045 = vld [vmem:[#allocation6] sm:$0xf]
        %v4046 = vld [vmem:[#allocation6 + $0x4] sm:$0xf]
        %v4047 = vld [vmem:[#allocation6 + $0x8] sm:$0xf]
        %v4048 = vld [vmem:[#allocation6 + $0xc] sm:$0xf]
        %v4049 = vld [vmem:[#allocation6 + $0x10] sm:$0xf]
        %v4050 = vld [vmem:[#allocation6 + $0x14] sm:$0xf]
        %v4051 = vld [vmem:[#allocation6 + $0x18] sm:$0xf]
        %v4052 = vld [vmem:[#allocation6 + $0x1c] sm:$0xf]
        %v4053 = vld [vmem:[#allocation6 + $0x20] sm:$0xf]
        %v4054 = vld [vmem:[#allocation6 + $0x24] sm:$0xf]
        %v4055 = vld [vmem:[#allocation6 + $0x28] sm:$0xf]
        %v4056 = vld [vmem:[#allocation6 + $0x2c] sm:$0xf]
        %v4057 = vld [vmem:[#allocation6 + $0x30] sm:$0xf]
        %v4058 = vld [vmem:[#allocation6 + $0x34] sm:$0xf]
        %v4059 = vld [vmem:[#allocation6 + $0x38] sm:$0xf]
        %v4060 = vld [vmem:[#allocation6 + $0x3c] sm:$0xf]
        %s4061 = scalar_lea.vmem [#allocation3], 8
        %v4062 = vld [vmem:[%s4061] ss:$2 sm:$0xff]
        %s4063 = scalar_lea.vmem [#allocation3], 24
        %v4064 = vld [vmem:[%s4063] ss:$2 sm:$0x1]
        %v4065 = vpack.c.bf16 %v4064, %v4062
        %s4066 = scalar_lea.vmem [#allocation6], 64
        %v4067 = vld [vmem:[%s4066] sm:$0xf]
        %v4068 = vld [vmem:[%s4066 + $0x4] sm:$0xf]
        %v4069 = vld [vmem:[%s4066 + $0x8] sm:$0xf]
        %v4070 = vld [vmem:[%s4066 + $0xc] sm:$0xf]
        %v4071 = vld [vmem:[%s4066 + $0x10] sm:$0xf]
        %v4072 = vld [vmem:[%s4066 + $0x14] sm:$0xf]
        %v4073 = vld [vmem:[%s4066 + $0x18] sm:$0xf]
        %v4074 = vld [vmem:[%s4066 + $0x1c] sm:$0xf]
        %v4075 = vld [vmem:[%s4066 + $0x20] sm:$0xf]
        %v4076 = vld [vmem:[%s4066 + $0x24] sm:$0xf]
        %v4077 = vld [vmem:[%s4066 + $0x28] sm:$0xf]
        %v4078 = vld [vmem:[%s4066 + $0x2c] sm:$0xf]
        %v4079 = vld [vmem:[%s4066 + $0x30] sm:$0xf]
        %v4080 = vld [vmem:[%s4066 + $0x34] sm:$0xf]
        %v4081 = vld [vmem:[%s4066 + $0x38] sm:$0xf]
        %v4082 = vld [vmem:[%s4066 + $0x3c] sm:$0xf]
        %v4099 = vunpack.c.l.b16 %v4067
        %v4100 = vunpack.c.l.b16 %v4068
        %v4101 = vunpack.c.l.b16 %v4069
        %v4102 = vunpack.c.l.b16 %v4070
        %v4103 = vunpack.c.l.b16 %v4071
        %v4104 = vunpack.c.l.b16 %v4072
        %v4105 = vunpack.c.l.b16 %v4073
        %v4106 = vunpack.c.l.b16 %v4074
        %v4107 = vunpack.c.l.b16 %v4075
        %v4108 = vunpack.c.l.b16 %v4076
        %v4109 = vunpack.c.l.b16 %v4077
        %v4110 = vunpack.c.l.b16 %v4078
        %v4111 = vunpack.c.l.b16 %v4079
        %v4112 = vunpack.c.l.b16 %v4080
        %v4113 = vunpack.c.l.b16 %v4081
        %v4114 = vunpack.c.l.b16 %v4082
        %v4115 = vpack.c.b16 %v4100, %v4099
        %v4116 = vpack.c.b16 %v4102, %v4101
        %v4117 = vpack.c.b16 %v4104, %v4103
        %v4118 = vpack.c.b16 %v4106, %v4105
        %v4119 = vpack.c.b16 %v4108, %v4107
        %v4120 = vpack.c.b16 %v4110, %v4109
        %v4121 = vpack.c.b16 %v4112, %v4111
        %v4122 = vpack.c.b16 %v4114, %v4113
        %4131 = vmatprep.subr.bf16.mxu0 0
        %4132 = vmatpush1.bf16.msra.mxu0 %v4115
        %4133 = vmatprep.subr.bf16.mxu0 0
        %4134 = vmatpush1.bf16.msra.mxu0 %v4116
        %4135 = vmatprep.subr.bf16.mxu0 0
        %4136 = vmatpush1.bf16.msra.mxu0 %v4117
        %4137 = vmatprep.subr.bf16.mxu0 0
        %4138 = vmatpush1.bf16.msra.mxu0 %v4118
        %4139 = vmatprep.subr.bf16.mxu0 0
        %4140 = vmatpush1.bf16.msra.mxu0 %v4119
        %4141 = vmatprep.subr.bf16.mxu0 0
        %4142 = vmatpush1.bf16.msra.mxu0 %v4120
        %4143 = vmatprep.subr.bf16.mxu0 0
        %4144 = vmatpush1.bf16.msra.mxu0 %v4121
        %4145 = vmatprep.subr.bf16.mxu0 0
        %4146 = vmatpush1.bf16.msra.mxu0 %v4122
        %4147 = vmatprep.subr.bf16.mxu0 0
        %4148 = vmatpush1.bf16.msra.mxu0 0
        %4149 = vmatprep.subr.bf16.mxu0 0
        %4150 = vmatpush1.bf16.msra.mxu0 0
        %4151 = vmatprep.subr.bf16.mxu0 0
        %4152 = vmatpush1.bf16.msra.mxu0 0
        %4153 = vmatprep.subr.bf16.mxu0 0
        %4154 = vmatpush1.bf16.msra.mxu0 0
        %4155 = vmatprep.subr.bf16.mxu0 0
        %4156 = vmatpush1.bf16.msra.mxu0 0
        %4157 = vmatprep.subr.bf16.mxu0 0
        %4158 = vmatpush1.bf16.msra.mxu0 0
        %4159 = vmatprep.subr.bf16.mxu0 0
        %4160 = vmatpush1.bf16.msra.mxu0 0
        %4161 = vmatprep.subr.bf16.mxu0 0
        %4162 = vmatpush1.bf16.msra.mxu0 0
        %4163 = vmatprep.mubr.bf16.mxu0 0
        %4164 = vmatmul.mubr.bf16.gmra.mrb[0].mxu0 %v4065
        %v4165 = vpop.f32.mrb[0].mxu0
        %v4166 = vadd.f32 0.0, %v4165
        %v4167 = vpop.f32.mrb[0].mxu0
        %v4168 = vpop.f32.mrb[0].mxu0
        %v4169 = vadd.f32 0.0, %v4168
        %v4170 = vpop.f32.mrb[0].mxu0
        %4171 = vdwg.mxu0
        %v4188 = vunpack.c.l.b16 %v4045
        %v4189 = vunpack.c.l.b16 %v4046
        %v4190 = vunpack.c.l.b16 %v4047
        %v4191 = vunpack.c.l.b16 %v4048
        %v4192 = vunpack.c.l.b16 %v4049
        %v4193 = vunpack.c.l.b16 %v4050
        %v4194 = vunpack.c.l.b16 %v4051
        %v4195 = vunpack.c.l.b16 %v4052
        %v4196 = vunpack.c.l.b16 %v4053
        %v4197 = vunpack.c.l.b16 %v4054
        %v4198 = vunpack.c.l.b16 %v4055
        %v4199 = vunpack.c.l.b16 %v4056
        %v4200 = vunpack.c.l.b16 %v4057
        %v4201 = vunpack.c.l.b16 %v4058
        %v4202 = vunpack.c.l.b16 %v4059
        %v4203 = vunpack.c.l.b16 %v4060
        %v4204 = vpack.c.b16 %v4189, %v4188
        %v4205 = vpack.c.b16 %v4191, %v4190
        %v4206 = vpack.c.b16 %v4193, %v4192
        %v4207 = vpack.c.b16 %v4195, %v4194
        %v4208 = vpack.c.b16 %v4197, %v4196
        %v4209 = vpack.c.b16 %v4199, %v4198
        %v4210 = vpack.c.b16 %v4201, %v4200
        %v4211 = vpack.c.b16 %v4203, %v4202
        %4220 = vmatprep.subr.bf16.mxu0 0
        %4221 = vmatpush1.bf16.msra.mxu0 %v4204
        %4222 = vmatprep.subr.bf16.mxu0 0
        %4223 = vmatpush1.bf16.msra.mxu0 %v4205
        %4224 = vmatprep.subr.bf16.mxu0 0
        %4225 = vmatpush1.bf16.msra.mxu0 %v4206
        %4226 = vmatprep.subr.bf16.mxu0 0
        %4227 = vmatpush1.bf16.msra.mxu0 %v4207
        %4228 = vmatprep.subr.bf16.mxu0 0
        %4229 = vmatpush1.bf16.msra.mxu0 %v4208
        %4230 = vmatprep.subr.bf16.mxu0 0
        %4231 = vmatpush1.bf16.msra.mxu0 %v4209
        %4232 = vmatprep.subr.bf16.mxu0 0
        %4233 = vmatpush1.bf16.msra.mxu0 %v4210
        %4234 = vmatprep.subr.bf16.mxu0 0
        %4235 = vmatpush1.bf16.msra.mxu0 %v4211
        %4236 = vmatprep.subr.bf16.mxu0 0
        %4237 = vmatpush1.bf16.msra.mxu0 0
        %4238 = vmatprep.subr.bf16.mxu0 0
        %4239 = vmatpush1.bf16.msra.mxu0 0
        %4240 = vmatprep.subr.bf16.mxu0 0
        %4241 = vmatpush1.bf16.msra.mxu0 0
        %4242 = vmatprep.subr.bf16.mxu0 0
        %4243 = vmatpush1.bf16.msra.mxu0 0
        %4244 = vmatprep.subr.bf16.mxu0 0
        %4245 = vmatpush1.bf16.msra.mxu0 0
        %4246 = vmatprep.subr.bf16.mxu0 0
        %4247 = vmatpush1.bf16.msra.mxu0 0
        %4248 = vmatprep.subr.bf16.mxu0 0
        %4249 = vmatpush1.bf16.msra.mxu0 0
        %4250 = vmatprep.subr.bf16.mxu0 0
        %4251 = vmatpush1.bf16.msra.mxu0 0
        %4252 = vmatprep.mubr.bf16.mxu0 0
        %4253 = vmatmul.mubr.bf16.gmra.mrb[0].mxu0 %v4044
        %v4254 = vpop.f32.mrb[0].mxu0
        %v4255 = vadd.f32 %v4166, %v4254
        %v4256 = vpop.f32.mrb[0].mxu0
        %v4257 = vpop.f32.mrb[0].mxu0
        %v4258 = vadd.f32 %v4169, %v4257
        %v4259 = vpop.f32.mrb[0].mxu0
        %4260 = vdwg.mxu0
        %s4261 = scalar_lea.vmem [#allocation3], 9
        %v4262 = vld [vmem:[%s4261] ss:$2 sm:$0xff]
        %s4263 = scalar_lea.vmem [#allocation3], 25
        %v4264 = vld [vmem:[%s4263] ss:$2 sm:$0x1]
        %v4265 = vpack.c.bf16 %v4264, %v4262
        %s4266 = scalar_lea.vmem [#allocation6], 128
        %v4267 = vld [vmem:[%s4266] sm:$0xf]
        %v4268 = vld [vmem:[%s4266 + $0x4] sm:$0xf]
        %v4269 = vld [vmem:[%s4266 + $0x8] sm:$0xf]
        %v4270 = vld [vmem:[%s4266 + $0xc] sm:$0xf]
        %v4271 = vld [vmem:[%s4266 + $0x10] sm:$0xf]
        %v4272 = vld [vmem:[%s4266 + $0x14] sm:$0xf]
        %v4273 = vld [vmem:[%s4266 + $0x18] sm:$0xf]
        %v4274 = vld [vmem:[%s4266 + $0x1c] sm:$0xf]
        %v4275 = vld [vmem:[%s4266 + $0x20] sm:$0xf]
        %v4276 = vld [vmem:[%s4266 + $0x24] sm:$0xf]
        %v4277 = vld [vmem:[%s4266 + $0x28] sm:$0xf]
        %v4278 = vld [vmem:[%s4266 + $0x2c] sm:$0xf]
        %v4279 = vld [vmem:[%s4266 + $0x30] sm:$0xf]
        %v4280 = vld [vmem:[%s4266 + $0x34] sm:$0xf]
        %v4281 = vld [vmem:[%s4266 + $0x38] sm:$0xf]
        %v4282 = vld [vmem:[%s4266 + $0x3c] sm:$0xf]
        %v4299 = vunpack.c.l.b16 %v4267
        %v4300 = vunpack.c.l.b16 %v4268
        %v4301 = vunpack.c.l.b16 %v4269
        %v4302 = vunpack.c.l.b16 %v4270
        %v4303 = vunpack.c.l.b16 %v4271
        %v4304 = vunpack.c.l.b16 %v4272
        %v4305 = vunpack.c.l.b16 %v4273
        %v4306 = vunpack.c.l.b16 %v4274
        %v4307 = vunpack.c.l.b16 %v4275
        %v4308 = vunpack.c.l.b16 %v4276
        %v4309 = vunpack.c.l.b16 %v4277
        %v4310 = vunpack.c.l.b16 %v4278
        %v4311 = vunpack.c.l.b16 %v4279
        %v4312 = vunpack.c.l.b16 %v4280
        %v4313 = vunpack.c.l.b16 %v4281
        %v4314 = vunpack.c.l.b16 %v4282
        %v4315 = vpack.c.b16 %v4300, %v4299
        %v4316 = vpack.c.b16 %v4302, %v4301
        %v4317 = vpack.c.b16 %v4304, %v4303
        %v4318 = vpack.c.b16 %v4306, %v4305
        %v4319 = vpack.c.b16 %v4308, %v4307
        %v4320 = vpack.c.b16 %v4310, %v4309
        %v4321 = vpack.c.b16 %v4312, %v4311
        %v4322 = vpack.c.b16 %v4314, %v4313
        %4331 = vmatprep.subr.bf16.mxu0 0
        %4332 = vmatpush1.bf16.msra.mxu0 %v4315
        %4333 = vmatprep.subr.bf16.mxu0 0
        %4334 = vmatpush1.bf16.msra.mxu0 %v4316
        %4335 = vmatprep.subr.bf16.mxu0 0
        %4336 = vmatpush1.bf16.msra.mxu0 %v4317
        %4337 = vmatprep.subr.bf16.mxu0 0
        %4338 = vmatpush1.bf16.msra.mxu0 %v4318
        %4339 = vmatprep.subr.bf16.mxu0 0
        %4340 = vmatpush1.bf16.msra.mxu0 %v4319
        %4341 = vmatprep.subr.bf16.mxu0 0
        %4342 = vmatpush1.bf16.msra.mxu0 %v4320
        %4343 = vmatprep.subr.bf16.mxu0 0
        %4344 = vmatpush1.bf16.msra.mxu0 %v4321
        %4345 = vmatprep.subr.bf16.mxu0 0
        %4346 = vmatpush1.bf16.msra.mxu0 %v4322
        %4347 = vmatprep.subr.bf16.mxu0 0
        %4348 = vmatpush1.bf16.msra.mxu0 0
        %4349 = vmatprep.subr.bf16.mxu0 0
        %4350 = vmatpush1.bf16.msra.mxu0 0
        %4351 = vmatprep.subr.bf16.mxu0 0
        %4352 = vmatpush1.bf16.msra.mxu0 0
        %4353 = vmatprep.subr.bf16.mxu0 0
        %4354 = vmatpush1.bf16.msra.mxu0 0
        %4355 = vmatprep.subr.bf16.mxu0 0
        %4356 = vmatpush1.bf16.msra.mxu0 0
        %4357 = vmatprep.subr.bf16.mxu0 0
        %4358 = vmatpush1.bf16.msra.mxu0 0
        %4359 = vmatprep.subr.bf16.mxu0 0
        %4360 = vmatpush1.bf16.msra.mxu0 0
        %4361 = vmatprep.subr.bf16.mxu0 0
        %4362 = vmatpush1.bf16.msra.mxu0 0
        %4363 = vmatprep.mubr.bf16.mxu0 0
        %4364 = vmatmul.mubr.bf16.gmra.mrb[0].mxu0 %v4265
        %v4365 = vpop.f32.mrb[0].mxu0
        %v4366 = vadd.f32 0.0, %v4365
        %v4367 = vpop.f32.mrb[0].mxu0
        %v4368 = vpop.f32.mrb[0].mxu0
        %v4369 = vadd.f32 0.0, %v4368
        %v4370 = vpop.f32.mrb[0].mxu0
        %4371 = vdwg.mxu0
        %v4372 = vadd.f32 %v4255, %v4366
        %v4373 = vadd.f32 %v4258, %v4369
        %s4374 = scalar_lea.vmem [#allocation3], 10
        %v4375 = vld [vmem:[%s4374] ss:$2 sm:$0xff]
        %s4376 = scalar_lea.vmem [#allocation3], 26
        %v4377 = vld [vmem:[%s4376] ss:$2 sm:$0x1]
        %v4378 = vpack.c.bf16 %v4377, %v4375
        %s4379 = scalar_lea.vmem [#allocation6], 192
        %v4380 = vld [vmem:[%s4379] sm:$0xf]
        %v4381 = vld [vmem:[%s4379 + $0x4] sm:$0xf]
        %v4382 = vld [vmem:[%s4379 + $0x8] sm:$0xf]
        %v4383 = vld [vmem:[%s4379 + $0xc] sm:$0xf]
        %v4384 = vld [vmem:[%s4379 + $0x10] sm:$0xf]
        %v4385 = vld [vmem:[%s4379 + $0x14] sm:$0xf]
        %v4386 = vld [vmem:[%s4379 + $0x18] sm:$0xf]
        %v4387 = vld [vmem:[%s4379 + $0x1c] sm:$0xf]
        %v4388 = vld [vmem:[%s4379 + $0x20] sm:$0xf]
        %v4389 = vld [vmem:[%s4379 + $0x24] sm:$0xf]
        %v4390 = vld [vmem:[%s4379 + $0x28] sm:$0xf]
        %v4391 = vld [vmem:[%s4379 + $0x2c] sm:$0xf]
        %v4392 = vld [vmem:[%s4379 + $0x30] sm:$0xf]
        %v4393 = vld [vmem:[%s4379 + $0x34] sm:$0xf]
        %v4394 = vld [vmem:[%s4379 + $0x38] sm:$0xf]
        %v4395 = vld [vmem:[%s4379 + $0x3c] sm:$0xf]
        %v4412 = vunpack.c.l.b16 %v4380
        %v4413 = vunpack.c.l.b16 %v4381
        %v4414 = vunpack.c.l.b16 %v4382
        %v4415 = vunpack.c.l.b16 %v4383
        %v4416 = vunpack.c.l.b16 %v4384
        %v4417 = vunpack.c.l.b16 %v4385
        %v4418 = vunpack.c.l.b16 %v4386
        %v4419 = vunpack.c.l.b16 %v4387
        %v4420 = vunpack.c.l.b16 %v4388
        %v4421 = vunpack.c.l.b16 %v4389
        %v4422 = vunpack.c.l.b16 %v4390
        %v4423 = vunpack.c.l.b16 %v4391
        %v4424 = vunpack.c.l.b16 %v4392
        %v4425 = vunpack.c.l.b16 %v4393
        %v4426 = vunpack.c.l.b16 %v4394
        %v4427 = vunpack.c.l.b16 %v4395
        %v4428 = vpack.c.b16 %v4413, %v4412
        %v4429 = vpack.c.b16 %v4415, %v4414
        %v4430 = vpack.c.b16 %v4417, %v4416
        %v4431 = vpack.c.b16 %v4419, %v4418
        %v4432 = vpack.c.b16 %v4421, %v4420
        %v4433 = vpack.c.b16 %v4423, %v4422
        %v4434 = vpack.c.b16 %v4425, %v4424
        %v4435 = vpack.c.b16 %v4427, %v4426
        %4444 = vmatprep.subr.bf16.mxu0 0
        %4445 = vmatpush1.bf16.msra.mxu0 %v4428
        %4446 = vmatprep.subr.bf16.mxu0 0
        %4447 = vmatpush1.bf16.msra.mxu0 %v4429
        %4448 = vmatprep.subr.bf16.mxu0 0
        %4449 = vmatpush1.bf16.msra.mxu0 %v4430
        %4450 = vmatprep.subr.bf16.mxu0 0
        %4451 = vmatpush1.bf16.msra.mxu0 %v4431
        %4452 = vmatprep.subr.bf16.mxu0 0
        %4453 = vmatpush1.bf16.msra.mxu0 %v4432
        %4454 = vmatprep.subr.bf16.mxu0 0
        %4455 = vmatpush1.bf16.msra.mxu0 %v4433
        %4456 = vmatprep.subr.bf16.mxu0 0
        %4457 = vmatpush1.bf16.msra.mxu0 %v4434
        %4458 = vmatprep.subr.bf16.mxu0 0
        %4459 = vmatpush1.bf16.msra.mxu0 %v4435
        %4460 = vmatprep.subr.bf16.mxu0 0
        %4461 = vmatpush1.bf16.msra.mxu0 0
        %4462 = vmatprep.subr.bf16.mxu0 0
        %4463 = vmatpush1.bf16.msra.mxu0 0
        %4464 = vmatprep.subr.bf16.mxu0 0
        %4465 = vmatpush1.bf16.msra.mxu0 0
        %4466 = vmatprep.subr.bf16.mxu0 0
        %4467 = vmatpush1.bf16.msra.mxu0 0
        %4468 = vmatprep.subr.bf16.mxu0 0
        %4469 = vmatpush1.bf16.msra.mxu0 0
        %4470 = vmatprep.subr.bf16.mxu0 0
        %4471 = vmatpush1.bf16.msra.mxu0 0
        %4472 = vmatprep.subr.bf16.mxu0 0
        %4473 = vmatpush1.bf16.msra.mxu0 0
        %4474 = vmatprep.subr.bf16.mxu0 0
        %4475 = vmatpush1.bf16.msra.mxu0 0
        %4476 = vmatprep.mubr.bf16.mxu0 0
        %4477 = vmatmul.mubr.bf16.gmra.mrb[0].mxu0 %v4378
        %v4478 = vpop.f32.mrb[0].mxu0
        %v4479 = vadd.f32 0.0, %v4478
        %v4480 = vpop.f32.mrb[0].mxu0
        %v4481 = vpop.f32.mrb[0].mxu0
        %v4482 = vadd.f32 0.0, %v4481
        %v4483 = vpop.f32.mrb[0].mxu0
        %4484 = vdwg.mxu0
        %v4485 = vadd.f32 %v4372, %v4479
        %v4486 = vadd.f32 %v4373, %v4482
        %s4487 = scalar_lea.vmem [#allocation3], 11
        %v4488 = vld [vmem:[%s4487] ss:$2 sm:$0xff]
        %s4489 = scalar_lea.vmem [#allocation3], 27
        %v4490 = vld [vmem:[%s4489] ss:$2 sm:$0x1]
        %v4491 = vpack.c.bf16 %v4490, %v4488
        %s4492 = scalar_lea.vmem [#allocation6], 256
        %v4493 = vld [vmem:[%s4492] sm:$0xf]
        %v4494 = vld [vmem:[%s4492 + $0x4] sm:$0xf]
        %v4495 = vld [vmem:[%s4492 + $0x8] sm:$0xf]
        %v4496 = vld [vmem:[%s4492 + $0xc] sm:$0xf]
        %v4497 = vld [vmem:[%s4492 + $0x10] sm:$0xf]
        %v4498 = vld [vmem:[%s4492 + $0x14] sm:$0xf]
        %v4499 = vld [vmem:[%s4492 + $0x18] sm:$0xf]
        %v4500 = vld [vmem:[%s4492 + $0x1c] sm:$0xf]
        %v4501 = vld [vmem:[%s4492 + $0x20] sm:$0xf]
        %v4502 = vld [vmem:[%s4492 + $0x24] sm:$0xf]
        %v4503 = vld [vmem:[%s4492 + $0x28] sm:$0xf]
        %v4504 = vld [vmem:[%s4492 + $0x2c] sm:$0xf]
        %v4505 = vld [vmem:[%s4492 + $0x30] sm:$0xf]
        %v4506 = vld [vmem:[%s4492 + $0x34] sm:$0xf]
        %v4507 = vld [vmem:[%s4492 + $0x38] sm:$0xf]
        %v4508 = vld [vmem:[%s4492 + $0x3c] sm:$0xf]
        %v4525 = vunpack.c.l.b16 %v4493
        %v4526 = vunpack.c.l.b16 %v4494
        %v4527 = vunpack.c.l.b16 %v4495
        %v4528 = vunpack.c.l.b16 %v4496
        %v4529 = vunpack.c.l.b16 %v4497
        %v4530 = vunpack.c.l.b16 %v4498
        %v4531 = vunpack.c.l.b16 %v4499
        %v4532 = vunpack.c.l.b16 %v4500
        %v4533 = vunpack.c.l.b16 %v4501
        %v4534 = vunpack.c.l.b16 %v4502
        %v4535 = vunpack.c.l.b16 %v4503
        %v4536 = vunpack.c.l.b16 %v4504
        %v4537 = vunpack.c.l.b16 %v4505
        %v4538 = vunpack.c.l.b16 %v4506
        %v4539 = vunpack.c.l.b16 %v4507
        %v4540 = vunpack.c.l.b16 %v4508
        %v4541 = vpack.c.b16 %v4526, %v4525
        %v4542 = vpack.c.b16 %v4528, %v4527
        %v4543 = vpack.c.b16 %v4530, %v4529
        %v4544 = vpack.c.b16 %v4532, %v4531
        %v4545 = vpack.c.b16 %v4534, %v4533
        %v4546 = vpack.c.b16 %v4536, %v4535
        %v4547 = vpack.c.b16 %v4538, %v4537
        %v4548 = vpack.c.b16 %v4540, %v4539
        %4557 = vmatprep.subr.bf16.mxu0 0
        %4558 = vmatpush1.bf16.msra.mxu0 %v4541
        %4559 = vmatprep.subr.bf16.mxu0 0
        %4560 = vmatpush1.bf16.msra.mxu0 %v4542
        %4561 = vmatprep.subr.bf16.mxu0 0
        %4562 = vmatpush1.bf16.msra.mxu0 %v4543
        %4563 = vmatprep.subr.bf16.mxu0 0
        %4564 = vmatpush1.bf16.msra.mxu0 %v4544
        %4565 = vmatprep.subr.bf16.mxu0 0
        %4566 = vmatpush1.bf16.msra.mxu0 %v4545
        %4567 = vmatprep.subr.bf16.mxu0 0
        %4568 = vmatpush1.bf16.msra.mxu0 %v4546
        %4569 = vmatprep.subr.bf16.mxu0 0
        %4570 = vmatpush1.bf16.msra.mxu0 %v4547
        %4571 = vmatprep.subr.bf16.mxu0 0
        %4572 = vmatpush1.bf16.msra.mxu0 %v4548
        %4573 = vmatprep.subr.bf16.mxu0 0
        %4574 = vmatpush1.bf16.msra.mxu0 0
        %4575 = vmatprep.subr.bf16.mxu0 0
        %4576 = vmatpush1.bf16.msra.mxu0 0
        %4577 = vmatprep.subr.bf16.mxu0 0
        %4578 = vmatpush1.bf16.msra.mxu0 0
        %4579 = vmatprep.subr.bf16.mxu0 0
        %4580 = vmatpush1.bf16.msra.mxu0 0
        %4581 = vmatprep.subr.bf16.mxu0 0
        %4582 = vmatpush1.bf16.msra.mxu0 0
        %4583 = vmatprep.subr.bf16.mxu0 0
        %4584 = vmatpush1.bf16.msra.mxu0 0
        %4585 = vmatprep.subr.bf16.mxu0 0
        %4586 = vmatpush1.bf16.msra.mxu0 0
        %4587 = vmatprep.subr.bf16.mxu0 0
        %4588 = vmatpush1.bf16.msra.mxu0 0
        %4589 = vmatprep.mubr.bf16.mxu0 0
        %4590 = vmatmul.mubr.bf16.gmra.mrb[0].mxu0 %v4491
        %v4591 = vpop.f32.mrb[0].mxu0
        %v4592 = vadd.f32 0.0, %v4591
        %v4593 = vpop.f32.mrb[0].mxu0
        %v4594 = vpop.f32.mrb[0].mxu0
        %v4595 = vadd.f32 0.0, %v4594
        %v4596 = vpop.f32.mrb[0].mxu0
        %4597 = vdwg.mxu0
        %v4598 = vadd.f32 %v4485, %v4592
        %v4599 = vadd.f32 %v4486, %v4595
        %s4600 = scalar_lea.vmem [#allocation3], 12
        %v4601 = vld [vmem:[%s4600] ss:$2 sm:$0xff]
        %s4602 = scalar_lea.vmem [#allocation3], 28
        %v4603 = vld [vmem:[%s4602] ss:$2 sm:$0x1]
        %v4604 = vpack.c.bf16 %v4603, %v4601
        %s4605 = scalar_lea.vmem [#allocation6], 320
        %v4606 = vld [vmem:[%s4605] sm:$0xf]
        %v4607 = vld [vmem:[%s4605 + $0x4] sm:$0xf]
        %v4608 = vld [vmem:[%s4605 + $0x8] sm:$0xf]
        %v4609 = vld [vmem:[%s4605 + $0xc] sm:$0xf]
        %v4610 = vld [vmem:[%s4605 + $0x10] sm:$0xf]
        %v4611 = vld [vmem:[%s4605 + $0x14] sm:$0xf]
        %v4612 = vld [vmem:[%s4605 + $0x18] sm:$0xf]
        %v4613 = vld [vmem:[%s4605 + $0x1c] sm:$0xf]
        %v4614 = vld [vmem:[%s4605 + $0x20] sm:$0xf]
        %v4615 = vld [vmem:[%s4605 + $0x24] sm:$0xf]
        %v4616 = vld [vmem:[%s4605 + $0x28] sm:$0xf]
        %v4617 = vld [vmem:[%s4605 + $0x2c] sm:$0xf]
        %v4618 = vld [vmem:[%s4605 + $0x30] sm:$0xf]
        %v4619 = vld [vmem:[%s4605 + $0x34] sm:$0xf]
        %v4620 = vld [vmem:[%s4605 + $0x38] sm:$0xf]
        %v4621 = vld [vmem:[%s4605 + $0x3c] sm:$0xf]
        %v4638 = vunpack.c.l.b16 %v4606
        %v4639 = vunpack.c.l.b16 %v4607
        %v4640 = vunpack.c.l.b16 %v4608
        %v4641 = vunpack.c.l.b16 %v4609
        %v4642 = vunpack.c.l.b16 %v4610
        %v4643 = vunpack.c.l.b16 %v4611
        %v4644 = vunpack.c.l.b16 %v4612
        %v4645 = vunpack.c.l.b16 %v4613
        %v4646 = vunpack.c.l.b16 %v4614
        %v4647 = vunpack.c.l.b16 %v4615
        %v4648 = vunpack.c.l.b16 %v4616
        %v4649 = vunpack.c.l.b16 %v4617
        %v4650 = vunpack.c.l.b16 %v4618
        %v4651 = vunpack.c.l.b16 %v4619
        %v4652 = vunpack.c.l.b16 %v4620
        %v4653 = vunpack.c.l.b16 %v4621
        %v4654 = vpack.c.b16 %v4639, %v4638
        %v4655 = vpack.c.b16 %v4641, %v4640
        %v4656 = vpack.c.b16 %v4643, %v4642
        %v4657 = vpack.c.b16 %v4645, %v4644
        %v4658 = vpack.c.b16 %v4647, %v4646
        %v4659 = vpack.c.b16 %v4649, %v4648
        %v4660 = vpack.c.b16 %v4651, %v4650
        %v4661 = vpack.c.b16 %v4653, %v4652
        %4670 = vmatprep.subr.bf16.mxu0 0
        %4671 = vmatpush1.bf16.msra.mxu0 %v4654
        %4672 = vmatprep.subr.bf16.mxu0 0
        %4673 = vmatpush1.bf16.msra.mxu0 %v4655
        %4674 = vmatprep.subr.bf16.mxu0 0
        %4675 = vmatpush1.bf16.msra.mxu0 %v4656
        %4676 = vmatprep.subr.bf16.mxu0 0
        %4677 = vmatpush1.bf16.msra.mxu0 %v4657
        %4678 = vmatprep.subr.bf16.mxu0 0
        %4679 = vmatpush1.bf16.msra.mxu0 %v4658
        %4680 = vmatprep.subr.bf16.mxu0 0
        %4681 = vmatpush1.bf16.msra.mxu0 %v4659
        %4682 = vmatprep.subr.bf16.mxu0 0
        %4683 = vmatpush1.bf16.msra.mxu0 %v4660
        %4684 = vmatprep.subr.bf16.mxu0 0
        %4685 = vmatpush1.bf16.msra.mxu0 %v4661
        %4686 = vmatprep.subr.bf16.mxu0 0
        %4687 = vmatpush1.bf16.msra.mxu0 0
        %4688 = vmatprep.subr.bf16.mxu0 0
        %4689 = vmatpush1.bf16.msra.mxu0 0
        %4690 = vmatprep.subr.bf16.mxu0 0
        %4691 = vmatpush1.bf16.msra.mxu0 0
        %4692 = vmatprep.subr.bf16.mxu0 0
        %4693 = vmatpush1.bf16.msra.mxu0 0
        %4694 = vmatprep.subr.bf16.mxu0 0
        %4695 = vmatpush1.bf16.msra.mxu0 0
        %4696 = vmatprep.subr.bf16.mxu0 0
        %4697 = vmatpush1.bf16.msra.mxu0 0
        %4698 = vmatprep.subr.bf16.mxu0 0
        %4699 = vmatpush1.bf16.msra.mxu0 0
        %4700 = vmatprep.subr.bf16.mxu0 0
        %4701 = vmatpush1.bf16.msra.mxu0 0
        %4702 = vmatprep.mubr.bf16.mxu0 0
        %4703 = vmatmul.mubr.bf16.gmra.mrb[0].mxu0 %v4604
        %v4704 = vpop.f32.mrb[0].mxu0
        %v4705 = vadd.f32 0.0, %v4704
        %v4706 = vpop.f32.mrb[0].mxu0
        %v4707 = vpop.f32.mrb[0].mxu0
        %v4708 = vadd.f32 0.0, %v4707
        %v4709 = vpop.f32.mrb[0].mxu0
        %4710 = vdwg.mxu0
        %v4711 = vadd.f32 %v4598, %v4705
        %v4712 = vadd.f32 %v4599, %v4708
        %s4713 = scalar_lea.vmem [#allocation3], 13
        %v4714 = vld [vmem:[%s4713] ss:$2 sm:$0xff]
        %s4715 = scalar_lea.vmem [#allocation3], 29
        %v4716 = vld [vmem:[%s4715] ss:$2 sm:$0x1]
        %v4717 = vpack.c.bf16 %v4716, %v4714
        %s4718 = scalar_lea.vmem [#allocation6], 384
        %v4719 = vld [vmem:[%s4718] sm:$0xf]
        %v4720 = vld [vmem:[%s4718 + $0x4] sm:$0xf]
        %v4721 = vld [vmem:[%s4718 + $0x8] sm:$0xf]
        %v4722 = vld [vmem:[%s4718 + $0xc] sm:$0xf]
        %v4723 = vld [vmem:[%s4718 + $0x10] sm:$0xf]
        %v4724 = vld [vmem:[%s4718 + $0x14] sm:$0xf]
        %v4725 = vld [vmem:[%s4718 + $0x18] sm:$0xf]
        %v4726 = vld [vmem:[%s4718 + $0x1c] sm:$0xf]
        %v4727 = vld [vmem:[%s4718 + $0x20] sm:$0xf]
        %v4728 = vld [vmem:[%s4718 + $0x24] sm:$0xf]
        %v4729 = vld [vmem:[%s4718 + $0x28] sm:$0xf]
        %v4730 = vld [vmem:[%s4718 + $0x2c] sm:$0xf]
        %v4731 = vld [vmem:[%s4718 + $0x30] sm:$0xf]
        %v4732 = vld [vmem:[%s4718 + $0x34] sm:$0xf]
        %v4733 = vld [vmem:[%s4718 + $0x38] sm:$0xf]
        %v4734 = vld [vmem:[%s4718 + $0x3c] sm:$0xf]
        %v4751 = vunpack.c.l.b16 %v4719
        %v4752 = vunpack.c.l.b16 %v4720
        %v4753 = vunpack.c.l.b16 %v4721
        %v4754 = vunpack.c.l.b16 %v4722
        %v4755 = vunpack.c.l.b16 %v4723
        %v4756 = vunpack.c.l.b16 %v4724
        %v4757 = vunpack.c.l.b16 %v4725
        %v4758 = vunpack.c.l.b16 %v4726
        %v4759 = vunpack.c.l.b16 %v4727
        %v4760 = vunpack.c.l.b16 %v4728
        %v4761 = vunpack.c.l.b16 %v4729
        %v4762 = vunpack.c.l.b16 %v4730
        %v4763 = vunpack.c.l.b16 %v4731
        %v4764 = vunpack.c.l.b16 %v4732
        %v4765 = vunpack.c.l.b16 %v4733
        %v4766 = vunpack.c.l.b16 %v4734
        %v4767 = vpack.c.b16 %v4752, %v4751
        %v4768 = vpack.c.b16 %v4754, %v4753
        %v4769 = vpack.c.b16 %v4756, %v4755
        %v4770 = vpack.c.b16 %v4758, %v4757
        %v4771 = vpack.c.b16 %v4760, %v4759
        %v4772 = vpack.c.b16 %v4762, %v4761
        %v4773 = vpack.c.b16 %v4764, %v4763
        %v4774 = vpack.c.b16 %v4766, %v4765
        %4783 = vmatprep.subr.bf16.mxu0 0
        %4784 = vmatpush1.bf16.msra.mxu0 %v4767
        %4785 = vmatprep.subr.bf16.mxu0 0
        %4786 = vmatpush1.bf16.msra.mxu0 %v4768
        %4787 = vmatprep.subr.bf16.mxu0 0
        %4788 = vmatpush1.bf16.msra.mxu0 %v4769
        %4789 = vmatprep.subr.bf16.mxu0 0
        %4790 = vmatpush1.bf16.msra.mxu0 %v4770
        %4791 = vmatprep.subr.bf16.mxu0 0
        %4792 = vmatpush1.bf16.msra.mxu0 %v4771
        %4793 = vmatprep.subr.bf16.mxu0 0
        %4794 = vmatpush1.bf16.msra.mxu0 %v4772
        %4795 = vmatprep.subr.bf16.mxu0 0
        %4796 = vmatpush1.bf16.msra.mxu0 %v4773
        %4797 = vmatprep.subr.bf16.mxu0 0
        %4798 = vmatpush1.bf16.msra.mxu0 %v4774
        %4799 = vmatprep.subr.bf16.mxu0 0
        %4800 = vmatpush1.bf16.msra.mxu0 0
        %4801 = vmatprep.subr.bf16.mxu0 0
        %4802 = vmatpush1.bf16.msra.mxu0 0
        %4803 = vmatprep.subr.bf16.mxu0 0
        %4804 = vmatpush1.bf16.msra.mxu0 0
        %4805 = vmatprep.subr.bf16.mxu0 0
        %4806 = vmatpush1.bf16.msra.mxu0 0
        %4807 = vmatprep.subr.bf16.mxu0 0
        %4808 = vmatpush1.bf16.msra.mxu0 0
        %4809 = vmatprep.subr.bf16.mxu0 0
        %4810 = vmatpush1.bf16.msra.mxu0 0
        %4811 = vmatprep.subr.bf16.mxu0 0
        %4812 = vmatpush1.bf16.msra.mxu0 0
        %4813 = vmatprep.subr.bf16.mxu0 0
        %4814 = vmatpush1.bf16.msra.mxu0 0
        %4815 = vmatprep.mubr.bf16.mxu0 0
        %4816 = vmatmul.mubr.bf16.gmra.mrb[0].mxu0 %v4717
        %v4817 = vpop.f32.mrb[0].mxu0
        %v4818 = vadd.f32 0.0, %v4817
        %v4819 = vpop.f32.mrb[0].mxu0
        %v4820 = vpop.f32.mrb[0].mxu0
        %v4821 = vadd.f32 0.0, %v4820
        %v4822 = vpop.f32.mrb[0].mxu0
        %4823 = vdwg.mxu0
        %v4824 = vadd.f32 %v4711, %v4818
        %v4825 = vadd.f32 %v4712, %v4821
        %s4826 = scalar_lea.vmem [#allocation3], 14
        %v4827 = vld [vmem:[%s4826] ss:$2 sm:$0xff]
        %s4828 = scalar_lea.vmem [#allocation3], 30
        %v4829 = vld [vmem:[%s4828] ss:$2 sm:$0x1]
        %v4830 = vpack.c.bf16 %v4829, %v4827
        %s4831 = scalar_lea.vmem [#allocation6], 448
        %v4832 = vld [vmem:[%s4831] sm:$0xf]
        %v4833 = vld [vmem:[%s4831 + $0x4] sm:$0xf]
        %v4834 = vld [vmem:[%s4831 + $0x8] sm:$0xf]
        %v4835 = vld [vmem:[%s4831 + $0xc] sm:$0xf]
        %v4836 = vld [vmem:[%s4831 + $0x10] sm:$0xf]
        %v4837 = vld [vmem:[%s4831 + $0x14] sm:$0xf]
        %v4838 = vld [vmem:[%s4831 + $0x18] sm:$0xf]
        %v4839 = vld [vmem:[%s4831 + $0x1c] sm:$0xf]
        %v4840 = vld [vmem:[%s4831 + $0x20] sm:$0xf]
        %v4841 = vld [vmem:[%s4831 + $0x24] sm:$0xf]
        %v4842 = vld [vmem:[%s4831 + $0x28] sm:$0xf]
        %v4843 = vld [vmem:[%s4831 + $0x2c] sm:$0xf]
        %v4844 = vld [vmem:[%s4831 + $0x30] sm:$0xf]
        %v4845 = vld [vmem:[%s4831 + $0x34] sm:$0xf]
        %v4846 = vld [vmem:[%s4831 + $0x38] sm:$0xf]
        %v4847 = vld [vmem:[%s4831 + $0x3c] sm:$0xf]
        %v4864 = vunpack.c.l.b16 %v4832
        %v4865 = vunpack.c.l.b16 %v4833
        %v4866 = vunpack.c.l.b16 %v4834
        %v4867 = vunpack.c.l.b16 %v4835
        %v4868 = vunpack.c.l.b16 %v4836
        %v4869 = vunpack.c.l.b16 %v4837
        %v4870 = vunpack.c.l.b16 %v4838
        %v4871 = vunpack.c.l.b16 %v4839
        %v4872 = vunpack.c.l.b16 %v4840
        %v4873 = vunpack.c.l.b16 %v4841
        %v4874 = vunpack.c.l.b16 %v4842
        %v4875 = vunpack.c.l.b16 %v4843
        %v4876 = vunpack.c.l.b16 %v4844
        %v4877 = vunpack.c.l.b16 %v4845
        %v4878 = vunpack.c.l.b16 %v4846
        %v4879 = vunpack.c.l.b16 %v4847
        %v4880 = vpack.c.b16 %v4865, %v4864
        %v4881 = vpack.c.b16 %v4867, %v4866
        %v4882 = vpack.c.b16 %v4869, %v4868
        %v4883 = vpack.c.b16 %v4871, %v4870
        %v4884 = vpack.c.b16 %v4873, %v4872
        %v4885 = vpack.c.b16 %v4875, %v4874
        %v4886 = vpack.c.b16 %v4877, %v4876
        %v4887 = vpack.c.b16 %v4879, %v4878
        %4896 = vmatprep.subr.bf16.mxu0 0
        %4897 = vmatpush1.bf16.msra.mxu0 %v4880
        %4898 = vmatprep.subr.bf16.mxu0 0
        %4899 = vmatpush1.bf16.msra.mxu0 %v4881
        %4900 = vmatprep.subr.bf16.mxu0 0
        %4901 = vmatpush1.bf16.msra.mxu0 %v4882
        %4902 = vmatprep.subr.bf16.mxu0 0
        %4903 = vmatpush1.bf16.msra.mxu0 %v4883
        %4904 = vmatprep.subr.bf16.mxu0 0
        %4905 = vmatpush1.bf16.msra.mxu0 %v4884
        %4906 = vmatprep.subr.bf16.mxu0 0
        %4907 = vmatpush1.bf16.msra.mxu0 %v4885
        %4908 = vmatprep.subr.bf16.mxu0 0
        %4909 = vmatpush1.bf16.msra.mxu0 %v4886
        %4910 = vmatprep.subr.bf16.mxu0 0
        %4911 = vmatpush1.bf16.msra.mxu0 %v4887
        %4912 = vmatprep.subr.bf16.mxu0 0
        %4913 = vmatpush1.bf16.msra.mxu0 0
        %4914 = vmatprep.subr.bf16.mxu0 0
        %4915 = vmatpush1.bf16.msra.mxu0 0
        %4916 = vmatprep.subr.bf16.mxu0 0
        %4917 = vmatpush1.bf16.msra.mxu0 0
        %4918 = vmatprep.subr.bf16.mxu0 0
        %4919 = vmatpush1.bf16.msra.mxu0 0
        %4920 = vmatprep.subr.bf16.mxu0 0
        %4921 = vmatpush1.bf16.msra.mxu0 0
        %4922 = vmatprep.subr.bf16.mxu0 0
        %4923 = vmatpush1.bf16.msra.mxu0 0
        %4924 = vmatprep.subr.bf16.mxu0 0
        %4925 = vmatpush1.bf16.msra.mxu0 0
        %4926 = vmatprep.subr.bf16.mxu0 0
        %4927 = vmatpush1.bf16.msra.mxu0 0
        %4928 = vmatprep.mubr.bf16.mxu0 0
        %4929 = vmatmul.mubr.bf16.gmra.mrb[0].mxu0 %v4830
        %v4930 = vpop.f32.mrb[0].mxu0
        %v4931 = vadd.f32 0.0, %v4930
        %v4932 = vpop.f32.mrb[0].mxu0
        %v4933 = vpop.f32.mrb[0].mxu0
        %v4934 = vadd.f32 0.0, %v4933
        %v4935 = vpop.f32.mrb[0].mxu0
        %4936 = vdwg.mxu0
        %v4937 = vadd.f32 %v4824, %v4931
        %v4938 = vadd.f32 %v4825, %v4934
        %s4939 = scalar_lea.vmem [#allocation3], 15
        %v4940 = vld [vmem:[%s4939] ss:$2 sm:$0xff]
        %s4941 = scalar_lea.vmem [#allocation3], 31
        %v4942 = vld [vmem:[%s4941] ss:$2 sm:$0x1]
        %v4943 = vpack.c.bf16 %v4942, %v4940
        %s4944 = scalar_lea.vmem [#allocation6], 512
        %v4945 = vld [vmem:[%s4944] sm:$0xf]
        %v4946 = vld [vmem:[%s4944 + $0x4] sm:$0xf]
        %v4947 = vld [vmem:[%s4944 + $0x8] sm:$0xf]
        %v4948 = vld [vmem:[%s4944 + $0xc] sm:$0xf]
        %v4949 = vld [vmem:[%s4944 + $0x10] sm:$0xf]
        %v4950 = vld [vmem:[%s4944 + $0x14] sm:$0xf]
        %v4951 = vld [vmem:[%s4944 + $0x18] sm:$0xf]
        %v4952 = vld [vmem:[%s4944 + $0x1c] sm:$0xf]
        %v4953 = vld [vmem:[%s4944 + $0x20] sm:$0xf]
        %v4954 = vld [vmem:[%s4944 + $0x24] sm:$0xf]
        %v4955 = vld [vmem:[%s4944 + $0x28] sm:$0xf]
        %v4956 = vld [vmem:[%s4944 + $0x2c] sm:$0xf]
        %v4957 = vld [vmem:[%s4944 + $0x30] sm:$0xf]
        %v4958 = vld [vmem:[%s4944 + $0x34] sm:$0xf]
        %v4959 = vld [vmem:[%s4944 + $0x38] sm:$0xf]
        %v4960 = vld [vmem:[%s4944 + $0x3c] sm:$0xf]
        %v4977 = vunpack.c.l.b16 %v4945
        %v4978 = vunpack.c.l.b16 %v4946
        %v4979 = vunpack.c.l.b16 %v4947
        %v4980 = vunpack.c.l.b16 %v4948
        %v4981 = vunpack.c.l.b16 %v4949
        %v4982 = vunpack.c.l.b16 %v4950
        %v4983 = vunpack.c.l.b16 %v4951
        %v4984 = vunpack.c.l.b16 %v4952
        %v4985 = vunpack.c.l.b16 %v4953
        %v4986 = vunpack.c.l.b16 %v4954
        %v4987 = vunpack.c.l.b16 %v4955
        %v4988 = vunpack.c.l.b16 %v4956
        %v4989 = vunpack.c.l.b16 %v4957
        %v4990 = vunpack.c.l.b16 %v4958
        %v4991 = vunpack.c.l.b16 %v4959
        %v4992 = vunpack.c.l.b16 %v4960
        %v4993 = vpack.c.b16 %v4978, %v4977
        %v4994 = vpack.c.b16 %v4980, %v4979
        %v4995 = vpack.c.b16 %v4982, %v4981
        %v4996 = vpack.c.b16 %v4984, %v4983
        %v4997 = vpack.c.b16 %v4986, %v4985
        %v4998 = vpack.c.b16 %v4988, %v4987
        %v4999 = vpack.c.b16 %v4990, %v4989
        %v5000 = vpack.c.b16 %v4992, %v4991
        %5009 = vmatprep.subr.bf16.mxu0 0
        %5010 = vmatpush1.bf16.msra.mxu0 %v4993
        %5011 = vmatprep.subr.bf16.mxu0 0
        %5012 = vmatpush1.bf16.msra.mxu0 %v4994
        %5013 = vmatprep.subr.bf16.mxu0 0
        %5014 = vmatpush1.bf16.msra.mxu0 %v4995
        %5015 = vmatprep.subr.bf16.mxu0 0
        %5016 = vmatpush1.bf16.msra.mxu0 %v4996
        %5017 = vmatprep.subr.bf16.mxu0 0
        %5018 = vmatpush1.bf16.msra.mxu0 %v4997
        %5019 = vmatprep.subr.bf16.mxu0 0
        %5020 = vmatpush1.bf16.msra.mxu0 %v4998
        %5021 = vmatprep.subr.bf16.mxu0 0
        %5022 = vmatpush1.bf16.msra.mxu0 %v4999
        %5023 = vmatprep.subr.bf16.mxu0 0
        %5024 = vmatpush1.bf16.msra.mxu0 %v5000
        %5025 = vmatprep.subr.bf16.mxu0 0
        %5026 = vmatpush1.bf16.msra.mxu0 0
        %5027 = vmatprep.subr.bf16.mxu0 0
        %5028 = vmatpush1.bf16.msra.mxu0 0
        %5029 = vmatprep.subr.bf16.mxu0 0
        %5030 = vmatpush1.bf16.msra.mxu0 0
        %5031 = vmatprep.subr.bf16.mxu0 0
        %5032 = vmatpush1.bf16.msra.mxu0 0
        %5033 = vmatprep.subr.bf16.mxu0 0
        %5034 = vmatpush1.bf16.msra.mxu0 0
        %5035 = vmatprep.subr.bf16.mxu0 0
        %5036 = vmatpush1.bf16.msra.mxu0 0
        %5037 = vmatprep.subr.bf16.mxu0 0
        %5038 = vmatpush1.bf16.msra.mxu0 0
        %5039 = vmatprep.subr.bf16.mxu0 0
        %5040 = vmatpush1.bf16.msra.mxu0 0
        %5041 = vmatprep.mubr.bf16.mxu0 0
        %5042 = vmatmul.mubr.bf16.gmra.mrb[0].mxu0 %v4943
        %v5043 = vpop.f32.mrb[0].mxu0
        %v5044 = vadd.f32 0.0, %v5043
        %v5045 = vpop.f32.mrb[0].mxu0
        %v5046 = vpop.f32.mrb[0].mxu0
        %v5047 = vadd.f32 0.0, %v5046
        %v5048 = vpop.f32.mrb[0].mxu0
        %5049 = vdwg.mxu0
        %v5050 = vadd.f32 %v4937, %v5044
        %v5051 = vadd.f32 %v4938, %v5047
        %s5052 = scalar_lea.vmem [#allocation3], 16
        %v5053 = vld [vmem:[%s5052] ss:$2 sm:$0xff]
        %s5054 = scalar_lea.vmem [#allocation3], 32
        %v5055 = vld [vmem:[%s5054] ss:$2 sm:$0x1]
        %v5056 = vpack.c.bf16 %v5055, %v5053
        %s5057 = scalar_lea.vmem [#allocation6], 576
        %v5058 = vld [vmem:[%s5057] sm:$0xf]
        %v5059 = vld [vmem:[%s5057 + $0x4] sm:$0xf]
        %v5060 = vld [vmem:[%s5057 + $0x8] sm:$0xf]
        %v5061 = vld [vmem:[%s5057 + $0xc] sm:$0xf]
        %v5062 = vld [vmem:[%s5057 + $0x10] sm:$0xf]
        %v5063 = vld [vmem:[%s5057 + $0x14] sm:$0xf]
        %v5064 = vld [vmem:[%s5057 + $0x18] sm:$0xf]
        %v5065 = vld [vmem:[%s5057 + $0x1c] sm:$0xf]
        %v5066 = vld [vmem:[%s5057 + $0x20] sm:$0xf]
        %v5067 = vld [vmem:[%s5057 + $0x24] sm:$0xf]
        %v5068 = vld [vmem:[%s5057 + $0x28] sm:$0xf]
        %v5069 = vld [vmem:[%s5057 + $0x2c] sm:$0xf]
        %v5070 = vld [vmem:[%s5057 + $0x30] sm:$0xf]
        %v5071 = vld [vmem:[%s5057 + $0x34] sm:$0xf]
        %v5072 = vld [vmem:[%s5057 + $0x38] sm:$0xf]
        %v5073 = vld [vmem:[%s5057 + $0x3c] sm:$0xf]
        %v5090 = vunpack.c.l.b16 %v5058
        %v5091 = vunpack.c.l.b16 %v5059
        %v5092 = vunpack.c.l.b16 %v5060
        %v5093 = vunpack.c.l.b16 %v5061
        %v5094 = vunpack.c.l.b16 %v5062
        %v5095 = vunpack.c.l.b16 %v5063
        %v5096 = vunpack.c.l.b16 %v5064
        %v5097 = vunpack.c.l.b16 %v5065
        %v5098 = vunpack.c.l.b16 %v5066
        %v5099 = vunpack.c.l.b16 %v5067
        %v5100 = vunpack.c.l.b16 %v5068
        %v5101 = vunpack.c.l.b16 %v5069
        %v5102 = vunpack.c.l.b16 %v5070
        %v5103 = vunpack.c.l.b16 %v5071
        %v5104 = vunpack.c.l.b16 %v5072
        %v5105 = vunpack.c.l.b16 %v5073
        %v5106 = vpack.c.b16 %v5091, %v5090
        %v5107 = vpack.c.b16 %v5093, %v5092
        %v5108 = vpack.c.b16 %v5095, %v5094
        %v5109 = vpack.c.b16 %v5097, %v5096
        %v5110 = vpack.c.b16 %v5099, %v5098
        %v5111 = vpack.c.b16 %v5101, %v5100
        %v5112 = vpack.c.b16 %v5103, %v5102
        %v5113 = vpack.c.b16 %v5105, %v5104
        %5122 = vmatprep.subr.bf16.mxu0 0
        %5123 = vmatpush1.bf16.msra.mxu0 %v5106
        %5124 = vmatprep.subr.bf16.mxu0 0
        %5125 = vmatpush1.bf16.msra.mxu0 %v5107
        %5126 = vmatprep.subr.bf16.mxu0 0
        %5127 = vmatpush1.bf16.msra.mxu0 %v5108
        %5128 = vmatprep.subr.bf16.mxu0 0
        %5129 = vmatpush1.bf16.msra.mxu0 %v5109
        %5130 = vmatprep.subr.bf16.mxu0 0
        %5131 = vmatpush1.bf16.msra.mxu0 %v5110
        %5132 = vmatprep.subr.bf16.mxu0 0
        %5133 = vmatpush1.bf16.msra.mxu0 %v5111
        %5134 = vmatprep.subr.bf16.mxu0 0
        %5135 = vmatpush1.bf16.msra.mxu0 %v5112
        %5136 = vmatprep.subr.bf16.mxu0 0
        %5137 = vmatpush1.bf16.msra.mxu0 %v5113
        %5138 = vmatprep.subr.bf16.mxu0 0
        %5139 = vmatpush1.bf16.msra.mxu0 0
        %5140 = vmatprep.subr.bf16.mxu0 0
        %5141 = vmatpush1.bf16.msra.mxu0 0
        %5142 = vmatprep.subr.bf16.mxu0 0
        %5143 = vmatpush1.bf16.msra.mxu0 0
        %5144 = vmatprep.subr.bf16.mxu0 0
        %5145 = vmatpush1.bf16.msra.mxu0 0
        %5146 = vmatprep.subr.bf16.mxu0 0
        %5147 = vmatpush1.bf16.msra.mxu0 0
        %5148 = vmatprep.subr.bf16.mxu0 0
        %5149 = vmatpush1.bf16.msra.mxu0 0
        %5150 = vmatprep.subr.bf16.mxu0 0
        %5151 = vmatpush1.bf16.msra.mxu0 0
        %5152 = vmatprep.subr.bf16.mxu0 0
        %5153 = vmatpush1.bf16.msra.mxu0 0
        %5154 = vmatprep.mubr.bf16.mxu0 0
        %5155 = vmatmul.mubr.bf16.gmra.mrb[0].mxu0 %v5056
        %v5156 = vpop.f32.mrb[0].mxu0
        %v5157 = vadd.f32 0.0, %v5156
        %v5158 = vpop.f32.mrb[0].mxu0
        %v5159 = vpop.f32.mrb[0].mxu0
        %v5160 = vadd.f32 0.0, %v5159
        %v5161 = vpop.f32.mrb[0].mxu0
        %5162 = vdwg.mxu0
        %v5163 = vadd.f32 %v5050, %v5157
        %v5164 = vadd.f32 %v5051, %v5160
        %s5165 = scalar_lea.vmem [#allocation3], 17
        %v5166 = vld [vmem:[%s5165] ss:$2 sm:$0xff]
        %s5167 = scalar_lea.vmem [#allocation3], 33
        %v5168 = vld [vmem:[%s5167] ss:$2 sm:$0x1]
        %v5169 = vpack.c.bf16 %v5168, %v5166
        %s5170 = scalar_lea.vmem [#allocation6], 640
        %v5171 = vld [vmem:[%s5170] sm:$0xf]
        %v5172 = vld [vmem:[%s5170 + $0x4] sm:$0xf]
        %v5173 = vld [vmem:[%s5170 + $0x8] sm:$0xf]
        %v5174 = vld [vmem:[%s5170 + $0xc] sm:$0xf]
        %v5175 = vld [vmem:[%s5170 + $0x10] sm:$0xf]
        %v5176 = vld [vmem:[%s5170 + $0x14] sm:$0xf]
        %v5177 = vld [vmem:[%s5170 + $0x18] sm:$0xf]
        %v5178 = vld [vmem:[%s5170 + $0x1c] sm:$0xf]
        %v5179 = vld [vmem:[%s5170 + $0x20] sm:$0xf]
        %v5180 = vld [vmem:[%s5170 + $0x24] sm:$0xf]
        %v5181 = vld [vmem:[%s5170 + $0x28] sm:$0xf]
        %v5182 = vld [vmem:[%s5170 + $0x2c] sm:$0xf]
        %v5183 = vld [vmem:[%s5170 + $0x30] sm:$0xf]
        %v5184 = vld [vmem:[%s5170 + $0x34] sm:$0xf]
        %v5185 = vld [vmem:[%s5170 + $0x38] sm:$0xf]
        %v5186 = vld [vmem:[%s5170 + $0x3c] sm:$0xf]
        %v5203 = vunpack.c.l.b16 %v5171
        %v5204 = vunpack.c.l.b16 %v5172
        %v5205 = vunpack.c.l.b16 %v5173
        %v5206 = vunpack.c.l.b16 %v5174
        %v5207 = vunpack.c.l.b16 %v5175
        %v5208 = vunpack.c.l.b16 %v5176
        %v5209 = vunpack.c.l.b16 %v5177
        %v5210 = vunpack.c.l.b16 %v5178
        %v5211 = vunpack.c.l.b16 %v5179
        %v5212 = vunpack.c.l.b16 %v5180
        %v5213 = vunpack.c.l.b16 %v5181
        %v5214 = vunpack.c.l.b16 %v5182
        %v5215 = vunpack.c.l.b16 %v5183
        %v5216 = vunpack.c.l.b16 %v5184
        %v5217 = vunpack.c.l.b16 %v5185
        %v5218 = vunpack.c.l.b16 %v5186
        %v5219 = vpack.c.b16 %v5204, %v5203
        %v5220 = vpack.c.b16 %v5206, %v5205
        %v5221 = vpack.c.b16 %v5208, %v5207
        %v5222 = vpack.c.b16 %v5210, %v5209
        %v5223 = vpack.c.b16 %v5212, %v5211
        %v5224 = vpack.c.b16 %v5214, %v5213
        %v5225 = vpack.c.b16 %v5216, %v5215
        %v5226 = vpack.c.b16 %v5218, %v5217
        %5235 = vmatprep.subr.bf16.mxu0 0
        %5236 = vmatpush1.bf16.msra.mxu0 %v5219
        %5237 = vmatprep.subr.bf16.mxu0 0
        %5238 = vmatpush1.bf16.msra.mxu0 %v5220
        %5239 = vmatprep.subr.bf16.mxu0 0
        %5240 = vmatpush1.bf16.msra.mxu0 %v5221
        %5241 = vmatprep.subr.bf16.mxu0 0
        %5242 = vmatpush1.bf16.msra.mxu0 %v5222
        %5243 = vmatprep.subr.bf16.mxu0 0
        %5244 = vmatpush1.bf16.msra.mxu0 %v5223
        %5245 = vmatprep.subr.bf16.mxu0 0
        %5246 = vmatpush1.bf16.msra.mxu0 %v5224
        %5247 = vmatprep.subr.bf16.mxu0 0
        %5248 = vmatpush1.bf16.msra.mxu0 %v5225
        %5249 = vmatprep.subr.bf16.mxu0 0
        %5250 = vmatpush1.bf16.msra.mxu0 %v5226
        %5251 = vmatprep.subr.bf16.mxu0 0
        %5252 = vmatpush1.bf16.msra.mxu0 0
        %5253 = vmatprep.subr.bf16.mxu0 0
        %5254 = vmatpush1.bf16.msra.mxu0 0
        %5255 = vmatprep.subr.bf16.mxu0 0
        %5256 = vmatpush1.bf16.msra.mxu0 0
        %5257 = vmatprep.subr.bf16.mxu0 0
        %5258 = vmatpush1.bf16.msra.mxu0 0
        %5259 = vmatprep.subr.bf16.mxu0 0
        %5260 = vmatpush1.bf16.msra.mxu0 0
        %5261 = vmatprep.subr.bf16.mxu0 0
        %5262 = vmatpush1.bf16.msra.mxu0 0
        %5263 = vmatprep.subr.bf16.mxu0 0
        %5264 = vmatpush1.bf16.msra.mxu0 0
        %5265 = vmatprep.subr.bf16.mxu0 0
        %5266 = vmatpush1.bf16.msra.mxu0 0
        %5267 = vmatprep.mubr.bf16.mxu0 0
        %5268 = vmatmul.mubr.bf16.gmra.mrb[0].mxu0 %v5169
        %v5269 = vpop.f32.mrb[0].mxu0
        %v5270 = vadd.f32 0.0, %v5269
        %v5271 = vpop.f32.mrb[0].mxu0
        %v5272 = vpop.f32.mrb[0].mxu0
        %v5273 = vadd.f32 0.0, %v5272
        %v5274 = vpop.f32.mrb[0].mxu0
        %5275 = vdwg.mxu0
        %v5276 = vadd.f32 %v5163, %v5270
        %v5277 = vadd.f32 %v5164, %v5273
        %v5278 = vlaneseq
        %v5279 = vshrl.u32 %v5278, 7
        %v5280 = vsub.s32 0, %v5279
        %v5281 = vrot.slane %v321, %v5280
        %v5282 = vadd.f32 %v5276, %v5281
        %v5283 = vadd.f32 %v5277, %v5281
        %v5284 = vmax.f32 %v5282, 0.0
        %v5285 = vmax.f32 %v5283, 0.0
        %5286 = vst [vmem:[%s301] sm:$0xff] %v5284
        %5287 = vst [vmem:[%s301 + $0x8] sm:$0x1] %v5285
        %p5288 = scmp.lt.s32.totalorder %s19, 1
        %s5289 = scalar_select %p5288, %s19, 1
        %s5290 = smul.addr %s5289, 2
        %s5291 = smul.addr %s5290, 8
        %s5292 = scalar_lea.vmem %s6, %s5291
        // Predicated region
        $region53: #{tpu_custom_call.1} parent=43 // pred_check
          %p5293 = pneg %p173
        $region54: #{tpu_custom_call.1} parent=43 // pred_check_branch
          %5295 = sbr.rel (%p5293) target = $region56
        $region55: #{tpu_custom_call.1} parent=43 // pred_region
          _
        $region56: #{tpu_custom_call.1} parent=43 // pred_fallthru
          _
      $region44: #{tpu_custom_call.1} parent=5 // pred_fallthru
        _
      %p5296 = scmp.le.s32.totalorder 2, %s14
      // Predicated region
      $region57: #{tpu_custom_call.1} parent=5 // pred_check
        %p5297 = pneg %p5296
      $region58: #{tpu_custom_call.1} parent=5 // pred_check_branch
        %5299 = sbr.rel (%p5297) target = $region60
      $region59: #{tpu_custom_call.1} parent=5 // pred_region
        %s5300 = ssub.s32 %s14, 2
        // Predicated region
        $region61: #{tpu_custom_call.1} parent=59 // pred_check
          %p5301 = pneg %p179
        $region62: #{tpu_custom_call.1} parent=59 // pred_check_branch
          %5303 = sbr.rel (%p5301) target = $region64
        $region63: #{tpu_custom_call.1} parent=59 // pred_region
          %p5304 = scmp.lt.s32.totalorder %s20, 1
          %s5305 = scalar_select %p5304, %s20, 1
          %s5306 = smul.addr %s5305, 2
          %s5307 = smul.addr %s5306, 8
          %s5308 = scalar_lea.vmem %s6, %s5307
        $region64: #{tpu_custom_call.1} parent=59 // pred_fallthru
          _
      $region60: #{tpu_custom_call.1} parent=5 // pred_fallthru
        _
    $region6: #{tpu_custom_call.1} parent=1 // loop_footer
      %s18 = sadd.s32 1, %s14
    $region7: #{tpu_custom_call.1} parent=1 // loop_footer_branch
      %13 = sbr.rel target = $region3
    $region8: #{tpu_custom_call.1} parent=1 // loop_exit
      _
    %5309 = vsyncpa [#allocation5], 1
    %s5310 = scalar_lea.sflag [#allocation5], 1
    %5311 = vsyncpa %s5310, 1
    %5312 = vsyncpa [#allocation7], 1

</llo_original>
